<compile_context>
chip_gen: v7x
topology: tpu7x:2x2x1
jax: 0.10.0
libtpu: 0.0.40
codegen_flags: <defaults>
</compile_context>

<pallas_src>
import functools

import jax
import jax.numpy as jnp
from jax.experimental import pallas as pl
from jax.experimental.pallas import tpu as pltpu
import numpy as np

FC_LANES = 128  # lane-dense width for the (hidden -> 1) head; column 0 holds the real output


def _round_up(x, m):
    return ((x + m - 1) // m) * m


def gru_decoder_kernel(x_ref, wih3_ref, b3_ref, whh3_ref, bhn_ref, wfc_ref, bfc_ref,
                       out_ref, h_ref, *, chunk, hp, seq_len):
    """One (batch-tile, time-chunk) grid step.

    x_ref:    (B_TILE, CHUNK, I)   batch_first input slice, streamed per chunk
    wih3_ref: (I, 3*Hp)            [W_ir | W_iz | W_in]   (gate blocks padded to Hp lanes)
    b3_ref:   (1, 3*Hp)            [b_ir+b_hr | b_iz+b_hz | b_in]
    whh3_ref: (Hp, 3*Hp)           [W_hr | W_hz | W_hn]
    bhn_ref:  (1, Hp)              b_hn (kept separate: r * (W_hn h + b_hn))
    wfc_ref:  (Hp, FC_LANES)       fc weight in column 0
    bfc_ref:  (1, FC_LANES)        fc bias in column 0
    out_ref:  (B_TILE, FC_LANES)   fc(h_T), written on the last time chunk
    h_ref:    (B_TILE, Hp)         persistent hidden-state scratch
    """
    c = pl.program_id(1)
    nc = pl.num_programs(1)

    @pl.when(c == 0)
    def _init():
        h_ref[...] = jnp.zeros_like(h_ref)

    bt, ck, isz = x_ref.shape

    # Hoisted input projection: one bulk MXU matmul per chunk, off the per-step h chain.
    x2d = x_ref[...].reshape(bt * ck, isz)
    gi = (jnp.dot(x2d, wih3_ref[...], preferred_element_type=jnp.float32)
          + b3_ref[...]).reshape(bt, ck, 3 * hp)

    h = h_ref[...]
    whh3 = whh3_ref[...]
    bhn = bhn_ref[...]
    base_t = c * chunk
    needs_mask = (seq_len % chunk) != 0   # static: only guard when T was padded up

    # Unrolled recurrence: one fused (B_TILE, Hp) @ (Hp, 3*Hp) matmul per timestep;
    # gates carved out with static lane slices at multiples of 128.
    for tt in range(chunk):
        gi_t = gi[:, tt, :]                                                  # (B_TILE, 3*Hp)
        gh = jnp.dot(h, whh3, preferred_element_type=jnp.float32)            # (B_TILE, 3*Hp)
        r = jax.nn.sigmoid(gi_t[:, :hp] + gh[:, :hp])
        z = jax.nn.sigmoid(gi_t[:, hp:2 * hp] + gh[:, hp:2 * hp])
        n = jnp.tanh(gi_t[:, 2 * hp:] + r * (gh[:, 2 * hp:] + bhn))
        h_new = (1.0 - z) * n + z * h
        if needs_mask:
            h = jnp.where(base_t + tt < seq_len, h_new, h)
        else:
            h = h_new

    h_ref[...] = h

    @pl.when(c == nc - 1)
    def _finalize():
        out_ref[...] = (jnp.dot(h, wfc_ref[...], preferred_element_type=jnp.float32)
                        + bfc_ref[...])


def pack_params(params, hp):
    """Pack (r,z,n)-stacked GRU params into lane-dense, gate-fused, padded operands."""
    w_ih, w_hh, b_ih, b_hh, w_fc, b_fc = params
    I, H = w_ih.shape[1], w_ih.shape[2]

    def pad2(a, rows, cols):
        return jnp.pad(a, ((0, rows - a.shape[0]), (0, cols - a.shape[1])))

    wih3 = jnp.concatenate([pad2(w_ih[k], I, hp) for k in range(3)], axis=1)    # (I, 3*Hp)
    whh3 = jnp.concatenate([pad2(w_hh[k], hp, hp) for k in range(3)], axis=1)   # (Hp, 3*Hp)
    # Fold b_ir+b_hr and b_iz+b_hz; b_in folds into gi too. b_hn stays separate (r * (W_hn h + b_hn)).
    b3 = jnp.concatenate([pad2(b_ih[0] + b_hh[0], 1, hp),
                          pad2(b_ih[1] + b_hh[1], 1, hp),
                          pad2(b_ih[2], 1, hp)], axis=1)                        # (1, 3*Hp)
    bhn = pad2(b_hh[2], 1, hp)                                                  # (1, Hp)
    wfc = pad2(w_fc, hp, FC_LANES)                                              # (Hp, 128)
    bfc = pad2(b_fc, 1, FC_LANES)                                               # (1, 128)
    return wih3, whh3, b3, bhn, wfc, bfc


@functools.partial(jax.jit, static_argnames=("chunk", "b_tile"))
def gru_decoder_pallas(x, params, *, chunk=8, b_tile=8):
    """x: (B, T, I) float32, batch_first (PyTorch layout). Returns (B, 1) = fc(h_T)."""
    B, T, I = x.shape
    H = params[1].shape[2]
    hp = _round_up(H, 128)          # lane-dense hidden width (zero-padded; math unaffected)
    bp = _round_up(B, b_tile)       # sublane-dense batch
    tp = _round_up(T, chunk)        # time padded to whole chunks (masked in-kernel)

    wih3, whh3, b3, bhn, wfc, bfc = pack_params(params, hp)
    x_pad = jnp.pad(x.astype(jnp.float32), ((0, bp - B), (0, tp - T), (0, 0)))

    nb, nc = bp // b_tile, tp // chunk
    kernel = functools.partial(gru_decoder_kernel, chunk=chunk, hp=hp, seq_len=T)

    flops = (2 * bp * tp * I * 3 * hp          # input projection
             + 2 * bp * tp * hp * 3 * hp       # recurrent matmuls
             + 2 * bp * hp * FC_LANES)         # fc head
    bytes_accessed = 4 * (bp * tp * I + I * 3 * hp + hp * 3 * hp
                          + hp * FC_LANES + 4 * hp + FC_LANES + bp * FC_LANES)

    out_pad = pl.pallas_call(
        kernel,
        out_shape=jax.ShapeDtypeStruct((bp, FC_LANES), jnp.float32),
        grid_spec=pltpu.PrefetchScalarGridSpec(
            num_scalar_prefetch=0,
            grid=(nb, nc),   # batch tiles (parallel), time chunks (sequential carry, last axis)
            in_specs=[
                pl.BlockSpec((b_tile, chunk, I), lambda b, c: (b, c, 0)),   # x streamed per chunk
                pl.BlockSpec((I, 3 * hp),        lambda b, c: (0, 0)),      # resident weights
                pl.BlockSpec((1, 3 * hp),        lambda b, c: (0, 0)),
                pl.BlockSpec((hp, 3 * hp),       lambda b, c: (0, 0)),
                pl.BlockSpec((1, hp),            lambda b, c: (0, 0)),
                pl.BlockSpec((hp, FC_LANES),     lambda b, c: (0, 0)),
                pl.BlockSpec((1, FC_LANES),      lambda b, c: (0, 0)),
            ],
            out_specs=pl.BlockSpec((b_tile, FC_LANES), lambda b, c: (b, 0)),
            scratch_shapes=[pltpu.VMEM((b_tile, hp), jnp.float32)],          # persistent h
        ),
        compiler_params=pltpu.CompilerParams(
            dimension_semantics=("parallel", "arbitrary")),
        cost_estimate=pl.CostEstimate(
            flops=flops,
            transcendentals=3 * bp * tp * hp,
            bytes_accessed=bytes_accessed),
    )(x_pad, wih3, b3, whh3, bhn, wfc, bfc)

    return out_pad[:B, :1]


def gru_decoder_reference(x_btI, params):
    """Pure-JAX reference matching PyTorch nn.GRU + nn.Linear semantics."""
    w_ih, w_hh, b_ih, b_hh, w_fc, b_fc = params
    B, T, I = x_btI.shape
    H = w_hh.shape[2]
    h = jnp.zeros((B, H), jnp.float32)
    for t in range(T):
        x_t = x_btI[:, t, :]
        r = jax.nn.sigmoid(x_t @ w_ih[0] + b_ih[0] + h @ w_hh[0] + b_hh[0])
        z = jax.nn.sigmoid(x_t @ w_ih[1] + b_ih[1] + h @ w_hh[1] + b_hh[1])
        n = jnp.tanh(x_t @ w_ih[2] + b_ih[2] + r * (h @ w_hh[2] + b_hh[2]))
        h = (1.0 - z) * n + z * h
    return h @ w_fc + b_fc


def init_params(key, input_size, hidden_size):
    """Deterministic init mimicking PyTorch's uniform(-1/sqrt(H), 1/sqrt(H))."""
    bound = 1.0 / np.sqrt(hidden_size)
    ks = jax.random.split(key, 6)
    w_ih = jax.random.uniform(ks[0], (3, input_size, hidden_size),
                              jnp.float32, -bound, bound)
    w_hh = jax.random.uniform(ks[1], (3, hidden_size, hidden_size),
                              jnp.float32, -bound, bound)
    b_ih = jax.random.uniform(ks[2], (3, 1, hidden_size),
                              jnp.float32, -bound, bound)
    b_hh = jax.random.uniform(ks[3], (3, 1, hidden_size),
                              jnp.float32, -bound, bound)
    w_fc = jax.random.uniform(ks[4], (hidden_size, 1),
                              jnp.float32, -bound, bound)
    b_fc = jax.random.uniform(ks[5], (1, 1), jnp.float32, -bound, bound)
    return (w_ih, w_hh, b_ih, b_hh, w_fc, b_fc)


if __name__ == "__main__":
    B, T, I, H = 2, 8, 4, 32

    key = jax.random.PRNGKey(0)
    k_x, k_p = jax.random.split(key)
    x = jax.random.normal(k_x, (B, T, I), jnp.float32)
    params = init_params(k_p, I, H)

    out = jax.block_until_ready(gru_decoder_pallas(x, params))
    ref = jax.block_until_ready(gru_decoder_reference(x, params))

    assert out.shape == (B, 1)
    assert np.allclose(np.asarray(out), np.asarray(ref), atol=1e-5, rtol=1e-5)

    print("KERNEL_OK")
</pallas_src>

<mosaic_0001>
module attributes {stable_mosaic.version = 11 : i64} {
  func.func @gru_decoder_kernel(%arg0: i32, %arg1: i32, %arg2: memref<8x8x4xf32, #tpu.memory_space<vmem>>, %arg3: memref<4x384xf32, #tpu.memory_space<vmem>>, %arg4: memref<1x384xf32, #tpu.memory_space<vmem>>, %arg5: memref<128x384xf32, #tpu.memory_space<vmem>>, %arg6: memref<1x128xf32, #tpu.memory_space<vmem>>, %arg7: memref<128x128xf32, #tpu.memory_space<vmem>>, %arg8: memref<1x128xf32, #tpu.memory_space<vmem>>, %arg9: memref<8x128xf32, #tpu.memory_space<vmem>>, %arg10: memref<8x128xf32, #tpu.memory_space<vmem>>) attributes {dimension_semantics = [#tpu.dimension_semantics<parallel>, #tpu.dimension_semantics<arbitrary>], iteration_bounds = array<i64: 1, 1>, scalar_prefetch = 0 : i64, scratch_operands = 1 : i64, tpu.core_type = #tpu.core_type<tc>, window_params = [{transform_indices = @transform_0, window_bounds = array<i64: 8, 8, 4>}, {pipeline_mode = #tpu.pipeline_mode<synchronous>, transform_indices = @transform_1, window_bounds = array<i64: 4, 384>}, {pipeline_mode = #tpu.pipeline_mode<synchronous>, transform_indices = @transform_2, window_bounds = array<i64: 1, 384>}, {pipeline_mode = #tpu.pipeline_mode<synchronous>, transform_indices = @transform_3, window_bounds = array<i64: 128, 384>}, {pipeline_mode = #tpu.pipeline_mode<synchronous>, transform_indices = @transform_4, window_bounds = array<i64: 1, 128>}, {pipeline_mode = #tpu.pipeline_mode<synchronous>, transform_indices = @transform_5, window_bounds = array<i64: 128, 128>}, {pipeline_mode = #tpu.pipeline_mode<synchronous>, transform_indices = @transform_6, window_bounds = array<i64: 1, 128>}, {transform_indices = @transform_7, window_bounds = array<i64: 8, 128>}]} {
    %c0_i32 = arith.constant 0 : i32
    %0 = arith.cmpi eq, %arg1, %c0_i32 : i32
    %1 = arith.extui %0 : i1 to i32
    %c0_i32_0 = arith.constant 0 : i32
    %2 = arith.cmpi ne, %1, %c0_i32_0 : i32
    scf.if %2 {
      %cst_49 = arith.constant 0.000000e+00 : f32
      %266 = vector.broadcast %cst_49 : f32 to vector<8x128xf32>
      %c0_50 = arith.constant 0 : index
      %c0_51 = arith.constant 0 : index
      %267 = vector.load %arg10[%c0_50, %c0_51] : memref<8x128xf32, #tpu.memory_space<vmem>>, vector<8x128xf32>
      tpu.vector_store %arg10[%c0_50, %c0_51], %266 {strides = array<i32>} : memref<8x128xf32, #tpu.memory_space<vmem>>, vector<8x128xf32>,
    } else {
    }
    %c0 = arith.constant 0 : index
    %c0_1 = arith.constant 0 : index
    %c0_2 = arith.constant 0 : index
    %3 = vector.load %arg2[%c0, %c0_1, %c0_2] : memref<8x8x4xf32, #tpu.memory_space<vmem>>, vector<8x8x4xf32>
    %4 = vector.shape_cast %3 : vector<8x8x4xf32> to vector<64x4xf32>
    %c0_3 = arith.constant 0 : index
    %c0_4 = arith.constant 0 : index
    %5 = vector.load %arg3[%c0_3, %c0_4] : memref<4x384xf32, #tpu.memory_space<vmem>>, vector<4x384xf32>
    %cst = arith.constant dense<0.000000e+00> : vector<64x384xf32>
    %6 = tpu.matmul %4, %5, %cst {dimension_numbers = #tpu.dot_dimension_numbers<[1], [0], [0], [1], [0, 0, 1, 1], [], []>} : vector<64x4xf32>, vector<4x384xf32>, vector<64x384xf32> -> vector<64x384xf32>
    %c0_5 = arith.constant 0 : index
    %c0_6 = arith.constant 0 : index
    %7 = vector.load %arg4[%c0_5, %c0_6] : memref<1x384xf32, #tpu.memory_space<vmem>>, vector<1x384xf32>
    %8 = vector.broadcast %7 : vector<1x384xf32> to vector<64x384xf32>
    %9 = arith.addf %6, %8 : vector<64x384xf32>
    %10 = vector.shape_cast %9 : vector<64x384xf32> to vector<8x8x384xf32>
    %c0_7 = arith.constant 0 : index
    %c0_8 = arith.constant 0 : index
    %11 = vector.load %arg10[%c0_7, %c0_8] : memref<8x128xf32, #tpu.memory_space<vmem>>, vector<8x128xf32>
    %c0_9 = arith.constant 0 : index
    %c0_10 = arith.constant 0 : index
    %12 = vector.load %arg5[%c0_9, %c0_10] : memref<128x384xf32, #tpu.memory_space<vmem>>, vector<128x384xf32>
    %c0_11 = arith.constant 0 : index
    %c0_12 = arith.constant 0 : index
    %13 = vector.load %arg6[%c0_11, %c0_12] : memref<1x128xf32, #tpu.memory_space<vmem>>, vector<1x128xf32>
    %14 = vector.extract_strided_slice %10 {offsets = [0, 0, 0], sizes = [8, 1, 384], strides = [1, 1, 1]} : vector<8x8x384xf32> to vector<8x1x384xf32>
    %15 = vector.shape_cast %14 : vector<8x1x384xf32> to vector<8x384xf32>
    %cst_13 = arith.constant dense<0.000000e+00> : vector<8x384xf32>
    %16 = tpu.matmul %11, %12, %cst_13 {dimension_numbers = #tpu.dot_dimension_numbers<[1], [0], [0], [1], [0, 0, 1, 1], [], []>} : vector<8x128xf32>, vector<128x384xf32>, vector<8x384xf32> -> vector<8x384xf32>
    %17 = vector.extract_strided_slice %15 {offsets = [0, 0], sizes = [8, 128], strides = [1, 1]} : vector<8x384xf32> to vector<8x128xf32>
    %18 = vector.extract_strided_slice %16 {offsets = [0, 0], sizes = [8, 128], strides = [1, 1]} : vector<8x384xf32> to vector<8x128xf32>
    %19 = arith.addf %17, %18 : vector<8x128xf32>
    %20 = arith.negf %19 : vector<8x128xf32>
    %21 = math.exp %20 : vector<8x128xf32>
    %cst_14 = arith.constant 1.000000e+00 : f32
    %22 = vector.broadcast %cst_14 : f32 to vector<8x128xf32>
    %23 = arith.addf %22, %21 : vector<8x128xf32>
    %24 = arith.divf %22, %23 : vector<8x128xf32>
    %25 = vector.extract_strided_slice %15 {offsets = [0, 128], sizes = [8, 128], strides = [1, 1]} : vector<8x384xf32> to vector<8x128xf32>
    %26 = vector.extract_strided_slice %16 {offsets = [0, 128], sizes = [8, 128], strides = [1, 1]} : vector<8x384xf32> to vector<8x128xf32>
    %27 = arith.addf %25, %26 : vector<8x128xf32>
    %28 = arith.negf %27 : vector<8x128xf32>
    %29 = math.exp %28 : vector<8x128xf32>
    %cst_15 = arith.constant 1.000000e+00 : f32
    %30 = vector.broadcast %cst_15 : f32 to vector<8x128xf32>
    %31 = arith.addf %30, %29 : vector<8x128xf32>
    %32 = arith.divf %30, %31 : vector<8x128xf32>
    %33 = vector.extract_strided_slice %15 {offsets = [0, 256], sizes = [8, 128], strides = [1, 1]} : vector<8x384xf32> to vector<8x128xf32>
    %34 = vector.extract_strided_slice %16 {offsets = [0, 256], sizes = [8, 128], strides = [1, 1]} : vector<8x384xf32> to vector<8x128xf32>
    %35 = vector.broadcast %13 : vector<1x128xf32> to vector<8x128xf32>
    %36 = arith.addf %34, %35 : vector<8x128xf32>
    %37 = arith.mulf %24, %36 : vector<8x128xf32>
    %38 = arith.addf %33, %37 : vector<8x128xf32>
    %39 = math.tanh %38 : vector<8x128xf32>
    %cst_16 = arith.constant 1.000000e+00 : f32
    %40 = vector.broadcast %cst_16 : f32 to vector<8x128xf32>
    %41 = arith.subf %40, %32 : vector<8x128xf32>
    %42 = arith.mulf %41, %39 : vector<8x128xf32>
    %43 = arith.mulf %32, %11 : vector<8x128xf32>
    %44 = arith.addf %42, %43 : vector<8x128xf32>
    %45 = vector.extract_strided_slice %10 {offsets = [0, 1, 0], sizes = [8, 1, 384], strides = [1, 1, 1]} : vector<8x8x384xf32> to vector<8x1x384xf32>
    %46 = vector.shape_cast %45 : vector<8x1x384xf32> to vector<8x384xf32>
    %cst_17 = arith.constant dense<0.000000e+00> : vector<8x384xf32>
    %47 = tpu.matmul %44, %12, %cst_17 {dimension_numbers = #tpu.dot_dimension_numbers<[1], [0], [0], [1], [0, 0, 1, 1], [], []>} : vector<8x128xf32>, vector<128x384xf32>, vector<8x384xf32> -> vector<8x384xf32>
    %48 = vector.extract_strided_slice %46 {offsets = [0, 0], sizes = [8, 128], strides = [1, 1]} : vector<8x384xf32> to vector<8x128xf32>
    %49 = vector.extract_strided_slice %47 {offsets = [0, 0], sizes = [8, 128], strides = [1, 1]} : vector<8x384xf32> to vector<8x128xf32>
    %50 = arith.addf %48, %49 : vector<8x128xf32>
    %51 = arith.negf %50 : vector<8x128xf32>
    %52 = math.exp %51 : vector<8x128xf32>
    %cst_18 = arith.constant 1.000000e+00 : f32
    %53 = vector.broadcast %cst_18 : f32 to vector<8x128xf32>
    %54 = arith.addf %53, %52 : vector<8x128xf32>
    %55 = arith.divf %53, %54 : vector<8x128xf32>
    %56 = vector.extract_strided_slice %46 {offsets = [0, 128], sizes = [8, 128], strides = [1, 1]} : vector<8x384xf32> to vector<8x128xf32>
    %57 = vector.extract_strided_slice %47 {offsets = [0, 128], sizes = [8, 128], strides = [1, 1]} : vector<8x384xf32> to vector<8x128xf32>
    %58 = arith.addf %56, %57 : vector<8x128xf32>
    %59 = arith.negf %58 : vector<8x128xf32>
    %60 = math.exp %59 : vector<8x128xf32>
    %cst_19 = arith.constant 1.000000e+00 : f32
    %61 = vector.broadcast %cst_19 : f32 to vector<8x128xf32>
    %62 = arith.addf %61, %60 : vector<8x128xf32>
    %63 = arith.divf %61, %62 : vector<8x128xf32>
    %64 = vector.extract_strided_slice %46 {offsets = [0, 256], sizes = [8, 128], strides = [1, 1]} : vector<8x384xf32> to vector<8x128xf32>
    %65 = vector.extract_strided_slice %47 {offsets = [0, 256], sizes = [8, 128], strides = [1, 1]} : vector<8x384xf32> to vector<8x128xf32>
    %66 = vector.broadcast %13 : vector<1x128xf32> to vector<8x128xf32>
    %67 = arith.addf %65, %66 : vector<8x128xf32>
    %68 = arith.mulf %55, %67 : vector<8x128xf32>
    %69 = arith.addf %64, %68 : vector<8x128xf32>
    %70 = math.tanh %69 : vector<8x128xf32>
    %cst_20 = arith.constant 1.000000e+00 : f32
    %71 = vector.broadcast %cst_20 : f32 to vector<8x128xf32>
    %72 = arith.subf %71, %63 : vector<8x128xf32>
    %73 = arith.mulf %72, %70 : vector<8x128xf32>
    %74 = arith.mulf %63, %44 : vector<8x128xf32>
    %75 = arith.addf %73, %74 : vector<8x128xf32>
    %76 = vector.extract_strided_slice %10 {offsets = [0, 2, 0], sizes = [8, 1, 384], strides = [1, 1, 1]} : vector<8x8x384xf32> to vector<8x1x384xf32>
    %77 = vector.shape_cast %76 : vector<8x1x384xf32> to vector<8x384xf32>
    %cst_21 = arith.constant dense<0.000000e+00> : vector<8x384xf32>
    %78 = tpu.matmul %75, %12, %cst_21 {dimension_numbers = #tpu.dot_dimension_numbers<[1], [0], [0], [1], [0, 0, 1, 1], [], []>} : vector<8x128xf32>, vector<128x384xf32>, vector<8x384xf32> -> vector<8x384xf32>
    %79 = vector.extract_strided_slice %77 {offsets = [0, 0], sizes = [8, 128], strides = [1, 1]} : vector<8x384xf32> to vector<8x128xf32>
    %80 = vector.extract_strided_slice %78 {offsets = [0, 0], sizes = [8, 128], strides = [1, 1]} : vector<8x384xf32> to vector<8x128xf32>
    %81 = arith.addf %79, %80 : vector<8x128xf32>
    %82 = arith.negf %81 : vector<8x128xf32>
    %83 = math.exp %82 : vector<8x128xf32>
    %cst_22 = arith.constant 1.000000e+00 : f32
    %84 = vector.broadcast %cst_22 : f32 to vector<8x128xf32>
    %85 = arith.addf %84, %83 : vector<8x128xf32>
    %86 = arith.divf %84, %85 : vector<8x128xf32>
    %87 = vector.extract_strided_slice %77 {offsets = [0, 128], sizes = [8, 128], strides = [1, 1]} : vector<8x384xf32> to vector<8x128xf32>
    %88 = vector.extract_strided_slice %78 {offsets = [0, 128], sizes = [8, 128], strides = [1, 1]} : vector<8x384xf32> to vector<8x128xf32>
    %89 = arith.addf %87, %88 : vector<8x128xf32>
    %90 = arith.negf %89 : vector<8x128xf32>
    %91 = math.exp %90 : vector<8x128xf32>
    %cst_23 = arith.constant 1.000000e+00 : f32
    %92 = vector.broadcast %cst_23 : f32 to vector<8x128xf32>
    %93 = arith.addf %92, %91 : vector<8x128xf32>
    %94 = arith.divf %92, %93 : vector<8x128xf32>
    %95 = vector.extract_strided_slice %77 {offsets = [0, 256], sizes = [8, 128], strides = [1, 1]} : vector<8x384xf32> to vector<8x128xf32>
    %96 = vector.extract_strided_slice %78 {offsets = [0, 256], sizes = [8, 128], strides = [1, 1]} : vector<8x384xf32> to vector<8x128xf32>
    %97 = vector.broadcast %13 : vector<1x128xf32> to vector<8x128xf32>
    %98 = arith.addf %96, %97 : vector<8x128xf32>
    %99 = arith.mulf %86, %98 : vector<8x128xf32>
    %100 = arith.addf %95, %99 : vector<8x128xf32>
    %101 = math.tanh %100 : vector<8x128xf32>
    %cst_24 = arith.constant 1.000000e+00 : f32
    %102 = vector.broadcast %cst_24 : f32 to vector<8x128xf32>
    %103 = arith.subf %102, %94 : vector<8x128xf32>
    %104 = arith.mulf %103, %101 : vector<8x128xf32>
    %105 = arith.mulf %94, %75 : vector<8x128xf32>
    %106 = arith.addf %104, %105 : vector<8x128xf32>
    %107 = vector.extract_strided_slice %10 {offsets = [0, 3, 0], sizes = [8, 1, 384], strides = [1, 1, 1]} : vector<8x8x384xf32> to vector<8x1x384xf32>
    %108 = vector.shape_cast %107 : vector<8x1x384xf32> to vector<8x384xf32>
    %cst_25 = arith.constant dense<0.000000e+00> : vector<8x384xf32>
    %109 = tpu.matmul %106, %12, %cst_25 {dimension_numbers = #tpu.dot_dimension_numbers<[1], [0], [0], [1], [0, 0, 1, 1], [], []>} : vector<8x128xf32>, vector<128x384xf32>, vector<8x384xf32> -> vector<8x384xf32>
    %110 = vector.extract_strided_slice %108 {offsets = [0, 0], sizes = [8, 128], strides = [1, 1]} : vector<8x384xf32> to vector<8x128xf32>
    %111 = vector.extract_strided_slice %109 {offsets = [0, 0], sizes = [8, 128], strides = [1, 1]} : vector<8x384xf32> to vector<8x128xf32>
    %112 = arith.addf %110, %111 : vector<8x128xf32>
    %113 = arith.negf %112 : vector<8x128xf32>
    %114 = math.exp %113 : vector<8x128xf32>
    %cst_26 = arith.constant 1.000000e+00 : f32
    %115 = vector.broadcast %cst_26 : f32 to vector<8x128xf32>
    %116 = arith.addf %115, %114 : vector<8x128xf32>
    %117 = arith.divf %115, %116 : vector<8x128xf32>
    %118 = vector.extract_strided_slice %108 {offsets = [0, 128], sizes = [8, 128], strides = [1, 1]} : vector<8x384xf32> to vector<8x128xf32>
    %119 = vector.extract_strided_slice %109 {offsets = [0, 128], sizes = [8, 128], strides = [1, 1]} : vector<8x384xf32> to vector<8x128xf32>
    %120 = arith.addf %118, %119 : vector<8x128xf32>
    %121 = arith.negf %120 : vector<8x128xf32>
    %122 = math.exp %121 : vector<8x128xf32>
    %cst_27 = arith.constant 1.000000e+00 : f32
    %123 = vector.broadcast %cst_27 : f32 to vector<8x128xf32>
    %124 = arith.addf %123, %122 : vector<8x128xf32>
    %125 = arith.divf %123, %124 : vector<8x128xf32>
    %126 = vector.extract_strided_slice %108 {offsets = [0, 256], sizes = [8, 128], strides = [1, 1]} : vector<8x384xf32> to vector<8x128xf32>
    %127 = vector.extract_strided_slice %109 {offsets = [0, 256], sizes = [8, 128], strides = [1, 1]} : vector<8x384xf32> to vector<8x128xf32>
    %128 = vector.broadcast %13 : vector<1x128xf32> to vector<8x128xf32>
    %129 = arith.addf %127, %128 : vector<8x128xf32>
    %130 = arith.mulf %117, %129 : vector<8x128xf32>
    %131 = arith.addf %126, %130 : vector<8x128xf32>
    %132 = math.tanh %131 : vector<8x128xf32>
    %cst_28 = arith.constant 1.000000e+00 : f32
    %133 = vector.broadcast %cst_28 : f32 to vector<8x128xf32>
    %134 = arith.subf %133, %125 : vector<8x128xf32>
    %135 = arith.mulf %134, %132 : vector<8x128xf32>
    %136 = arith.mulf %125, %106 : vector<8x128xf32>
    %137 = arith.addf %135, %136 : vector<8x128xf32>
    %138 = vector.extract_strided_slice %10 {offsets = [0, 4, 0], sizes = [8, 1, 384], strides = [1, 1, 1]} : vector<8x8x384xf32> to vector<8x1x384xf32>
    %139 = vector.shape_cast %138 : vector<8x1x384xf32> to vector<8x384xf32>
    %cst_29 = arith.constant dense<0.000000e+00> : vector<8x384xf32>
    %140 = tpu.matmul %137, %12, %cst_29 {dimension_numbers = #tpu.dot_dimension_numbers<[1], [0], [0], [1], [0, 0, 1, 1], [], []>} : vector<8x128xf32>, vector<128x384xf32>, vector<8x384xf32> -> vector<8x384xf32>
    %141 = vector.extract_strided_slice %139 {offsets = [0, 0], sizes = [8, 128], strides = [1, 1]} : vector<8x384xf32> to vector<8x128xf32>
    %142 = vector.extract_strided_slice %140 {offsets = [0, 0], sizes = [8, 128], strides = [1, 1]} : vector<8x384xf32> to vector<8x128xf32>
    %143 = arith.addf %141, %142 : vector<8x128xf32>
    %144 = arith.negf %143 : vector<8x128xf32>
    %145 = math.exp %144 : vector<8x128xf32>
    %cst_30 = arith.constant 1.000000e+00 : f32
    %146 = vector.broadcast %cst_30 : f32 to vector<8x128xf32>
    %147 = arith.addf %146, %145 : vector<8x128xf32>
    %148 = arith.divf %146, %147 : vector<8x128xf32>
    %149 = vector.extract_strided_slice %139 {offsets = [0, 128], sizes = [8, 128], strides = [1, 1]} : vector<8x384xf32> to vector<8x128xf32>
    %150 = vector.extract_strided_slice %140 {offsets = [0, 128], sizes = [8, 128], strides = [1, 1]} : vector<8x384xf32> to vector<8x128xf32>
    %151 = arith.addf %149, %150 : vector<8x128xf32>
    %152 = arith.negf %151 : vector<8x128xf32>
    %153 = math.exp %152 : vector<8x128xf32>
    %cst_31 = arith.constant 1.000000e+00 : f32
    %154 = vector.broadcast %cst_31 : f32 to vector<8x128xf32>
    %155 = arith.addf %154, %153 : vector<8x128xf32>
    %156 = arith.divf %154, %155 : vector<8x128xf32>
    %157 = vector.extract_strided_slice %139 {offsets = [0, 256], sizes = [8, 128], strides = [1, 1]} : vector<8x384xf32> to vector<8x128xf32>
    %158 = vector.extract_strided_slice %140 {offsets = [0, 256], sizes = [8, 128], strides = [1, 1]} : vector<8x384xf32> to vector<8x128xf32>
    %159 = vector.broadcast %13 : vector<1x128xf32> to vector<8x128xf32>
    %160 = arith.addf %158, %159 : vector<8x128xf32>
    %161 = arith.mulf %148, %160 : vector<8x128xf32>
    %162 = arith.addf %157, %161 : vector<8x128xf32>
    %163 = math.tanh %162 : vector<8x128xf32>
    %cst_32 = arith.constant 1.000000e+00 : f32
    %164 = vector.broadcast %cst_32 : f32 to vector<8x128xf32>
    %165 = arith.subf %164, %156 : vector<8x128xf32>
    %166 = arith.mulf %165, %163 : vector<8x128xf32>
    %167 = arith.mulf %156, %137 : vector<8x128xf32>
    %168 = arith.addf %166, %167 : vector<8x128xf32>
    %169 = vector.extract_strided_slice %10 {offsets = [0, 5, 0], sizes = [8, 1, 384], strides = [1, 1, 1]} : vector<8x8x384xf32> to vector<8x1x384xf32>
    %170 = vector.shape_cast %169 : vector<8x1x384xf32> to vector<8x384xf32>
    %cst_33 = arith.constant dense<0.000000e+00> : vector<8x384xf32>
    %171 = tpu.matmul %168, %12, %cst_33 {dimension_numbers = #tpu.dot_dimension_numbers<[1], [0], [0], [1], [0, 0, 1, 1], [], []>} : vector<8x128xf32>, vector<128x384xf32>, vector<8x384xf32> -> vector<8x384xf32>
    %172 = vector.extract_strided_slice %170 {offsets = [0, 0], sizes = [8, 128], strides = [1, 1]} : vector<8x384xf32> to vector<8x128xf32>
    %173 = vector.extract_strided_slice %171 {offsets = [0, 0], sizes = [8, 128], strides = [1, 1]} : vector<8x384xf32> to vector<8x128xf32>
    %174 = arith.addf %172, %173 : vector<8x128xf32>
    %175 = arith.negf %174 : vector<8x128xf32>
    %176 = math.exp %175 : vector<8x128xf32>
    %cst_34 = arith.constant 1.000000e+00 : f32
    %177 = vector.broadcast %cst_34 : f32 to vector<8x128xf32>
    %178 = arith.addf %177, %176 : vector<8x128xf32>
    %179 = arith.divf %177, %178 : vector<8x128xf32>
    %180 = vector.extract_strided_slice %170 {offsets = [0, 128], sizes = [8, 128], strides = [1, 1]} : vector<8x384xf32> to vector<8x128xf32>
    %181 = vector.extract_strided_slice %171 {offsets = [0, 128], sizes = [8, 128], strides = [1, 1]} : vector<8x384xf32> to vector<8x128xf32>
    %182 = arith.addf %180, %181 : vector<8x128xf32>
    %183 = arith.negf %182 : vector<8x128xf32>
    %184 = math.exp %183 : vector<8x128xf32>
    %cst_35 = arith.constant 1.000000e+00 : f32
    %185 = vector.broadcast %cst_35 : f32 to vector<8x128xf32>
    %186 = arith.addf %185, %184 : vector<8x128xf32>
    %187 = arith.divf %185, %186 : vector<8x128xf32>
    %188 = vector.extract_strided_slice %170 {offsets = [0, 256], sizes = [8, 128], strides = [1, 1]} : vector<8x384xf32> to vector<8x128xf32>
    %189 = vector.extract_strided_slice %171 {offsets = [0, 256], sizes = [8, 128], strides = [1, 1]} : vector<8x384xf32> to vector<8x128xf32>
    %190 = vector.broadcast %13 : vector<1x128xf32> to vector<8x128xf32>
    %191 = arith.addf %189, %190 : vector<8x128xf32>
    %192 = arith.mulf %179, %191 : vector<8x128xf32>
    %193 = arith.addf %188, %192 : vector<8x128xf32>
    %194 = math.tanh %193 : vector<8x128xf32>
    %cst_36 = arith.constant 1.000000e+00 : f32
    %195 = vector.broadcast %cst_36 : f32 to vector<8x128xf32>
    %196 = arith.subf %195, %187 : vector<8x128xf32>
    %197 = arith.mulf %196, %194 : vector<8x128xf32>
    %198 = arith.mulf %187, %168 : vector<8x128xf32>
    %199 = arith.addf %197, %198 : vector<8x128xf32>
    %200 = vector.extract_strided_slice %10 {offsets = [0, 6, 0], sizes = [8, 1, 384], strides = [1, 1, 1]} : vector<8x8x384xf32> to vector<8x1x384xf32>
    %201 = vector.shape_cast %200 : vector<8x1x384xf32> to vector<8x384xf32>
    %cst_37 = arith.constant dense<0.000000e+00> : vector<8x384xf32>
    %202 = tpu.matmul %199, %12, %cst_37 {dimension_numbers = #tpu.dot_dimension_numbers<[1], [0], [0], [1], [0, 0, 1, 1], [], []>} : vector<8x128xf32>, vector<128x384xf32>, vector<8x384xf32> -> vector<8x384xf32>
    %203 = vector.extract_strided_slice %201 {offsets = [0, 0], sizes = [8, 128], strides = [1, 1]} : vector<8x384xf32> to vector<8x128xf32>
    %204 = vector.extract_strided_slice %202 {offsets = [0, 0], sizes = [8, 128], strides = [1, 1]} : vector<8x384xf32> to vector<8x128xf32>
    %205 = arith.addf %203, %204 : vector<8x128xf32>
    %206 = arith.negf %205 : vector<8x128xf32>
    %207 = math.exp %206 : vector<8x128xf32>
    %cst_38 = arith.constant 1.000000e+00 : f32
    %208 = vector.broadcast %cst_38 : f32 to vector<8x128xf32>
    %209 = arith.addf %208, %207 : vector<8x128xf32>
    %210 = arith.divf %208, %209 : vector<8x128xf32>
    %211 = vector.extract_strided_slice %201 {offsets = [0, 128], sizes = [8, 128], strides = [1, 1]} : vector<8x384xf32> to vector<8x128xf32>
    %212 = vector.extract_strided_slice %202 {offsets = [0, 128], sizes = [8, 128], strides = [1, 1]} : vector<8x384xf32> to vector<8x128xf32>
    %213 = arith.addf %211, %212 : vector<8x128xf32>
    %214 = arith.negf %213 : vector<8x128xf32>
    %215 = math.exp %214 : vector<8x128xf32>
    %cst_39 = arith.constant 1.000000e+00 : f32
    %216 = vector.broadcast %cst_39 : f32 to vector<8x128xf32>
    %217 = arith.addf %216, %215 : vector<8x128xf32>
    %218 = arith.divf %216, %217 : vector<8x128xf32>
    %219 = vector.extract_strided_slice %201 {offsets = [0, 256], sizes = [8, 128], strides = [1, 1]} : vector<8x384xf32> to vector<8x128xf32>
    %220 = vector.extract_strided_slice %202 {offsets = [0, 256], sizes = [8, 128], strides = [1, 1]} : vector<8x384xf32> to vector<8x128xf32>
    %221 = vector.broadcast %13 : vector<1x128xf32> to vector<8x128xf32>
    %222 = arith.addf %220, %221 : vector<8x128xf32>
    %223 = arith.mulf %210, %222 : vector<8x128xf32>
    %224 = arith.addf %219, %223 : vector<8x128xf32>
    %225 = math.tanh %224 : vector<8x128xf32>
    %cst_40 = arith.constant 1.000000e+00 : f32
    %226 = vector.broadcast %cst_40 : f32 to vector<8x128xf32>
    %227 = arith.subf %226, %218 : vector<8x128xf32>
    %228 = arith.mulf %227, %225 : vector<8x128xf32>
    %229 = arith.mulf %218, %199 : vector<8x128xf32>
    %230 = arith.addf %228, %229 : vector<8x128xf32>
    %231 = vector.extract_strided_slice %10 {offsets = [0, 7, 0], sizes = [8, 1, 384], strides = [1, 1, 1]} : vector<8x8x384xf32> to vector<8x1x384xf32>
    %232 = vector.shape_cast %231 : vector<8x1x384xf32> to vector<8x384xf32>
    %cst_41 = arith.constant dense<0.000000e+00> : vector<8x384xf32>
    %233 = tpu.matmul %230, %12, %cst_41 {dimension_numbers = #tpu.dot_dimension_numbers<[1], [0], [0], [1], [0, 0, 1, 1], [], []>} : vector<8x128xf32>, vector<128x384xf32>, vector<8x384xf32> -> vector<8x384xf32>
    %234 = vector.extract_strided_slice %232 {offsets = [0, 0], sizes = [8, 128], strides = [1, 1]} : vector<8x384xf32> to vector<8x128xf32>
    %235 = vector.extract_strided_slice %233 {offsets = [0, 0], sizes = [8, 128], strides = [1, 1]} : vector<8x384xf32> to vector<8x128xf32>
    %236 = arith.addf %234, %235 : vector<8x128xf32>
    %237 = arith.negf %236 : vector<8x128xf32>
    %238 = math.exp %237 : vector<8x128xf32>
    %cst_42 = arith.constant 1.000000e+00 : f32
    %239 = vector.broadcast %cst_42 : f32 to vector<8x128xf32>
    %240 = arith.addf %239, %238 : vector<8x128xf32>
    %241 = arith.divf %239, %240 : vector<8x128xf32>
    %242 = vector.extract_strided_slice %232 {offsets = [0, 128], sizes = [8, 128], strides = [1, 1]} : vector<8x384xf32> to vector<8x128xf32>
    %243 = vector.extract_strided_slice %233 {offsets = [0, 128], sizes = [8, 128], strides = [1, 1]} : vector<8x384xf32> to vector<8x128xf32>
    %244 = arith.addf %242, %243 : vector<8x128xf32>
    %245 = arith.negf %244 : vector<8x128xf32>
    %246 = math.exp %245 : vector<8x128xf32>
    %cst_43 = arith.constant 1.000000e+00 : f32
    %247 = vector.broadcast %cst_43 : f32 to vector<8x128xf32>
    %248 = arith.addf %247, %246 : vector<8x128xf32>
    %249 = arith.divf %247, %248 : vector<8x128xf32>
    %250 = vector.extract_strided_slice %232 {offsets = [0, 256], sizes = [8, 128], strides = [1, 1]} : vector<8x384xf32> to vector<8x128xf32>
    %251 = vector.extract_strided_slice %233 {offsets = [0, 256], sizes = [8, 128], strides = [1, 1]} : vector<8x384xf32> to vector<8x128xf32>
    %252 = vector.broadcast %13 : vector<1x128xf32> to vector<8x128xf32>
    %253 = arith.addf %251, %252 : vector<8x128xf32>
    %254 = arith.mulf %241, %253 : vector<8x128xf32>
    %255 = arith.addf %250, %254 : vector<8x128xf32>
    %256 = math.tanh %255 : vector<8x128xf32>
    %cst_44 = arith.constant 1.000000e+00 : f32
    %257 = vector.broadcast %cst_44 : f32 to vector<8x128xf32>
    %258 = arith.subf %257, %249 : vector<8x128xf32>
    %259 = arith.mulf %258, %256 : vector<8x128xf32>
    %260 = arith.mulf %249, %230 : vector<8x128xf32>
    %261 = arith.addf %259, %260 : vector<8x128xf32>
    %c0_45 = arith.constant 0 : index
    %c0_46 = arith.constant 0 : index
    %262 = vector.load %arg10[%c0_45, %c0_46] : memref<8x128xf32, #tpu.memory_space<vmem>>, vector<8x128xf32>
    tpu.vector_store %arg10[%c0_45, %c0_46], %261 {strides = array<i32>} : memref<8x128xf32, #tpu.memory_space<vmem>>, vector<8x128xf32>,
    %c0_i32_47 = arith.constant 0 : i32
    %263 = arith.cmpi eq, %arg1, %c0_i32_47 : i32
    %264 = arith.extui %263 : i1 to i32
    %c0_i32_48 = arith.constant 0 : i32
    %265 = arith.cmpi ne, %264, %c0_i32_48 : i32
    scf.if %265 {
      %c0_49 = arith.constant 0 : index
      %c0_50 = arith.constant 0 : index
      %266 = vector.load %arg7[%c0_49, %c0_50] : memref<128x128xf32, #tpu.memory_space<vmem>>, vector<128x128xf32>
      %cst_51 = arith.constant dense<0.000000e+00> : vector<8x128xf32>
      %267 = tpu.matmul %261, %266, %cst_51 {dimension_numbers = #tpu.dot_dimension_numbers<[1], [0], [0], [1], [0, 0, 1, 1], [], []>} : vector<8x128xf32>, vector<128x128xf32>, vector<8x128xf32> -> vector<8x128xf32>
      %c0_52 = arith.constant 0 : index
      %c0_53 = arith.constant 0 : index
      %268 = vector.load %arg8[%c0_52, %c0_53] : memref<1x128xf32, #tpu.memory_space<vmem>>, vector<1x128xf32>
      %269 = vector.broadcast %268 : vector<1x128xf32> to vector<8x128xf32>
      %270 = arith.addf %267, %269 : vector<8x128xf32>
      %c0_54 = arith.constant 0 : index
      %c0_55 = arith.constant 0 : index
      %271 = vector.load %arg9[%c0_54, %c0_55] : memref<8x128xf32, #tpu.memory_space<vmem>>, vector<8x128xf32>
      tpu.vector_store %arg9[%c0_54, %c0_55], %270 {strides = array<i32>} : memref<8x128xf32, #tpu.memory_space<vmem>>, vector<8x128xf32>,
    } else {
    }
    return
  }
  func.func @transform_0(%arg0: i32, %arg1: i32) -> (i32, i32, i32) {
    %c0_i32 = arith.constant 0 : i32
    %c0_i32_0 = arith.constant 0 : i32
    return %arg0, %arg1, %c0_i32 : i32, i32, i32
  }
  func.func @transform_1(%arg0: i32, %arg1: i32) -> (i32, i32) {
    %c0_i32 = arith.constant 0 : i32
    %c0_i32_0 = arith.constant 0 : i32
    %c0_i32_1 = arith.constant 0 : i32
    return %c0_i32, %c0_i32_0 : i32, i32
  }
  func.func @transform_2(%arg0: i32, %arg1: i32) -> (i32, i32) {
    %c0_i32 = arith.constant 0 : i32
    %c0_i32_0 = arith.constant 0 : i32
    %c0_i32_1 = arith.constant 0 : i32
    return %c0_i32, %c0_i32_0 : i32, i32
  }
  func.func @transform_3(%arg0: i32, %arg1: i32) -> (i32, i32) {
    %c0_i32 = arith.constant 0 : i32
    %c0_i32_0 = arith.constant 0 : i32
    %c0_i32_1 = arith.constant 0 : i32
    return %c0_i32, %c0_i32_0 : i32, i32
  }
  func.func @transform_4(%arg0: i32, %arg1: i32) -> (i32, i32) {
    %c0_i32 = arith.constant 0 : i32
    %c0_i32_0 = arith.constant 0 : i32
    %c0_i32_1 = arith.constant 0 : i32
    return %c0_i32, %c0_i32_0 : i32, i32
  }
  func.func @transform_5(%arg0: i32, %arg1: i32) -> (i32, i32) {
    %c0_i32 = arith.constant 0 : i32
    %c0_i32_0 = arith.constant 0 : i32
    %c0_i32_1 = arith.constant 0 : i32
    return %c0_i32, %c0_i32_0 : i32, i32
  }
  func.func @transform_6(%arg0: i32, %arg1: i32) -> (i32, i32) {
    %c0_i32 = arith.constant 0 : i32
    %c0_i32_0 = arith.constant 0 : i32
    %c0_i32_1 = arith.constant 0 : i32
    return %c0_i32, %c0_i32_0 : i32, i32
  }
  func.func @transform_7(%arg0: i32, %arg1: i32) -> (i32, i32) {
    %c0_i32 = arith.constant 0 : i32
    %c0_i32_0 = arith.constant 0 : i32
    return %arg0, %c0_i32 : i32, i32
  }
}

</mosaic_0001>

<llo_original>
// kernel: gru_decoder_pallas.1
$region0: #{gru_decoder_pallas.1}
  #allocation0 [shape = 'u32[]', space=smem, size = 0x4, offset = 0x4, fixed_abs, tag = 'smem constant byte address 0x4 - core index']
  #allocation1 [shape = 'u32[144,128]{1,0:T(1,128)}', space=vmem, size = 0x12000, scoped, tag = 'internal scratch']
  #allocation2 [shape = 'f32[8,128]{1,0:T(8,128)}', space=vmem, size = 0x1000, scoped, tag = 'scratch operand']
  %s0 = inlined_call_operand.vmem [shape: f32[8,8,4], index: 0, kind: input, shape index: {}]
  %s1 = inlined_call_operand.vmem [shape: f32[4,384], index: 1, kind: input, shape index: {}]
  %s2 = inlined_call_operand.vmem [shape: f32[1,384], index: 2, kind: input, shape index: {}]
  %s3 = inlined_call_operand.vmem [shape: f32[128,384], index: 3, kind: input, shape index: {}]
  %s4 = inlined_call_operand.vmem [shape: f32[1,128], index: 4, kind: input, shape index: {}]
  %s5 = inlined_call_operand.vmem [shape: f32[128,128], index: 5, kind: input, shape index: {}]
  %s6 = inlined_call_operand.vmem [shape: f32[1,128], index: 6, kind: input, shape index: {}]
  %s7 = inlined_call_operand.vmem [shape: f32[8,128], index: 7, kind: output, shape index: {}]
  %s8 = sld [smem:[#allocation0]]
  $region46: #{gru_decoder_pallas.1} parent=0
    _
  %s10 = ssub.s32 1, %s8
  %s11 = scalar_select 0, %s10, %s8
  // Predicated region
  $region2: #{gru_decoder_pallas.1} parent=0 // pred_check
    _
  $region3: #{gru_decoder_pallas.1} parent=0 // pred_check_branch
    %13 = sbr.rel (0) target = $region5
  $region4: #{gru_decoder_pallas.1} parent=0 // pred_region
    _
  $region5: #{gru_decoder_pallas.1} parent=0 // pred_fallthru
    _
  // Predicated region
  $region6: #{gru_decoder_pallas.1} parent=0 // pred_check
    _
  $region7: #{gru_decoder_pallas.1} parent=0 // pred_check_branch
    %15 = sbr.rel (0) target = $region9
  $region8: #{gru_decoder_pallas.1} parent=0 // pred_region
    _
  $region9: #{gru_decoder_pallas.1} parent=0 // pred_fallthru
    _
  // Predicated region
  $region10: #{gru_decoder_pallas.1} parent=0 // pred_check
    _
  $region11: #{gru_decoder_pallas.1} parent=0 // pred_check_branch
    %17 = sbr.rel (0) target = $region13
  $region12: #{gru_decoder_pallas.1} parent=0 // pred_region
    _
  $region13: #{gru_decoder_pallas.1} parent=0 // pred_fallthru
    _
  // Predicated region
  $region14: #{gru_decoder_pallas.1} parent=0 // pred_check
    _
  $region15: #{gru_decoder_pallas.1} parent=0 // pred_check_branch
    %19 = sbr.rel (0) target = $region17
  $region16: #{gru_decoder_pallas.1} parent=0 // pred_region
    _
  $region17: #{gru_decoder_pallas.1} parent=0 // pred_fallthru
    _
  // Predicated region
  $region18: #{gru_decoder_pallas.1} parent=0 // pred_check
    _
  $region19: #{gru_decoder_pallas.1} parent=0 // pred_check_branch
    %21 = sbr.rel (0) target = $region21
  $region20: #{gru_decoder_pallas.1} parent=0 // pred_region
    _
  $region21: #{gru_decoder_pallas.1} parent=0 // pred_fallthru
    _
  // Predicated region
  $region22: #{gru_decoder_pallas.1} parent=0 // pred_check
    _
  $region23: #{gru_decoder_pallas.1} parent=0 // pred_check_branch
    %23 = sbr.rel (0) target = $region25
  $region24: #{gru_decoder_pallas.1} parent=0 // pred_region
    _
  $region25: #{gru_decoder_pallas.1} parent=0 // pred_fallthru
    _
  // Predicated region
  $region26: #{gru_decoder_pallas.1} parent=0 // pred_check
    _
  $region27: #{gru_decoder_pallas.1} parent=0 // pred_check_branch
    %25 = sbr.rel (0) target = $region29
  $region28: #{gru_decoder_pallas.1} parent=0 // pred_region
    _
  $region29: #{gru_decoder_pallas.1} parent=0 // pred_fallthru
    _
  %p26 = scmp.eq.s32.totalorder 0, 0
  // Predicated region
  $region30: #{gru_decoder_pallas.1} parent=0 // pred_check
    %p27 = pneg %p26
  $region31: #{gru_decoder_pallas.1} parent=0 // pred_check_branch
    %29 = sbr.rel (%p27) target = $region33
  $region32: #{gru_decoder_pallas.1} parent=0 // pred_region
    %30 = vst [vmem:[#allocation2] sm:$0xff] 0.0
  $region33: #{gru_decoder_pallas.1} parent=0 // pred_fallthru
    _
  %v31 = vld [vmem:[%s0] sm:$0xff]
  %v32 = vld [vmem:[%s0 + $0x8] sm:$0xff]
  %v33 = vld [vmem:[%s0 + $0x10] sm:$0xff]
  %v34 = vld [vmem:[%s0 + $0x18] sm:$0xff]
  %v35 = vld [vmem:[%s0 + $0x20] sm:$0xff]
  %v36 = vld [vmem:[%s0 + $0x28] sm:$0xff]
  %v37 = vld [vmem:[%s0 + $0x30] sm:$0xff]
  %v38 = vld [vmem:[%s0 + $0x38] sm:$0xff]
  %v39 = vld [vmem:[%s1] sm:$0xff]
  %v40 = vld [vmem:[%s1 + $0x8] sm:$0xf]
  %v41 = vld [vmem:[%s2] sm:$0x7]
  %v43 = vlaneseq
  %v44 = vshrl.u32 %v43, 7
  %v45 = vsub.s32 0, %v44
  %v46 = vrot.slane %v41, %v45
  %v47 = vlaneseq
  %v48 = vshrl.u32 %v47, 7
  %v49 = vsub.s32 1, %v48
  %v50 = vrot.slane %v41, %v49
  %v51 = vlaneseq
  %v52 = vshrl.u32 %v51, 7
  %v53 = vsub.s32 2, %v52
  %v54 = vrot.slane %v41, %v53
  %v60 = vcombine.high %v39, %v39
  %vm61 = vcmask 31744
  %v63 = vsel %vm61, %v31, 0
  %v66 = vsel %vm61, %v32, 0
  %v69 = vsel %vm61, %v33, 0
  %v72 = vsel %vm61, %v34, 0
  %v75 = vsel %vm61, %v35, 0
  %v78 = vsel %vm61, %v36, 0
  %v81 = vsel %vm61, %v37, 0
  %v84 = vsel %vm61, %v38, 0
  %vm86 = vcmask 1043456
  %v87 = vsel %vm86, %v39, 0
  %v89 = vsel %vm86, %v60, 0
  %v91 = vsel %vm86, %v40, 0
  %93 = vmatprep.subr.mxu0 %v89
  %94 = vmatpush1.msra.mxu0 %v87
  %95 = vmatprep.subr.mxu0 0.0
  %96 = vmatpush1.msra.mxu0 0.0
  %97 = vmatprep.subr.mxu0 0.0
  %98 = vmatpush1.msra.mxu0 0.0
  %99 = vmatprep.subr.mxu0 0.0
  %100 = vmatpush1.msra.mxu0 0.0
  %101 = vmatprep.subr.mxu0 0.0
  %102 = vmatpush1.msra.mxu0 0.0
  %103 = vmatprep.subr.mxu0 0.0
  %104 = vmatpush1.msra.mxu0 0.0
  %105 = vmatprep.subr.mxu0 0.0
  %106 = vmatpush1.msra.mxu0 0.0
  %107 = vmatprep.subr.mxu0 0.0
  %108 = vmatpush1.msra.mxu0 0.0
  %109 = vmatprep.subr.mxu0 0.0
  %110 = vmatpush1.msra.mxu0 0.0
  %111 = vmatprep.subr.mxu0 0.0
  %112 = vmatpush1.msra.mxu0 0.0
  %113 = vmatprep.subr.mxu0 0.0
  %114 = vmatpush1.msra.mxu0 0.0
  %115 = vmatprep.subr.mxu0 0.0
  %116 = vmatpush1.msra.mxu0 0.0
  %117 = vmatprep.subr.mxu0 0.0
  %118 = vmatpush1.msra.mxu0 0.0
  %119 = vmatprep.subr.mxu0 0.0
  %120 = vmatpush1.msra.mxu0 0.0
  %121 = vmatprep.subr.mxu0 0.0
  %122 = vmatpush1.msra.mxu0 0.0
  %123 = vmatprep.subr.mxu0 0.0
  %124 = vmatpush1.msra.mxu0 0.0
  %125 = vmatprep.subr.mxu0 0.0
  %126 = vmatpush1.msra.mxu0 0.0
  %127 = vmatprep.subr.mxu0 0.0
  %128 = vmatpush1.msra.mxu0 0.0
  %129 = vmatprep.subr.mxu0 0.0
  %130 = vmatpush1.msra.mxu0 0.0
  %131 = vmatprep.subr.mxu0 0.0
  %132 = vmatpush1.msra.mxu0 0.0
  %133 = vmatprep.subr.mxu0 0.0
  %134 = vmatpush1.msra.mxu0 0.0
  %135 = vmatprep.subr.mxu0 0.0
  %136 = vmatpush1.msra.mxu0 0.0
  %137 = vmatprep.subr.mxu0 0.0
  %138 = vmatpush1.msra.mxu0 0.0
  %139 = vmatprep.subr.mxu0 0.0
  %140 = vmatpush1.msra.mxu0 0.0
  %141 = vmatprep.subr.mxu0 0.0
  %142 = vmatpush1.msra.mxu0 0.0
  %143 = vmatprep.subr.mxu0 0.0
  %144 = vmatpush1.msra.mxu0 0.0
  %145 = vmatprep.subr.mxu0 0.0
  %146 = vmatpush1.msra.mxu0 0.0
  %147 = vmatprep.subr.mxu0 0.0
  %148 = vmatpush1.msra.mxu0 0.0
  %149 = vmatprep.subr.mxu0 0.0
  %150 = vmatpush1.msra.mxu0 0.0
  %151 = vmatprep.subr.mxu0 0.0
  %152 = vmatpush1.msra.mxu0 0.0
  %153 = vmatprep.subr.mxu0 0.0
  %154 = vmatpush1.msra.mxu0 0.0
  %155 = vmatprep.subr.mxu0 0.0
  %156 = vmatpush1.msra.mxu0 0.0
  %157 = vmatprep.mubr.f32.mxu0 0.0
  %158 = vmatmul.mubr.f32.gmra.mrb[0].mxu0 %v63
  %v159 = vpop.f32.mrb[0].mxu0
  %v160 = vadd.f32 %v46, %v159
  %v161 = vpop.f32.mrb[0].mxu0
  %v162 = vadd.f32 %v50, %v161
  %163 = vmatprep.mubr.f32.mxu0 0.0
  %164 = vmatmul.mubr.f32.gmra.mrb[0].mxu0 %v66
  %v165 = vpop.f32.mrb[0].mxu0
  %v166 = vadd.f32 %v46, %v165
  %v167 = vpop.f32.mrb[0].mxu0
  %v168 = vadd.f32 %v50, %v167
  %169 = vmatprep.mubr.f32.mxu0 0.0
  %170 = vmatmul.mubr.f32.gmra.mrb[0].mxu0 %v69
  %v171 = vpop.f32.mrb[0].mxu0
  %v172 = vadd.f32 %v46, %v171
  %v173 = vpop.f32.mrb[0].mxu0
  %v174 = vadd.f32 %v50, %v173
  %175 = vmatprep.mubr.f32.mxu0 0.0
  %176 = vmatmul.mubr.f32.gmra.mrb[0].mxu0 %v72
  %v177 = vpop.f32.mrb[0].mxu0
  %v178 = vadd.f32 %v46, %v177
  %v179 = vpop.f32.mrb[0].mxu0
  %v180 = vadd.f32 %v50, %v179
  %181 = vmatprep.mubr.f32.mxu0 0.0
  %182 = vmatmul.mubr.f32.gmra.mrb[0].mxu0 %v75
  %v183 = vpop.f32.mrb[0].mxu0
  %v184 = vadd.f32 %v46, %v183
  %v185 = vpop.f32.mrb[0].mxu0
  %v186 = vadd.f32 %v50, %v185
  %187 = vmatprep.mubr.f32.mxu0 0.0
  %188 = vmatmul.mubr.f32.gmra.mrb[0].mxu0 %v78
  %v189 = vpop.f32.mrb[0].mxu0
  %v190 = vadd.f32 %v46, %v189
  %v191 = vpop.f32.mrb[0].mxu0
  %v192 = vadd.f32 %v50, %v191
  %193 = vmatprep.mubr.f32.mxu0 0.0
  %194 = vmatmul.mubr.f32.gmra.mrb[0].mxu0 %v81
  %v195 = vpop.f32.mrb[0].mxu0
  %v196 = vadd.f32 %v46, %v195
  %v197 = vpop.f32.mrb[0].mxu0
  %v198 = vadd.f32 %v50, %v197
  %199 = vmatprep.mubr.f32.mxu0 0.0
  %200 = vmatmul.mubr.f32.gmra.mrb[0].mxu0 %v84
  %v201 = vpop.f32.mrb[0].mxu0
  %v202 = vadd.f32 %v46, %v201
  %v203 = vpop.f32.mrb[0].mxu0
  %v204 = vadd.f32 %v50, %v203
  %205 = vdwg.mxu0
  %206 = vmatprep.subr.mxu0 0.0
  %207 = vmatpush1.msra.mxu0 %v91
  %208 = vmatprep.subr.mxu0 0.0
  %209 = vmatpush1.msra.mxu0 0.0
  %210 = vmatprep.subr.mxu0 0.0
  %211 = vmatpush1.msra.mxu0 0.0
  %212 = vmatprep.subr.mxu0 0.0
  %213 = vmatpush1.msra.mxu0 0.0
  %214 = vmatprep.subr.mxu0 0.0
  %215 = vmatpush1.msra.mxu0 0.0
  %216 = vmatprep.subr.mxu0 0.0
  %217 = vmatpush1.msra.mxu0 0.0
  %218 = vmatprep.subr.mxu0 0.0
  %219 = vmatpush1.msra.mxu0 0.0
  %220 = vmatprep.subr.mxu0 0.0
  %221 = vmatpush1.msra.mxu0 0.0
  %222 = vmatprep.subr.mxu0 0.0
  %223 = vmatpush1.msra.mxu0 0.0
  %224 = vmatprep.subr.mxu0 0.0
  %225 = vmatpush1.msra.mxu0 0.0
  %226 = vmatprep.subr.mxu0 0.0
  %227 = vmatpush1.msra.mxu0 0.0
  %228 = vmatprep.subr.mxu0 0.0
  %229 = vmatpush1.msra.mxu0 0.0
  %230 = vmatprep.subr.mxu0 0.0
  %231 = vmatpush1.msra.mxu0 0.0
  %232 = vmatprep.subr.mxu0 0.0
  %233 = vmatpush1.msra.mxu0 0.0
  %234 = vmatprep.subr.mxu0 0.0
  %235 = vmatpush1.msra.mxu0 0.0
  %236 = vmatprep.subr.mxu0 0.0
  %237 = vmatpush1.msra.mxu0 0.0
  %238 = vmatprep.subr.mxu0 0.0
  %239 = vmatpush1.msra.mxu0 0.0
  %240 = vmatprep.subr.mxu0 0.0
  %241 = vmatpush1.msra.mxu0 0.0
  %242 = vmatprep.subr.mxu0 0.0
  %243 = vmatpush1.msra.mxu0 0.0
  %244 = vmatprep.subr.mxu0 0.0
  %245 = vmatpush1.msra.mxu0 0.0
  %246 = vmatprep.subr.mxu0 0.0
  %247 = vmatpush1.msra.mxu0 0.0
  %248 = vmatprep.subr.mxu0 0.0
  %249 = vmatpush1.msra.mxu0 0.0
  %250 = vmatprep.subr.mxu0 0.0
  %251 = vmatpush1.msra.mxu0 0.0
  %252 = vmatprep.subr.mxu0 0.0
  %253 = vmatpush1.msra.mxu0 0.0
  %254 = vmatprep.subr.mxu0 0.0
  %255 = vmatpush1.msra.mxu0 0.0
  %256 = vmatprep.subr.mxu0 0.0
  %257 = vmatpush1.msra.mxu0 0.0
  %258 = vmatprep.subr.mxu0 0.0
  %259 = vmatpush1.msra.mxu0 0.0
  %260 = vmatprep.subr.mxu0 0.0
  %261 = vmatpush1.msra.mxu0 0.0
  %262 = vmatprep.subr.mxu0 0.0
  %263 = vmatpush1.msra.mxu0 0.0
  %264 = vmatprep.subr.mxu0 0.0
  %265 = vmatpush1.msra.mxu0 0.0
  %266 = vmatprep.subr.mxu0 0.0
  %267 = vmatpush1.msra.mxu0 0.0
  %268 = vmatprep.subr.mxu0 0.0
  %269 = vmatpush1.msra.mxu0 0.0
  %270 = vmatprep.mubr.f32.mxu0 0.0
  %271 = vmatmul.mubr.f32.gmra.mrb[0].mxu0 %v63
  %v272 = vpop.f32.mrb[0].mxu0
  %v273 = vadd.f32 %v54, %v272
  %v274 = vpop.f32.mrb[0].mxu0
  %275 = vmatprep.mubr.f32.mxu0 0.0
  %276 = vmatmul.mubr.f32.gmra.mrb[0].mxu0 %v66
  %v277 = vpop.f32.mrb[0].mxu0
  %v278 = vadd.f32 %v54, %v277
  %v279 = vpop.f32.mrb[0].mxu0
  %280 = vmatprep.mubr.f32.mxu0 0.0
  %281 = vmatmul.mubr.f32.gmra.mrb[0].mxu0 %v69
  %v282 = vpop.f32.mrb[0].mxu0
  %v283 = vadd.f32 %v54, %v282
  %v284 = vpop.f32.mrb[0].mxu0
  %285 = vmatprep.mubr.f32.mxu0 0.0
  %286 = vmatmul.mubr.f32.gmra.mrb[0].mxu0 %v72
  %v287 = vpop.f32.mrb[0].mxu0
  %v288 = vadd.f32 %v54, %v287
  %v289 = vpop.f32.mrb[0].mxu0
  %290 = vmatprep.mubr.f32.mxu0 0.0
  %291 = vmatmul.mubr.f32.gmra.mrb[0].mxu0 %v75
  %v292 = vpop.f32.mrb[0].mxu0
  %v293 = vadd.f32 %v54, %v292
  %v294 = vpop.f32.mrb[0].mxu0
  %295 = vmatprep.mubr.f32.mxu0 0.0
  %296 = vmatmul.mubr.f32.gmra.mrb[0].mxu0 %v78
  %v297 = vpop.f32.mrb[0].mxu0
  %v298 = vadd.f32 %v54, %v297
  %v299 = vpop.f32.mrb[0].mxu0
  %300 = vmatprep.mubr.f32.mxu0 0.0
  %301 = vmatmul.mubr.f32.gmra.mrb[0].mxu0 %v81
  %v302 = vpop.f32.mrb[0].mxu0
  %v303 = vadd.f32 %v54, %v302
  %v304 = vpop.f32.mrb[0].mxu0
  %305 = vmatprep.mubr.f32.mxu0 0.0
  %306 = vmatmul.mubr.f32.gmra.mrb[0].mxu0 %v84
  %v307 = vpop.f32.mrb[0].mxu0
  %v308 = vadd.f32 %v54, %v307
  %v309 = vpop.f32.mrb[0].mxu0
  %310 = vdwg.mxu0
  %v311 = vld [vmem:[#allocation2] sm:$0xff]
  %v312 = vld [vmem:[%s3] sm:$0xff]
  %v313 = vld [vmem:[%s3 + $0x8] sm:$0xff]
  %v314 = vld [vmem:[%s3 + $0x10] sm:$0xff]
  %v315 = vld [vmem:[%s3 + $0x18] sm:$0xff]
  %v316 = vld [vmem:[%s3 + $0x20] sm:$0xff]
  %v317 = vld [vmem:[%s3 + $0x28] sm:$0xff]
  %v318 = vld [vmem:[%s3 + $0x30] sm:$0xff]
  %v319 = vld [vmem:[%s3 + $0x38] sm:$0xff]
  %v320 = vld [vmem:[%s3 + $0x40] sm:$0xff]
  %v321 = vld [vmem:[%s3 + $0x48] sm:$0xff]
  %v322 = vld [vmem:[%s3 + $0x50] sm:$0xff]
  %v323 = vld [vmem:[%s3 + $0x58] sm:$0xff]
  %v324 = vld [vmem:[%s3 + $0x60] sm:$0xff]
  %v325 = vld [vmem:[%s3 + $0x68] sm:$0xff]
  %v326 = vld [vmem:[%s3 + $0x70] sm:$0xff]
  %v327 = vld [vmem:[%s3 + $0x78] sm:$0xff]
  %v328 = vld [vmem:[%s3 + $0x80] sm:$0xff]
  %v329 = vld [vmem:[%s3 + $0x88] sm:$0xff]
  %v330 = vld [vmem:[%s3 + $0x90] sm:$0xff]
  %v331 = vld [vmem:[%s3 + $0x98] sm:$0xff]
  %v332 = vld [vmem:[%s3 + $0xa0] sm:$0xff]
  %v333 = vld [vmem:[%s3 + $0xa8] sm:$0xff]
  %v334 = vld [vmem:[%s3 + $0xb0] sm:$0xff]
  %v335 = vld [vmem:[%s3 + $0xb8] sm:$0xff]
  %v336 = vld [vmem:[%s3 + $0xc0] sm:$0xff]
  %v337 = vld [vmem:[%s3 + $0xc8] sm:$0xff]
  %v338 = vld [vmem:[%s3 + $0xd0] sm:$0xff]
  %v339 = vld [vmem:[%s3 + $0xd8] sm:$0xff]
  %v340 = vld [vmem:[%s3 + $0xe0] sm:$0xff]
  %v341 = vld [vmem:[%s3 + $0xe8] sm:$0xff]
  %v342 = vld [vmem:[%s3 + $0xf0] sm:$0xff]
  %v343 = vld [vmem:[%s3 + $0xf8] sm:$0xff]
  %v344 = vld [vmem:[%s3 + $0x100] sm:$0xff]
  %v345 = vld [vmem:[%s3 + $0x108] sm:$0xff]
  %v346 = vld [vmem:[%s3 + $0x110] sm:$0xff]
  %v347 = vld [vmem:[%s3 + $0x118] sm:$0xff]
  %v348 = vld [vmem:[%s3 + $0x120] sm:$0xff]
  %v349 = vld [vmem:[%s3 + $0x128] sm:$0xff]
  %v350 = vld [vmem:[%s3 + $0x130] sm:$0xff]
  %v351 = vld [vmem:[%s3 + $0x138] sm:$0xff]
  %v352 = vld [vmem:[%s3 + $0x140] sm:$0xff]
  %v353 = vld [vmem:[%s3 + $0x148] sm:$0xff]
  %v354 = vld [vmem:[%s3 + $0x150] sm:$0xff]
  %v355 = vld [vmem:[%s3 + $0x158] sm:$0xff]
  %v356 = vld [vmem:[%s3 + $0x160] sm:$0xff]
  %v357 = vld [vmem:[%s3 + $0x168] sm:$0xff]
  %v358 = vld [vmem:[%s3 + $0x170] sm:$0xff]
  %v359 = vld [vmem:[%s3 + $0x178] sm:$0xff]
  %v360 = vld [vmem:[%s4] sm:$0x1]
  %361 = vmatprep.subr.mxu0 %v313
  %362 = vmatpush1.msra.mxu0 %v312
  %363 = vmatprep.subr.mxu0 %v316
  %364 = vmatpush1.msra.mxu0 %v315
  %365 = vmatprep.subr.mxu0 %v319
  %366 = vmatpush1.msra.mxu0 %v318
  %367 = vmatprep.subr.mxu0 %v322
  %368 = vmatpush1.msra.mxu0 %v321
  %369 = vmatprep.subr.mxu0 %v325
  %370 = vmatpush1.msra.mxu0 %v324
  %371 = vmatprep.subr.mxu0 %v328
  %372 = vmatpush1.msra.mxu0 %v327
  %373 = vmatprep.subr.mxu0 %v331
  %374 = vmatpush1.msra.mxu0 %v330
  %375 = vmatprep.subr.mxu0 %v334
  %376 = vmatpush1.msra.mxu0 %v333
  %377 = vmatprep.subr.mxu0 %v337
  %378 = vmatpush1.msra.mxu0 %v336
  %379 = vmatprep.subr.mxu0 %v340
  %380 = vmatpush1.msra.mxu0 %v339
  %381 = vmatprep.subr.mxu0 %v343
  %382 = vmatpush1.msra.mxu0 %v342
  %383 = vmatprep.subr.mxu0 %v346
  %384 = vmatpush1.msra.mxu0 %v345
  %385 = vmatprep.subr.mxu0 %v349
  %386 = vmatpush1.msra.mxu0 %v348
  %387 = vmatprep.subr.mxu0 %v352
  %388 = vmatpush1.msra.mxu0 %v351
  %389 = vmatprep.subr.mxu0 %v355
  %390 = vmatpush1.msra.mxu0 %v354
  %391 = vmatprep.subr.mxu0 %v358
  %392 = vmatpush1.msra.mxu0 %v357
  %393 = vmatprep.subr.mxu0 0.0
  %394 = vmatpush1.msra.mxu0 0.0
  %395 = vmatprep.subr.mxu0 0.0
  %396 = vmatpush1.msra.mxu0 0.0
  %397 = vmatprep.subr.mxu0 0.0
  %398 = vmatpush1.msra.mxu0 0.0
  %399 = vmatprep.subr.mxu0 0.0
  %400 = vmatpush1.msra.mxu0 0.0
  %401 = vmatprep.subr.mxu0 0.0
  %402 = vmatpush1.msra.mxu0 0.0
  %403 = vmatprep.subr.mxu0 0.0
  %404 = vmatpush1.msra.mxu0 0.0
  %405 = vmatprep.subr.mxu0 0.0
  %406 = vmatpush1.msra.mxu0 0.0
  %407 = vmatprep.subr.mxu0 0.0
  %408 = vmatpush1.msra.mxu0 0.0
  %409 = vmatprep.subr.mxu0 0.0
  %410 = vmatpush1.msra.mxu0 0.0
  %411 = vmatprep.subr.mxu0 0.0
  %412 = vmatpush1.msra.mxu0 0.0
  %413 = vmatprep.subr.mxu0 0.0
  %414 = vmatpush1.msra.mxu0 0.0
  %415 = vmatprep.subr.mxu0 0.0
  %416 = vmatpush1.msra.mxu0 0.0
  %417 = vmatprep.subr.mxu0 0.0
  %418 = vmatpush1.msra.mxu0 0.0
  %419 = vmatprep.subr.mxu0 0.0
  %420 = vmatpush1.msra.mxu0 0.0
  %421 = vmatprep.subr.mxu0 0.0
  %422 = vmatpush1.msra.mxu0 0.0
  %423 = vmatprep.subr.mxu0 0.0
  %424 = vmatpush1.msra.mxu0 0.0
  %425 = vmatprep.mubr.f32.mxu0 0.0
  %426 = vmatmul.mubr.f32.gmra.mrb[0].mxu0 %v311
  %v427 = vpop.f32.mrb[0].mxu0
  %v428 = vadd.f32 0.0, %v427
  %v429 = vpop.f32.mrb[0].mxu0
  %v430 = vadd.f32 0.0, %v429
  %431 = vdwg.mxu0
  %432 = vmatprep.subr.mxu0 0.0
  %433 = vmatpush1.msra.mxu0 %v314
  %434 = vmatprep.subr.mxu0 0.0
  %435 = vmatpush1.msra.mxu0 %v317
  %436 = vmatprep.subr.mxu0 0.0
  %437 = vmatpush1.msra.mxu0 %v320
  %438 = vmatprep.subr.mxu0 0.0
  %439 = vmatpush1.msra.mxu0 %v323
  %440 = vmatprep.subr.mxu0 0.0
  %441 = vmatpush1.msra.mxu0 %v326
  %442 = vmatprep.subr.mxu0 0.0
  %443 = vmatpush1.msra.mxu0 %v329
  %444 = vmatprep.subr.mxu0 0.0
  %445 = vmatpush1.msra.mxu0 %v332
  %446 = vmatprep.subr.mxu0 0.0
  %447 = vmatpush1.msra.mxu0 %v335
  %448 = vmatprep.subr.mxu0 0.0
  %449 = vmatpush1.msra.mxu0 %v338
  %450 = vmatprep.subr.mxu0 0.0
  %451 = vmatpush1.msra.mxu0 %v341
  %452 = vmatprep.subr.mxu0 0.0
  %453 = vmatpush1.msra.mxu0 %v344
  %454 = vmatprep.subr.mxu0 0.0
  %455 = vmatpush1.msra.mxu0 %v347
  %456 = vmatprep.subr.mxu0 0.0
  %457 = vmatpush1.msra.mxu0 %v350
  %458 = vmatprep.subr.mxu0 0.0
  %459 = vmatpush1.msra.mxu0 %v353
  %460 = vmatprep.subr.mxu0 0.0
  %461 = vmatpush1.msra.mxu0 %v356
  %462 = vmatprep.subr.mxu0 0.0
  %463 = vmatpush1.msra.mxu0 %v359
  %464 = vmatprep.subr.mxu0 0.0
  %465 = vmatpush1.msra.mxu0 0.0
  %466 = vmatprep.subr.mxu0 0.0
  %467 = vmatpush1.msra.mxu0 0.0
  %468 = vmatprep.subr.mxu0 0.0
  %469 = vmatpush1.msra.mxu0 0.0
  %470 = vmatprep.subr.mxu0 0.0
  %471 = vmatpush1.msra.mxu0 0.0
  %472 = vmatprep.subr.mxu0 0.0
  %473 = vmatpush1.msra.mxu0 0.0
  %474 = vmatprep.subr.mxu0 0.0
  %475 = vmatpush1.msra.mxu0 0.0
  %476 = vmatprep.subr.mxu0 0.0
  %477 = vmatpush1.msra.mxu0 0.0
  %478 = vmatprep.subr.mxu0 0.0
  %479 = vmatpush1.msra.mxu0 0.0
  %480 = vmatprep.subr.mxu0 0.0
  %481 = vmatpush1.msra.mxu0 0.0
  %482 = vmatprep.subr.mxu0 0.0
  %483 = vmatpush1.msra.mxu0 0.0
  %484 = vmatprep.subr.mxu0 0.0
  %485 = vmatpush1.msra.mxu0 0.0
  %486 = vmatprep.subr.mxu0 0.0
  %487 = vmatpush1.msra.mxu0 0.0
  %488 = vmatprep.subr.mxu0 0.0
  %489 = vmatpush1.msra.mxu0 0.0
  %490 = vmatprep.subr.mxu0 0.0
  %491 = vmatpush1.msra.mxu0 0.0
  %492 = vmatprep.subr.mxu0 0.0
  %493 = vmatpush1.msra.mxu0 0.0
  %494 = vmatprep.subr.mxu0 0.0
  %495 = vmatpush1.msra.mxu0 0.0
  %496 = vmatprep.mubr.f32.mxu0 0.0
  %497 = vmatmul.mubr.f32.gmra.mrb[0].mxu0 %v311
  %v498 = vpop.f32.mrb[0].mxu0
  %v499 = vadd.f32 0.0, %v498
  %v500 = vpop.f32.mrb[0].mxu0
  %501 = vdwg.mxu0
  %v503 = vrot.slane %v428, 1
  %v504 = vrot.slane %v428, 2
  %v505 = vrot.slane %v428, 3
  %v506 = vrot.slane %v428, 4
  %v507 = vrot.slane %v428, 5
  %v508 = vrot.slane %v428, 6
  %v509 = vrot.slane %v428, 7
  %v518 = vadd.f32 %v160, %v428
  %v519 = vadd.f32 %v166, %v503
  %v520 = vadd.f32 %v172, %v504
  %v521 = vadd.f32 %v178, %v505
  %v522 = vadd.f32 %v184, %v506
  %v523 = vadd.f32 %v190, %v507
  %v524 = vadd.f32 %v196, %v508
  %v525 = vadd.f32 %v202, %v509
  %v526 = vxor.u32 %v518, 2147483648
  %v527 = vxor.u32 %v519, 2147483648
  %v528 = vxor.u32 %v520, 2147483648
  %v529 = vxor.u32 %v521, 2147483648
  %v530 = vxor.u32 %v522, 2147483648
  %v531 = vxor.u32 %v523, 2147483648
  %v532 = vxor.u32 %v524, 2147483648
  %v533 = vxor.u32 %v525, 2147483648
  %v534 = vmul.f32 %v526, 1.442695
  %v535 = vpow.pop %v534
  %v536 = vmul.f32 %v527, 1.442695
  %v537 = vpow.pop %v536
  %v538 = vmul.f32 %v528, 1.442695
  %v539 = vpow.pop %v538
  %v540 = vmul.f32 %v529, 1.442695
  %v541 = vpow.pop %v540
  %v542 = vmul.f32 %v530, 1.442695
  %v543 = vpow.pop %v542
  %v544 = vmul.f32 %v531, 1.442695
  %v545 = vpow.pop %v544
  %v546 = vmul.f32 %v532, 1.442695
  %v547 = vpow.pop %v546
  %v548 = vmul.f32 %v533, 1.442695
  %v549 = vpow.pop %v548
  %v550 = vadd.f32 %v535, 1.0
  %v551 = vadd.f32 %v537, 1.0
  %v552 = vadd.f32 %v539, 1.0
  %v553 = vadd.f32 %v541, 1.0
  %v554 = vadd.f32 %v543, 1.0
  %v555 = vadd.f32 %v545, 1.0
  %v556 = vadd.f32 %v547, 1.0
  %v557 = vadd.f32 %v549, 1.0
  %v558 = vrcp.pop %v550
  %v559 = vmul.f32 1.0, %v558
  %v560 = vrcp.pop %v551
  %v561 = vmul.f32 1.0, %v560
  %v562 = vrcp.pop %v552
  %v563 = vmul.f32 1.0, %v562
  %v564 = vrcp.pop %v553
  %v565 = vmul.f32 1.0, %v564
  %v566 = vrcp.pop %v554
  %v567 = vmul.f32 1.0, %v566
  %v568 = vrcp.pop %v555
  %v569 = vmul.f32 1.0, %v568
  %v570 = vrcp.pop %v556
  %v571 = vmul.f32 1.0, %v570
  %v572 = vrcp.pop %v557
  %v573 = vmul.f32 1.0, %v572
  %v575 = vrot.slane %v430, 1
  %v576 = vrot.slane %v430, 2
  %v577 = vrot.slane %v430, 3
  %v578 = vrot.slane %v430, 4
  %v579 = vrot.slane %v430, 5
  %v580 = vrot.slane %v430, 6
  %v581 = vrot.slane %v430, 7
  %v590 = vadd.f32 %v162, %v430
  %v591 = vadd.f32 %v168, %v575
  %v592 = vadd.f32 %v174, %v576
  %v593 = vadd.f32 %v180, %v577
  %v594 = vadd.f32 %v186, %v578
  %v595 = vadd.f32 %v192, %v579
  %v596 = vadd.f32 %v198, %v580
  %v597 = vadd.f32 %v204, %v581
  %v598 = vxor.u32 %v590, 2147483648
  %v599 = vxor.u32 %v591, 2147483648
  %v600 = vxor.u32 %v592, 2147483648
  %v601 = vxor.u32 %v593, 2147483648
  %v602 = vxor.u32 %v594, 2147483648
  %v603 = vxor.u32 %v595, 2147483648
  %v604 = vxor.u32 %v596, 2147483648
  %v605 = vxor.u32 %v597, 2147483648
  %v606 = vmul.f32 %v598, 1.442695
  %v607 = vpow.pop %v606
  %v608 = vmul.f32 %v599, 1.442695
  %v609 = vpow.pop %v608
  %v610 = vmul.f32 %v600, 1.442695
  %v611 = vpow.pop %v610
  %v612 = vmul.f32 %v601, 1.442695
  %v613 = vpow.pop %v612
  %v614 = vmul.f32 %v602, 1.442695
  %v615 = vpow.pop %v614
  %v616 = vmul.f32 %v603, 1.442695
  %v617 = vpow.pop %v616
  %v618 = vmul.f32 %v604, 1.442695
  %v619 = vpow.pop %v618
  %v620 = vmul.f32 %v605, 1.442695
  %v621 = vpow.pop %v620
  %v622 = vadd.f32 %v607, 1.0
  %v623 = vadd.f32 %v609, 1.0
  %v624 = vadd.f32 %v611, 1.0
  %v625 = vadd.f32 %v613, 1.0
  %v626 = vadd.f32 %v615, 1.0
  %v627 = vadd.f32 %v617, 1.0
  %v628 = vadd.f32 %v619, 1.0
  %v629 = vadd.f32 %v621, 1.0
  %v630 = vrcp.pop %v622
  %v631 = vmul.f32 1.0, %v630
  %v632 = vrcp.pop %v623
  %v633 = vmul.f32 1.0, %v632
  %v634 = vrcp.pop %v624
  %v635 = vmul.f32 1.0, %v634
  %v636 = vrcp.pop %v625
  %v637 = vmul.f32 1.0, %v636
  %v638 = vrcp.pop %v626
  %v639 = vmul.f32 1.0, %v638
  %v640 = vrcp.pop %v627
  %v641 = vmul.f32 1.0, %v640
  %v642 = vrcp.pop %v628
  %v643 = vmul.f32 1.0, %v642
  %v644 = vrcp.pop %v629
  %v645 = vmul.f32 1.0, %v644
  %v647 = vlaneseq
  %v648 = vshrl.u32 %v647, 7
  %v649 = vsub.s32 0, %v648
  %v650 = vrot.slane %v360, %v649
  %v652 = vadd.f32 %v499, %v650
  %v654 = vrot.slane %v652, 1
  %v655 = vrot.slane %v652, 2
  %v656 = vrot.slane %v652, 3
  %v657 = vrot.slane %v652, 4
  %v658 = vrot.slane %v652, 5
  %v659 = vrot.slane %v652, 6
  %v660 = vrot.slane %v652, 7
  %v669 = vmul.f32 %v559, %v652
  %v670 = vmul.f32 %v561, %v654
  %v671 = vmul.f32 %v563, %v655
  %v672 = vmul.f32 %v565, %v656
  %v673 = vmul.f32 %v567, %v657
  %v674 = vmul.f32 %v569, %v658
  %v675 = vmul.f32 %v571, %v659
  %v676 = vmul.f32 %v573, %v660
  %v677 = vadd.f32 %v273, %v669
  %v678 = vadd.f32 %v278, %v670
  %v679 = vadd.f32 %v283, %v671
  %v680 = vadd.f32 %v288, %v672
  %v681 = vadd.f32 %v293, %v673
  %v682 = vadd.f32 %v298, %v674
  %v683 = vadd.f32 %v303, %v675
  %v684 = vadd.f32 %v308, %v676
  %v685 = vtanh.pop %v677
  %v686 = vtanh.pop %v678
  %v687 = vtanh.pop %v679
  %v688 = vtanh.pop %v680
  %v689 = vtanh.pop %v681
  %v690 = vtanh.pop %v682
  %v691 = vtanh.pop %v683
  %v692 = vtanh.pop %v684
  %v693 = vsub.f32 1.0, %v631
  %v694 = vsub.f32 1.0, %v633
  %v695 = vsub.f32 1.0, %v635
  %v696 = vsub.f32 1.0, %v637
  %v697 = vsub.f32 1.0, %v639
  %v698 = vsub.f32 1.0, %v641
  %v699 = vsub.f32 1.0, %v643
  %v700 = vsub.f32 1.0, %v645
  %v701 = vmul.f32 %v693, %v685
  %v702 = vmul.f32 %v694, %v686
  %v703 = vmul.f32 %v695, %v687
  %v704 = vmul.f32 %v696, %v688
  %v705 = vmul.f32 %v697, %v689
  %v706 = vmul.f32 %v698, %v690
  %v707 = vmul.f32 %v699, %v691
  %v708 = vmul.f32 %v700, %v692
  %v710 = vrot.slane %v311, 1
  %v711 = vrot.slane %v311, 2
  %v712 = vrot.slane %v311, 3
  %v713 = vrot.slane %v311, 4
  %v714 = vrot.slane %v311, 5
  %v715 = vrot.slane %v311, 6
  %v716 = vrot.slane %v311, 7
  %v725 = vmul.f32 %v631, %v311
  %v726 = vmul.f32 %v633, %v710
  %v727 = vmul.f32 %v635, %v711
  %v728 = vmul.f32 %v637, %v712
  %v729 = vmul.f32 %v639, %v713
  %v730 = vmul.f32 %v641, %v714
  %v731 = vmul.f32 %v643, %v715
  %v732 = vmul.f32 %v645, %v716
  %v733 = vadd.f32 %v701, %v725
  %v734 = vadd.f32 %v702, %v726
  %v735 = vadd.f32 %v703, %v727
  %v736 = vadd.f32 %v704, %v728
  %v737 = vadd.f32 %v705, %v729
  %v738 = vadd.f32 %v706, %v730
  %v739 = vadd.f32 %v707, %v731
  %v740 = vadd.f32 %v708, %v732
  %v749 = vrot.slane %v734, 7
  %vm750 = vcmask 1041409
  %v751 = vsel %vm750, %v749, %v733
  %v752 = vrot.slane %v735, 6
  %vm753 = vcmask 1042434
  %v754 = vsel %vm753, %v752, %v751
  %v755 = vrot.slane %v736, 5
  %vm756 = vcmask 1043459
  %v757 = vsel %vm756, %v755, %v754
  %v758 = vrot.slane %v737, 4
  %vm759 = vcmask 1044484
  %v760 = vsel %vm759, %v758, %v757
  %v761 = vrot.slane %v738, 3
  %vm762 = vcmask 1045509
  %v763 = vsel %vm762, %v761, %v760
  %v764 = vrot.slane %v739, 2
  %vm765 = vcmask 1046534
  %v766 = vsel %vm765, %v764, %v763
  %v767 = vrot.slane %v740, 1
  %vm768 = vcmask 1047559
  %v769 = vsel %vm768, %v767, %v766
  %771 = vmatprep.subr.mxu0 %v313
  %772 = vmatpush1.msra.mxu0 %v312
  %773 = vmatprep.subr.mxu0 %v316
  %774 = vmatpush1.msra.mxu0 %v315
  %775 = vmatprep.subr.mxu0 %v319
  %776 = vmatpush1.msra.mxu0 %v318
  %777 = vmatprep.subr.mxu0 %v322
  %778 = vmatpush1.msra.mxu0 %v321
  %779 = vmatprep.subr.mxu0 %v325
  %780 = vmatpush1.msra.mxu0 %v324
  %781 = vmatprep.subr.mxu0 %v328
  %782 = vmatpush1.msra.mxu0 %v327
  %783 = vmatprep.subr.mxu0 %v331
  %784 = vmatpush1.msra.mxu0 %v330
  %785 = vmatprep.subr.mxu0 %v334
  %786 = vmatpush1.msra.mxu0 %v333
  %787 = vmatprep.subr.mxu0 %v337
  %788 = vmatpush1.msra.mxu0 %v336
  %789 = vmatprep.subr.mxu0 %v340
  %790 = vmatpush1.msra.mxu0 %v339
  %791 = vmatprep.subr.mxu0 %v343
  %792 = vmatpush1.msra.mxu0 %v342
  %793 = vmatprep.subr.mxu0 %v346
  %794 = vmatpush1.msra.mxu0 %v345
  %795 = vmatprep.subr.mxu0 %v349
  %796 = vmatpush1.msra.mxu0 %v348
  %797 = vmatprep.subr.mxu0 %v352
  %798 = vmatpush1.msra.mxu0 %v351
  %799 = vmatprep.subr.mxu0 %v355
  %800 = vmatpush1.msra.mxu0 %v354
  %801 = vmatprep.subr.mxu0 %v358
  %802 = vmatpush1.msra.mxu0 %v357
  %803 = vmatprep.subr.mxu0 0.0
  %804 = vmatpush1.msra.mxu0 0.0
  %805 = vmatprep.subr.mxu0 0.0
  %806 = vmatpush1.msra.mxu0 0.0
  %807 = vmatprep.subr.mxu0 0.0
  %808 = vmatpush1.msra.mxu0 0.0
  %809 = vmatprep.subr.mxu0 0.0
  %810 = vmatpush1.msra.mxu0 0.0
  %811 = vmatprep.subr.mxu0 0.0
  %812 = vmatpush1.msra.mxu0 0.0
  %813 = vmatprep.subr.mxu0 0.0
  %814 = vmatpush1.msra.mxu0 0.0
  %815 = vmatprep.subr.mxu0 0.0
  %816 = vmatpush1.msra.mxu0 0.0
  %817 = vmatprep.subr.mxu0 0.0
  %818 = vmatpush1.msra.mxu0 0.0
  %819 = vmatprep.subr.mxu0 0.0
  %820 = vmatpush1.msra.mxu0 0.0
  %821 = vmatprep.subr.mxu0 0.0
  %822 = vmatpush1.msra.mxu0 0.0
  %823 = vmatprep.subr.mxu0 0.0
  %824 = vmatpush1.msra.mxu0 0.0
  %825 = vmatprep.subr.mxu0 0.0
  %826 = vmatpush1.msra.mxu0 0.0
  %827 = vmatprep.subr.mxu0 0.0
  %828 = vmatpush1.msra.mxu0 0.0
  %829 = vmatprep.subr.mxu0 0.0
  %830 = vmatpush1.msra.mxu0 0.0
  %831 = vmatprep.subr.mxu0 0.0
  %832 = vmatpush1.msra.mxu0 0.0
  %833 = vmatprep.subr.mxu0 0.0
  %834 = vmatpush1.msra.mxu0 0.0
  %835 = vmatprep.mubr.f32.mxu0 0.0
  %836 = vmatmul.mubr.f32.gmra.mrb[0].mxu0 %v769
  %v837 = vpop.f32.mrb[0].mxu0
  %v838 = vadd.f32 0.0, %v837
  %v839 = vpop.f32.mrb[0].mxu0
  %v840 = vadd.f32 0.0, %v839
  %841 = vdwg.mxu0
  %842 = vmatprep.subr.mxu0 0.0
  %843 = vmatpush1.msra.mxu0 %v314
  %844 = vmatprep.subr.mxu0 0.0
  %845 = vmatpush1.msra.mxu0 %v317
  %846 = vmatprep.subr.mxu0 0.0
  %847 = vmatpush1.msra.mxu0 %v320
  %848 = vmatprep.subr.mxu0 0.0
  %849 = vmatpush1.msra.mxu0 %v323
  %850 = vmatprep.subr.mxu0 0.0
  %851 = vmatpush1.msra.mxu0 %v326
  %852 = vmatprep.subr.mxu0 0.0
  %853 = vmatpush1.msra.mxu0 %v329
  %854 = vmatprep.subr.mxu0 0.0
  %855 = vmatpush1.msra.mxu0 %v332
  %856 = vmatprep.subr.mxu0 0.0
  %857 = vmatpush1.msra.mxu0 %v335
  %858 = vmatprep.subr.mxu0 0.0
  %859 = vmatpush1.msra.mxu0 %v338
  %860 = vmatprep.subr.mxu0 0.0
  %861 = vmatpush1.msra.mxu0 %v341
  %862 = vmatprep.subr.mxu0 0.0
  %863 = vmatpush1.msra.mxu0 %v344
  %864 = vmatprep.subr.mxu0 0.0
  %865 = vmatpush1.msra.mxu0 %v347
  %866 = vmatprep.subr.mxu0 0.0
  %867 = vmatpush1.msra.mxu0 %v350
  %868 = vmatprep.subr.mxu0 0.0
  %869 = vmatpush1.msra.mxu0 %v353
  %870 = vmatprep.subr.mxu0 0.0
  %871 = vmatpush1.msra.mxu0 %v356
  %872 = vmatprep.subr.mxu0 0.0
  %873 = vmatpush1.msra.mxu0 %v359
  %874 = vmatprep.subr.mxu0 0.0
  %875 = vmatpush1.msra.mxu0 0.0
  %876 = vmatprep.subr.mxu0 0.0
  %877 = vmatpush1.msra.mxu0 0.0
  %878 = vmatprep.subr.mxu0 0.0
  %879 = vmatpush1.msra.mxu0 0.0
  %880 = vmatprep.subr.mxu0 0.0
  %881 = vmatpush1.msra.mxu0 0.0
  %882 = vmatprep.subr.mxu0 0.0
  %883 = vmatpush1.msra.mxu0 0.0
  %884 = vmatprep.subr.mxu0 0.0
  %885 = vmatpush1.msra.mxu0 0.0
  %886 = vmatprep.subr.mxu0 0.0
  %887 = vmatpush1.msra.mxu0 0.0
  %888 = vmatprep.subr.mxu0 0.0
  %889 = vmatpush1.msra.mxu0 0.0
  %890 = vmatprep.subr.mxu0 0.0
  %891 = vmatpush1.msra.mxu0 0.0
  %892 = vmatprep.subr.mxu0 0.0
  %893 = vmatpush1.msra.mxu0 0.0
  %894 = vmatprep.subr.mxu0 0.0
  %895 = vmatpush1.msra.mxu0 0.0
  %896 = vmatprep.subr.mxu0 0.0
  %897 = vmatpush1.msra.mxu0 0.0
  %898 = vmatprep.subr.mxu0 0.0
  %899 = vmatpush1.msra.mxu0 0.0
  %900 = vmatprep.subr.mxu0 0.0
  %901 = vmatpush1.msra.mxu0 0.0
  %902 = vmatprep.subr.mxu0 0.0
  %903 = vmatpush1.msra.mxu0 0.0
  %904 = vmatprep.subr.mxu0 0.0
  %905 = vmatpush1.msra.mxu0 0.0
  %906 = vmatprep.mubr.f32.mxu0 0.0
  %907 = vmatmul.mubr.f32.gmra.mrb[0].mxu0 %v769
  %v908 = vpop.f32.mrb[0].mxu0
  %v909 = vadd.f32 0.0, %v908
  %v910 = vpop.f32.mrb[0].mxu0
  %911 = vdwg.mxu0
  %v913 = vrot.slane %v838, 7
  %v914 = vrot.slane %v838, 1
  %v915 = vrot.slane %v838, 2
  %v916 = vrot.slane %v838, 3
  %v917 = vrot.slane %v838, 4
  %v918 = vrot.slane %v838, 5
  %v919 = vrot.slane %v838, 6
  %v928 = vadd.f32 %v160, %v913
  %v929 = vadd.f32 %v166, %v838
  %v930 = vadd.f32 %v172, %v914
  %v931 = vadd.f32 %v178, %v915
  %v932 = vadd.f32 %v184, %v916
  %v933 = vadd.f32 %v190, %v917
  %v934 = vadd.f32 %v196, %v918
  %v935 = vadd.f32 %v202, %v919
  %v936 = vxor.u32 %v928, 2147483648
  %v937 = vxor.u32 %v929, 2147483648
  %v938 = vxor.u32 %v930, 2147483648
  %v939 = vxor.u32 %v931, 2147483648
  %v940 = vxor.u32 %v932, 2147483648
  %v941 = vxor.u32 %v933, 2147483648
  %v942 = vxor.u32 %v934, 2147483648
  %v943 = vxor.u32 %v935, 2147483648
  %v944 = vmul.f32 %v936, 1.442695
  %v945 = vpow.pop %v944
  %v946 = vmul.f32 %v937, 1.442695
  %v947 = vpow.pop %v946
  %v948 = vmul.f32 %v938, 1.442695
  %v949 = vpow.pop %v948
  %v950 = vmul.f32 %v939, 1.442695
  %v951 = vpow.pop %v950
  %v952 = vmul.f32 %v940, 1.442695
  %v953 = vpow.pop %v952
  %v954 = vmul.f32 %v941, 1.442695
  %v955 = vpow.pop %v954
  %v956 = vmul.f32 %v942, 1.442695
  %v957 = vpow.pop %v956
  %v958 = vmul.f32 %v943, 1.442695
  %v959 = vpow.pop %v958
  %v960 = vadd.f32 %v945, 1.0
  %v961 = vadd.f32 %v947, 1.0
  %v962 = vadd.f32 %v949, 1.0
  %v963 = vadd.f32 %v951, 1.0
  %v964 = vadd.f32 %v953, 1.0
  %v965 = vadd.f32 %v955, 1.0
  %v966 = vadd.f32 %v957, 1.0
  %v967 = vadd.f32 %v959, 1.0
  %v968 = vrcp.pop %v960
  %v969 = vmul.f32 1.0, %v968
  %v970 = vrcp.pop %v961
  %v971 = vmul.f32 1.0, %v970
  %v972 = vrcp.pop %v962
  %v973 = vmul.f32 1.0, %v972
  %v974 = vrcp.pop %v963
  %v975 = vmul.f32 1.0, %v974
  %v976 = vrcp.pop %v964
  %v977 = vmul.f32 1.0, %v976
  %v978 = vrcp.pop %v965
  %v979 = vmul.f32 1.0, %v978
  %v980 = vrcp.pop %v966
  %v981 = vmul.f32 1.0, %v980
  %v982 = vrcp.pop %v967
  %v983 = vmul.f32 1.0, %v982
  %v985 = vrot.slane %v840, 7
  %v986 = vrot.slane %v840, 1
  %v987 = vrot.slane %v840, 2
  %v988 = vrot.slane %v840, 3
  %v989 = vrot.slane %v840, 4
  %v990 = vrot.slane %v840, 5
  %v991 = vrot.slane %v840, 6
  %v1000 = vadd.f32 %v162, %v985
  %v1001 = vadd.f32 %v168, %v840
  %v1002 = vadd.f32 %v174, %v986
  %v1003 = vadd.f32 %v180, %v987
  %v1004 = vadd.f32 %v186, %v988
  %v1005 = vadd.f32 %v192, %v989
  %v1006 = vadd.f32 %v198, %v990
  %v1007 = vadd.f32 %v204, %v991
  %v1008 = vxor.u32 %v1000, 2147483648
  %v1009 = vxor.u32 %v1001, 2147483648
  %v1010 = vxor.u32 %v1002, 2147483648
  %v1011 = vxor.u32 %v1003, 2147483648
  %v1012 = vxor.u32 %v1004, 2147483648
  %v1013 = vxor.u32 %v1005, 2147483648
  %v1014 = vxor.u32 %v1006, 2147483648
  %v1015 = vxor.u32 %v1007, 2147483648
  %v1016 = vmul.f32 %v1008, 1.442695
  %v1017 = vpow.pop %v1016
  %v1018 = vmul.f32 %v1009, 1.442695
  %v1019 = vpow.pop %v1018
  %v1020 = vmul.f32 %v1010, 1.442695
  %v1021 = vpow.pop %v1020
  %v1022 = vmul.f32 %v1011, 1.442695
  %v1023 = vpow.pop %v1022
  %v1024 = vmul.f32 %v1012, 1.442695
  %v1025 = vpow.pop %v1024
  %v1026 = vmul.f32 %v1013, 1.442695
  %v1027 = vpow.pop %v1026
  %v1028 = vmul.f32 %v1014, 1.442695
  %v1029 = vpow.pop %v1028
  %v1030 = vmul.f32 %v1015, 1.442695
  %v1031 = vpow.pop %v1030
  %v1032 = vadd.f32 %v1017, 1.0
  %v1033 = vadd.f32 %v1019, 1.0
  %v1034 = vadd.f32 %v1021, 1.0
  %v1035 = vadd.f32 %v1023, 1.0
  %v1036 = vadd.f32 %v1025, 1.0
  %v1037 = vadd.f32 %v1027, 1.0
  %v1038 = vadd.f32 %v1029, 1.0
  %v1039 = vadd.f32 %v1031, 1.0
  %v1040 = vrcp.pop %v1032
  %v1041 = vmul.f32 1.0, %v1040
  %v1042 = vrcp.pop %v1033
  %v1043 = vmul.f32 1.0, %v1042
  %v1044 = vrcp.pop %v1034
  %v1045 = vmul.f32 1.0, %v1044
  %v1046 = vrcp.pop %v1035
  %v1047 = vmul.f32 1.0, %v1046
  %v1048 = vrcp.pop %v1036
  %v1049 = vmul.f32 1.0, %v1048
  %v1050 = vrcp.pop %v1037
  %v1051 = vmul.f32 1.0, %v1050
  %v1052 = vrcp.pop %v1038
  %v1053 = vmul.f32 1.0, %v1052
  %v1054 = vrcp.pop %v1039
  %v1055 = vmul.f32 1.0, %v1054
  %v1056 = vadd.f32 %v909, %v650
  %v1058 = vrot.slane %v1056, 7
  %v1059 = vrot.slane %v1056, 1
  %v1060 = vrot.slane %v1056, 2
  %v1061 = vrot.slane %v1056, 3
  %v1062 = vrot.slane %v1056, 4
  %v1063 = vrot.slane %v1056, 5
  %v1064 = vrot.slane %v1056, 6
  %v1073 = vmul.f32 %v969, %v1058
  %v1074 = vmul.f32 %v971, %v1056
  %v1075 = vmul.f32 %v973, %v1059
  %v1076 = vmul.f32 %v975, %v1060
  %v1077 = vmul.f32 %v977, %v1061
  %v1078 = vmul.f32 %v979, %v1062
  %v1079 = vmul.f32 %v981, %v1063
  %v1080 = vmul.f32 %v983, %v1064
  %v1081 = vadd.f32 %v273, %v1073
  %v1082 = vadd.f32 %v278, %v1074
  %v1083 = vadd.f32 %v283, %v1075
  %v1084 = vadd.f32 %v288, %v1076
  %v1085 = vadd.f32 %v293, %v1077
  %v1086 = vadd.f32 %v298, %v1078
  %v1087 = vadd.f32 %v303, %v1079
  %v1088 = vadd.f32 %v308, %v1080
  %v1089 = vtanh.pop %v1081
  %v1090 = vtanh.pop %v1082
  %v1091 = vtanh.pop %v1083
  %v1092 = vtanh.pop %v1084
  %v1093 = vtanh.pop %v1085
  %v1094 = vtanh.pop %v1086
  %v1095 = vtanh.pop %v1087
  %v1096 = vtanh.pop %v1088
  %v1097 = vsub.f32 1.0, %v1041
  %v1098 = vsub.f32 1.0, %v1043
  %v1099 = vsub.f32 1.0, %v1045
  %v1100 = vsub.f32 1.0, %v1047
  %v1101 = vsub.f32 1.0, %v1049
  %v1102 = vsub.f32 1.0, %v1051
  %v1103 = vsub.f32 1.0, %v1053
  %v1104 = vsub.f32 1.0, %v1055
  %v1105 = vmul.f32 %v1097, %v1089
  %v1106 = vmul.f32 %v1098, %v1090
  %v1107 = vmul.f32 %v1099, %v1091
  %v1108 = vmul.f32 %v1100, %v1092
  %v1109 = vmul.f32 %v1101, %v1093
  %v1110 = vmul.f32 %v1102, %v1094
  %v1111 = vmul.f32 %v1103, %v1095
  %v1112 = vmul.f32 %v1104, %v1096
  %v1113 = vrot.slane %v733, 7
  %v1114 = vrot.slane %v735, 7
  %v1115 = vrot.slane %v736, 7
  %v1116 = vrot.slane %v737, 7
  %v1117 = vrot.slane %v738, 7
  %v1118 = vrot.slane %v739, 7
  %v1119 = vrot.slane %v740, 7
  %v1128 = vmul.f32 %v1041, %v1113
  %v1129 = vmul.f32 %v1043, %v749
  %v1130 = vmul.f32 %v1045, %v1114
  %v1131 = vmul.f32 %v1047, %v1115
  %v1132 = vmul.f32 %v1049, %v1116
  %v1133 = vmul.f32 %v1051, %v1117
  %v1134 = vmul.f32 %v1053, %v1118
  %v1135 = vmul.f32 %v1055, %v1119
  %v1136 = vadd.f32 %v1105, %v1128
  %v1137 = vadd.f32 %v1106, %v1129
  %v1138 = vadd.f32 %v1107, %v1130
  %v1139 = vadd.f32 %v1108, %v1131
  %v1140 = vadd.f32 %v1109, %v1132
  %v1141 = vadd.f32 %v1110, %v1133
  %v1142 = vadd.f32 %v1111, %v1134
  %v1143 = vadd.f32 %v1112, %v1135
  %v1152 = vrot.slane %v1136, 1
  %v1153 = vsel %vm750, %v1137, %v1152
  %v1154 = vrot.slane %v1138, 7
  %v1155 = vsel %vm753, %v1154, %v1153
  %v1156 = vrot.slane %v1139, 6
  %v1157 = vsel %vm756, %v1156, %v1155
  %v1158 = vrot.slane %v1140, 5
  %v1159 = vsel %vm759, %v1158, %v1157
  %v1160 = vrot.slane %v1141, 4
  %v1161 = vsel %vm762, %v1160, %v1159
  %v1162 = vrot.slane %v1142, 3
  %v1163 = vsel %vm765, %v1162, %v1161
  %v1164 = vrot.slane %v1143, 2
  %v1165 = vsel %vm768, %v1164, %v1163
  %1167 = vmatprep.subr.mxu0 %v313
  %1168 = vmatpush1.msra.mxu0 %v312
  %1169 = vmatprep.subr.mxu0 %v316
  %1170 = vmatpush1.msra.mxu0 %v315
  %1171 = vmatprep.subr.mxu0 %v319
  %1172 = vmatpush1.msra.mxu0 %v318
  %1173 = vmatprep.subr.mxu0 %v322
  %1174 = vmatpush1.msra.mxu0 %v321
  %1175 = vmatprep.subr.mxu0 %v325
  %1176 = vmatpush1.msra.mxu0 %v324
  %1177 = vmatprep.subr.mxu0 %v328
  %1178 = vmatpush1.msra.mxu0 %v327
  %1179 = vmatprep.subr.mxu0 %v331
  %1180 = vmatpush1.msra.mxu0 %v330
  %1181 = vmatprep.subr.mxu0 %v334
  %1182 = vmatpush1.msra.mxu0 %v333
  %1183 = vmatprep.subr.mxu0 %v337
  %1184 = vmatpush1.msra.mxu0 %v336
  %1185 = vmatprep.subr.mxu0 %v340
  %1186 = vmatpush1.msra.mxu0 %v339
  %1187 = vmatprep.subr.mxu0 %v343
  %1188 = vmatpush1.msra.mxu0 %v342
  %1189 = vmatprep.subr.mxu0 %v346
  %1190 = vmatpush1.msra.mxu0 %v345
  %1191 = vmatprep.subr.mxu0 %v349
  %1192 = vmatpush1.msra.mxu0 %v348
  %1193 = vmatprep.subr.mxu0 %v352
  %1194 = vmatpush1.msra.mxu0 %v351
  %1195 = vmatprep.subr.mxu0 %v355
  %1196 = vmatpush1.msra.mxu0 %v354
  %1197 = vmatprep.subr.mxu0 %v358
  %1198 = vmatpush1.msra.mxu0 %v357
  %1199 = vmatprep.subr.mxu0 0.0
  %1200 = vmatpush1.msra.mxu0 0.0
  %1201 = vmatprep.subr.mxu0 0.0
  %1202 = vmatpush1.msra.mxu0 0.0
  %1203 = vmatprep.subr.mxu0 0.0
  %1204 = vmatpush1.msra.mxu0 0.0
  %1205 = vmatprep.subr.mxu0 0.0
  %1206 = vmatpush1.msra.mxu0 0.0
  %1207 = vmatprep.subr.mxu0 0.0
  %1208 = vmatpush1.msra.mxu0 0.0
  %1209 = vmatprep.subr.mxu0 0.0
  %1210 = vmatpush1.msra.mxu0 0.0
  %1211 = vmatprep.subr.mxu0 0.0
  %1212 = vmatpush1.msra.mxu0 0.0
  %1213 = vmatprep.subr.mxu0 0.0
  %1214 = vmatpush1.msra.mxu0 0.0
  %1215 = vmatprep.subr.mxu0 0.0
  %1216 = vmatpush1.msra.mxu0 0.0
  %1217 = vmatprep.subr.mxu0 0.0
  %1218 = vmatpush1.msra.mxu0 0.0
  %1219 = vmatprep.subr.mxu0 0.0
  %1220 = vmatpush1.msra.mxu0 0.0
  %1221 = vmatprep.subr.mxu0 0.0
  %1222 = vmatpush1.msra.mxu0 0.0
  %1223 = vmatprep.subr.mxu0 0.0
  %1224 = vmatpush1.msra.mxu0 0.0
  %1225 = vmatprep.subr.mxu0 0.0
  %1226 = vmatpush1.msra.mxu0 0.0
  %1227 = vmatprep.subr.mxu0 0.0
  %1228 = vmatpush1.msra.mxu0 0.0
  %1229 = vmatprep.subr.mxu0 0.0
  %1230 = vmatpush1.msra.mxu0 0.0
  %1231 = vmatprep.mubr.f32.mxu0 0.0
  %1232 = vmatmul.mubr.f32.gmra.mrb[0].mxu0 %v1165
  %v1233 = vpop.f32.mrb[0].mxu0
  %v1234 = vadd.f32 0.0, %v1233
  %v1235 = vpop.f32.mrb[0].mxu0
  %v1236 = vadd.f32 0.0, %v1235
  %1237 = vdwg.mxu0
  %1238 = vmatprep.subr.mxu0 0.0
  %1239 = vmatpush1.msra.mxu0 %v314
  %1240 = vmatprep.subr.mxu0 0.0
  %1241 = vmatpush1.msra.mxu0 %v317
  %1242 = vmatprep.subr.mxu0 0.0
  %1243 = vmatpush1.msra.mxu0 %v320
  %1244 = vmatprep.subr.mxu0 0.0
  %1245 = vmatpush1.msra.mxu0 %v323
  %1246 = vmatprep.subr.mxu0 0.0
  %1247 = vmatpush1.msra.mxu0 %v326
  %1248 = vmatprep.subr.mxu0 0.0
  %1249 = vmatpush1.msra.mxu0 %v329
  %1250 = vmatprep.subr.mxu0 0.0
  %1251 = vmatpush1.msra.mxu0 %v332
  %1252 = vmatprep.subr.mxu0 0.0
  %1253 = vmatpush1.msra.mxu0 %v335
  %1254 = vmatprep.subr.mxu0 0.0
  %1255 = vmatpush1.msra.mxu0 %v338
  %1256 = vmatprep.subr.mxu0 0.0
  %1257 = vmatpush1.msra.mxu0 %v341
  %1258 = vmatprep.subr.mxu0 0.0
  %1259 = vmatpush1.msra.mxu0 %v344
  %1260 = vmatprep.subr.mxu0 0.0
  %1261 = vmatpush1.msra.mxu0 %v347
  %1262 = vmatprep.subr.mxu0 0.0
  %1263 = vmatpush1.msra.mxu0 %v350
  %1264 = vmatprep.subr.mxu0 0.0
  %1265 = vmatpush1.msra.mxu0 %v353
  %1266 = vmatprep.subr.mxu0 0.0
  %1267 = vmatpush1.msra.mxu0 %v356
  %1268 = vmatprep.subr.mxu0 0.0
  %1269 = vmatpush1.msra.mxu0 %v359
  %1270 = vmatprep.subr.mxu0 0.0
  %1271 = vmatpush1.msra.mxu0 0.0
  %1272 = vmatprep.subr.mxu0 0.0
  %1273 = vmatpush1.msra.mxu0 0.0
  %1274 = vmatprep.subr.mxu0 0.0
  %1275 = vmatpush1.msra.mxu0 0.0
  %1276 = vmatprep.subr.mxu0 0.0
  %1277 = vmatpush1.msra.mxu0 0.0
  %1278 = vmatprep.subr.mxu0 0.0
  %1279 = vmatpush1.msra.mxu0 0.0
  %1280 = vmatprep.subr.mxu0 0.0
  %1281 = vmatpush1.msra.mxu0 0.0
  %1282 = vmatprep.subr.mxu0 0.0
  %1283 = vmatpush1.msra.mxu0 0.0
  %1284 = vmatprep.subr.mxu0 0.0
  %1285 = vmatpush1.msra.mxu0 0.0
  %1286 = vmatprep.subr.mxu0 0.0
  %1287 = vmatpush1.msra.mxu0 0.0
  %1288 = vmatprep.subr.mxu0 0.0
  %1289 = vmatpush1.msra.mxu0 0.0
  %1290 = vmatprep.subr.mxu0 0.0
  %1291 = vmatpush1.msra.mxu0 0.0
  %1292 = vmatprep.subr.mxu0 0.0
  %1293 = vmatpush1.msra.mxu0 0.0
  %1294 = vmatprep.subr.mxu0 0.0
  %1295 = vmatpush1.msra.mxu0 0.0
  %1296 = vmatprep.subr.mxu0 0.0
  %1297 = vmatpush1.msra.mxu0 0.0
  %1298 = vmatprep.subr.mxu0 0.0
  %1299 = vmatpush1.msra.mxu0 0.0
  %1300 = vmatprep.subr.mxu0 0.0
  %1301 = vmatpush1.msra.mxu0 0.0
  %1302 = vmatprep.mubr.f32.mxu0 0.0
  %1303 = vmatmul.mubr.f32.gmra.mrb[0].mxu0 %v1165
  %v1304 = vpop.f32.mrb[0].mxu0
  %v1305 = vadd.f32 0.0, %v1304
  %v1306 = vpop.f32.mrb[0].mxu0
  %1307 = vdwg.mxu0
  %v1309 = vrot.slane %v1234, 6
  %v1310 = vrot.slane %v1234, 7
  %v1311 = vrot.slane %v1234, 1
  %v1312 = vrot.slane %v1234, 2
  %v1313 = vrot.slane %v1234, 3
  %v1314 = vrot.slane %v1234, 4
  %v1315 = vrot.slane %v1234, 5
  %v1324 = vadd.f32 %v160, %v1309
  %v1325 = vadd.f32 %v166, %v1310
  %v1326 = vadd.f32 %v172, %v1234
  %v1327 = vadd.f32 %v178, %v1311
  %v1328 = vadd.f32 %v184, %v1312
  %v1329 = vadd.f32 %v190, %v1313
  %v1330 = vadd.f32 %v196, %v1314
  %v1331 = vadd.f32 %v202, %v1315
  %v1332 = vxor.u32 %v1324, 2147483648
  %v1333 = vxor.u32 %v1325, 2147483648
  %v1334 = vxor.u32 %v1326, 2147483648
  %v1335 = vxor.u32 %v1327, 2147483648
  %v1336 = vxor.u32 %v1328, 2147483648
  %v1337 = vxor.u32 %v1329, 2147483648
  %v1338 = vxor.u32 %v1330, 2147483648
  %v1339 = vxor.u32 %v1331, 2147483648
  %v1340 = vmul.f32 %v1332, 1.442695
  %v1341 = vpow.pop %v1340
  %v1342 = vmul.f32 %v1333, 1.442695
  %v1343 = vpow.pop %v1342
  %v1344 = vmul.f32 %v1334, 1.442695
  %v1345 = vpow.pop %v1344
  %v1346 = vmul.f32 %v1335, 1.442695
  %v1347 = vpow.pop %v1346
  %v1348 = vmul.f32 %v1336, 1.442695
  %v1349 = vpow.pop %v1348
  %v1350 = vmul.f32 %v1337, 1.442695
  %v1351 = vpow.pop %v1350
  %v1352 = vmul.f32 %v1338, 1.442695
  %v1353 = vpow.pop %v1352
  %v1354 = vmul.f32 %v1339, 1.442695
  %v1355 = vpow.pop %v1354
  %v1356 = vadd.f32 %v1341, 1.0
  %v1357 = vadd.f32 %v1343, 1.0
  %v1358 = vadd.f32 %v1345, 1.0
  %v1359 = vadd.f32 %v1347, 1.0
  %v1360 = vadd.f32 %v1349, 1.0
  %v1361 = vadd.f32 %v1351, 1.0
  %v1362 = vadd.f32 %v1353, 1.0
  %v1363 = vadd.f32 %v1355, 1.0
  %v1364 = vrcp.pop %v1356
  %v1365 = vmul.f32 1.0, %v1364
  %v1366 = vrcp.pop %v1357
  %v1367 = vmul.f32 1.0, %v1366
  %v1368 = vrcp.pop %v1358
  %v1369 = vmul.f32 1.0, %v1368
  %v1370 = vrcp.pop %v1359
  %v1371 = vmul.f32 1.0, %v1370
  %v1372 = vrcp.pop %v1360
  %v1373 = vmul.f32 1.0, %v1372
  %v1374 = vrcp.pop %v1361
  %v1375 = vmul.f32 1.0, %v1374
  %v1376 = vrcp.pop %v1362
  %v1377 = vmul.f32 1.0, %v1376
  %v1378 = vrcp.pop %v1363
  %v1379 = vmul.f32 1.0, %v1378
  %v1381 = vrot.slane %v1236, 6
  %v1382 = vrot.slane %v1236, 7
  %v1383 = vrot.slane %v1236, 1
  %v1384 = vrot.slane %v1236, 2
  %v1385 = vrot.slane %v1236, 3
  %v1386 = vrot.slane %v1236, 4
  %v1387 = vrot.slane %v1236, 5
  %v1396 = vadd.f32 %v162, %v1381
  %v1397 = vadd.f32 %v168, %v1382
  %v1398 = vadd.f32 %v174, %v1236
  %v1399 = vadd.f32 %v180, %v1383
  %v1400 = vadd.f32 %v186, %v1384
  %v1401 = vadd.f32 %v192, %v1385
  %v1402 = vadd.f32 %v198, %v1386
  %v1403 = vadd.f32 %v204, %v1387
  %v1404 = vxor.u32 %v1396, 2147483648
  %v1405 = vxor.u32 %v1397, 2147483648
  %v1406 = vxor.u32 %v1398, 2147483648
  %v1407 = vxor.u32 %v1399, 2147483648
  %v1408 = vxor.u32 %v1400, 2147483648
  %v1409 = vxor.u32 %v1401, 2147483648
  %v1410 = vxor.u32 %v1402, 2147483648
  %v1411 = vxor.u32 %v1403, 2147483648
  %v1412 = vmul.f32 %v1404, 1.442695
  %v1413 = vpow.pop %v1412
  %v1414 = vmul.f32 %v1405, 1.442695
  %v1415 = vpow.pop %v1414
  %v1416 = vmul.f32 %v1406, 1.442695
  %v1417 = vpow.pop %v1416
  %v1418 = vmul.f32 %v1407, 1.442695
  %v1419 = vpow.pop %v1418
  %v1420 = vmul.f32 %v1408, 1.442695
  %v1421 = vpow.pop %v1420
  %v1422 = vmul.f32 %v1409, 1.442695
  %v1423 = vpow.pop %v1422
  %v1424 = vmul.f32 %v1410, 1.442695
  %v1425 = vpow.pop %v1424
  %v1426 = vmul.f32 %v1411, 1.442695
  %v1427 = vpow.pop %v1426
  %v1428 = vadd.f32 %v1413, 1.0
  %v1429 = vadd.f32 %v1415, 1.0
  %v1430 = vadd.f32 %v1417, 1.0
  %v1431 = vadd.f32 %v1419, 1.0
  %v1432 = vadd.f32 %v1421, 1.0
  %v1433 = vadd.f32 %v1423, 1.0
  %v1434 = vadd.f32 %v1425, 1.0
  %v1435 = vadd.f32 %v1427, 1.0
  %v1436 = vrcp.pop %v1428
  %v1437 = vmul.f32 1.0, %v1436
  %v1438 = vrcp.pop %v1429
  %v1439 = vmul.f32 1.0, %v1438
  %v1440 = vrcp.pop %v1430
  %v1441 = vmul.f32 1.0, %v1440
  %v1442 = vrcp.pop %v1431
  %v1443 = vmul.f32 1.0, %v1442
  %v1444 = vrcp.pop %v1432
  %v1445 = vmul.f32 1.0, %v1444
  %v1446 = vrcp.pop %v1433
  %v1447 = vmul.f32 1.0, %v1446
  %v1448 = vrcp.pop %v1434
  %v1449 = vmul.f32 1.0, %v1448
  %v1450 = vrcp.pop %v1435
  %v1451 = vmul.f32 1.0, %v1450
  %v1452 = vadd.f32 %v1305, %v650
  %v1454 = vrot.slane %v1452, 6
  %v1455 = vrot.slane %v1452, 7
  %v1456 = vrot.slane %v1452, 1
  %v1457 = vrot.slane %v1452, 2
  %v1458 = vrot.slane %v1452, 3
  %v1459 = vrot.slane %v1452, 4
  %v1460 = vrot.slane %v1452, 5
  %v1469 = vmul.f32 %v1365, %v1454
  %v1470 = vmul.f32 %v1367, %v1455
  %v1471 = vmul.f32 %v1369, %v1452
  %v1472 = vmul.f32 %v1371, %v1456
  %v1473 = vmul.f32 %v1373, %v1457
  %v1474 = vmul.f32 %v1375, %v1458
  %v1475 = vmul.f32 %v1377, %v1459
  %v1476 = vmul.f32 %v1379, %v1460
  %v1477 = vadd.f32 %v273, %v1469
  %v1478 = vadd.f32 %v278, %v1470
  %v1479 = vadd.f32 %v283, %v1471
  %v1480 = vadd.f32 %v288, %v1472
  %v1481 = vadd.f32 %v293, %v1473
  %v1482 = vadd.f32 %v298, %v1474
  %v1483 = vadd.f32 %v303, %v1475
  %v1484 = vadd.f32 %v308, %v1476
  %v1485 = vtanh.pop %v1477
  %v1486 = vtanh.pop %v1478
  %v1487 = vtanh.pop %v1479
  %v1488 = vtanh.pop %v1480
  %v1489 = vtanh.pop %v1481
  %v1490 = vtanh.pop %v1482
  %v1491 = vtanh.pop %v1483
  %v1492 = vtanh.pop %v1484
  %v1493 = vsub.f32 1.0, %v1437
  %v1494 = vsub.f32 1.0, %v1439
  %v1495 = vsub.f32 1.0, %v1441
  %v1496 = vsub.f32 1.0, %v1443
  %v1497 = vsub.f32 1.0, %v1445
  %v1498 = vsub.f32 1.0, %v1447
  %v1499 = vsub.f32 1.0, %v1449
  %v1500 = vsub.f32 1.0, %v1451
  %v1501 = vmul.f32 %v1493, %v1485
  %v1502 = vmul.f32 %v1494, %v1486
  %v1503 = vmul.f32 %v1495, %v1487
  %v1504 = vmul.f32 %v1496, %v1488
  %v1505 = vmul.f32 %v1497, %v1489
  %v1506 = vmul.f32 %v1498, %v1490
  %v1507 = vmul.f32 %v1499, %v1491
  %v1508 = vmul.f32 %v1500, %v1492
  %v1509 = vrot.slane %v1136, 7
  %v1510 = vrot.slane %v1137, 7
  %v1511 = vrot.slane %v1139, 7
  %v1512 = vrot.slane %v1140, 7
  %v1513 = vrot.slane %v1141, 7
  %v1514 = vrot.slane %v1142, 7
  %v1515 = vrot.slane %v1143, 7
  %v1524 = vmul.f32 %v1437, %v1509
  %v1525 = vmul.f32 %v1439, %v1510
  %v1526 = vmul.f32 %v1441, %v1154
  %v1527 = vmul.f32 %v1443, %v1511
  %v1528 = vmul.f32 %v1445, %v1512
  %v1529 = vmul.f32 %v1447, %v1513
  %v1530 = vmul.f32 %v1449, %v1514
  %v1531 = vmul.f32 %v1451, %v1515
  %v1532 = vadd.f32 %v1501, %v1524
  %v1533 = vadd.f32 %v1502, %v1525
  %v1534 = vadd.f32 %v1503, %v1526
  %v1535 = vadd.f32 %v1504, %v1527
  %v1536 = vadd.f32 %v1505, %v1528
  %v1537 = vadd.f32 %v1506, %v1529
  %v1538 = vadd.f32 %v1507, %v1530
  %v1539 = vadd.f32 %v1508, %v1531
  %v1548 = vrot.slane %v1532, 2
  %v1549 = vrot.slane %v1533, 1
  %v1550 = vsel %vm750, %v1549, %v1548
  %v1551 = vsel %vm753, %v1534, %v1550
  %v1552 = vrot.slane %v1535, 7
  %v1553 = vsel %vm756, %v1552, %v1551
  %v1554 = vrot.slane %v1536, 6
  %v1555 = vsel %vm759, %v1554, %v1553
  %v1556 = vrot.slane %v1537, 5
  %v1557 = vsel %vm762, %v1556, %v1555
  %v1558 = vrot.slane %v1538, 4
  %v1559 = vsel %vm765, %v1558, %v1557
  %v1560 = vrot.slane %v1539, 3
  %v1561 = vsel %vm768, %v1560, %v1559
  %1563 = vmatprep.subr.mxu0 %v313
  %1564 = vmatpush1.msra.mxu0 %v312
  %1565 = vmatprep.subr.mxu0 %v316
  %1566 = vmatpush1.msra.mxu0 %v315
  %1567 = vmatprep.subr.mxu0 %v319
  %1568 = vmatpush1.msra.mxu0 %v318
  %1569 = vmatprep.subr.mxu0 %v322
  %1570 = vmatpush1.msra.mxu0 %v321
  %1571 = vmatprep.subr.mxu0 %v325
  %1572 = vmatpush1.msra.mxu0 %v324
  %1573 = vmatprep.subr.mxu0 %v328
  %1574 = vmatpush1.msra.mxu0 %v327
  %1575 = vmatprep.subr.mxu0 %v331
  %1576 = vmatpush1.msra.mxu0 %v330
  %1577 = vmatprep.subr.mxu0 %v334
  %1578 = vmatpush1.msra.mxu0 %v333
  %1579 = vmatprep.subr.mxu0 %v337
  %1580 = vmatpush1.msra.mxu0 %v336
  %1581 = vmatprep.subr.mxu0 %v340
  %1582 = vmatpush1.msra.mxu0 %v339
  %1583 = vmatprep.subr.mxu0 %v343
  %1584 = vmatpush1.msra.mxu0 %v342
  %1585 = vmatprep.subr.mxu0 %v346
  %1586 = vmatpush1.msra.mxu0 %v345
  %1587 = vmatprep.subr.mxu0 %v349
  %1588 = vmatpush1.msra.mxu0 %v348
  %1589 = vmatprep.subr.mxu0 %v352
  %1590 = vmatpush1.msra.mxu0 %v351
  %1591 = vmatprep.subr.mxu0 %v355
  %1592 = vmatpush1.msra.mxu0 %v354
  %1593 = vmatprep.subr.mxu0 %v358
  %1594 = vmatpush1.msra.mxu0 %v357
  %1595 = vmatprep.subr.mxu0 0.0
  %1596 = vmatpush1.msra.mxu0 0.0
  %1597 = vmatprep.subr.mxu0 0.0
  %1598 = vmatpush1.msra.mxu0 0.0
  %1599 = vmatprep.subr.mxu0 0.0
  %1600 = vmatpush1.msra.mxu0 0.0
  %1601 = vmatprep.subr.mxu0 0.0
  %1602 = vmatpush1.msra.mxu0 0.0
  %1603 = vmatprep.subr.mxu0 0.0
  %1604 = vmatpush1.msra.mxu0 0.0
  %1605 = vmatprep.subr.mxu0 0.0
  %1606 = vmatpush1.msra.mxu0 0.0
  %1607 = vmatprep.subr.mxu0 0.0
  %1608 = vmatpush1.msra.mxu0 0.0
  %1609 = vmatprep.subr.mxu0 0.0
  %1610 = vmatpush1.msra.mxu0 0.0
  %1611 = vmatprep.subr.mxu0 0.0
  %1612 = vmatpush1.msra.mxu0 0.0
  %1613 = vmatprep.subr.mxu0 0.0
  %1614 = vmatpush1.msra.mxu0 0.0
  %1615 = vmatprep.subr.mxu0 0.0
  %1616 = vmatpush1.msra.mxu0 0.0
  %1617 = vmatprep.subr.mxu0 0.0
  %1618 = vmatpush1.msra.mxu0 0.0
  %1619 = vmatprep.subr.mxu0 0.0
  %1620 = vmatpush1.msra.mxu0 0.0
  %1621 = vmatprep.subr.mxu0 0.0
  %1622 = vmatpush1.msra.mxu0 0.0
  %1623 = vmatprep.subr.mxu0 0.0
  %1624 = vmatpush1.msra.mxu0 0.0
  %1625 = vmatprep.subr.mxu0 0.0
  %1626 = vmatpush1.msra.mxu0 0.0
  %1627 = vmatprep.mubr.f32.mxu0 0.0
  %1628 = vmatmul.mubr.f32.gmra.mrb[0].mxu0 %v1561
  %v1629 = vpop.f32.mrb[0].mxu0
  %v1630 = vadd.f32 0.0, %v1629
  %v1631 = vpop.f32.mrb[0].mxu0
  %v1632 = vadd.f32 0.0, %v1631
  %1633 = vdwg.mxu0
  %1634 = vmatprep.subr.mxu0 0.0
  %1635 = vmatpush1.msra.mxu0 %v314
  %1636 = vmatprep.subr.mxu0 0.0
  %1637 = vmatpush1.msra.mxu0 %v317
  %1638 = vmatprep.subr.mxu0 0.0
  %1639 = vmatpush1.msra.mxu0 %v320
  %1640 = vmatprep.subr.mxu0 0.0
  %1641 = vmatpush1.msra.mxu0 %v323
  %1642 = vmatprep.subr.mxu0 0.0
  %1643 = vmatpush1.msra.mxu0 %v326
  %1644 = vmatprep.subr.mxu0 0.0
  %1645 = vmatpush1.msra.mxu0 %v329
  %1646 = vmatprep.subr.mxu0 0.0
  %1647 = vmatpush1.msra.mxu0 %v332
  %1648 = vmatprep.subr.mxu0 0.0
  %1649 = vmatpush1.msra.mxu0 %v335
  %1650 = vmatprep.subr.mxu0 0.0
  %1651 = vmatpush1.msra.mxu0 %v338
  %1652 = vmatprep.subr.mxu0 0.0
  %1653 = vmatpush1.msra.mxu0 %v341
  %1654 = vmatprep.subr.mxu0 0.0
  %1655 = vmatpush1.msra.mxu0 %v344
  %1656 = vmatprep.subr.mxu0 0.0
  %1657 = vmatpush1.msra.mxu0 %v347
  %1658 = vmatprep.subr.mxu0 0.0
  %1659 = vmatpush1.msra.mxu0 %v350
  %1660 = vmatprep.subr.mxu0 0.0
  %1661 = vmatpush1.msra.mxu0 %v353
  %1662 = vmatprep.subr.mxu0 0.0
  %1663 = vmatpush1.msra.mxu0 %v356
  %1664 = vmatprep.subr.mxu0 0.0
  %1665 = vmatpush1.msra.mxu0 %v359
  %1666 = vmatprep.subr.mxu0 0.0
  %1667 = vmatpush1.msra.mxu0 0.0
  %1668 = vmatprep.subr.mxu0 0.0
  %1669 = vmatpush1.msra.mxu0 0.0
  %1670 = vmatprep.subr.mxu0 0.0
  %1671 = vmatpush1.msra.mxu0 0.0
  %1672 = vmatprep.subr.mxu0 0.0
  %1673 = vmatpush1.msra.mxu0 0.0
  %1674 = vmatprep.subr.mxu0 0.0
  %1675 = vmatpush1.msra.mxu0 0.0
  %1676 = vmatprep.subr.mxu0 0.0
  %1677 = vmatpush1.msra.mxu0 0.0
  %1678 = vmatprep.subr.mxu0 0.0
  %1679 = vmatpush1.msra.mxu0 0.0
  %1680 = vmatprep.subr.mxu0 0.0
  %1681 = vmatpush1.msra.mxu0 0.0
  %1682 = vmatprep.subr.mxu0 0.0
  %1683 = vmatpush1.msra.mxu0 0.0
  %1684 = vmatprep.subr.mxu0 0.0
  %1685 = vmatpush1.msra.mxu0 0.0
  %1686 = vmatprep.subr.mxu0 0.0
  %1687 = vmatpush1.msra.mxu0 0.0
  %1688 = vmatprep.subr.mxu0 0.0
  %1689 = vmatpush1.msra.mxu0 0.0
  %1690 = vmatprep.subr.mxu0 0.0
  %1691 = vmatpush1.msra.mxu0 0.0
  %1692 = vmatprep.subr.mxu0 0.0
  %1693 = vmatpush1.msra.mxu0 0.0
  %1694 = vmatprep.subr.mxu0 0.0
  %1695 = vmatpush1.msra.mxu0 0.0
  %1696 = vmatprep.subr.mxu0 0.0
  %1697 = vmatpush1.msra.mxu0 0.0
  %1698 = vmatprep.mubr.f32.mxu0 0.0
  %1699 = vmatmul.mubr.f32.gmra.mrb[0].mxu0 %v1561
  %v1700 = vpop.f32.mrb[0].mxu0
  %v1701 = vadd.f32 0.0, %v1700
  %v1702 = vpop.f32.mrb[0].mxu0
  %1703 = vdwg.mxu0
  %v1705 = vrot.slane %v1630, 5
  %v1706 = vrot.slane %v1630, 6
  %v1707 = vrot.slane %v1630, 7
  %v1708 = vrot.slane %v1630, 1
  %v1709 = vrot.slane %v1630, 2
  %v1710 = vrot.slane %v1630, 3
  %v1711 = vrot.slane %v1630, 4
  %v1720 = vadd.f32 %v160, %v1705
  %v1721 = vadd.f32 %v166, %v1706
  %v1722 = vadd.f32 %v172, %v1707
  %v1723 = vadd.f32 %v178, %v1630
  %v1724 = vadd.f32 %v184, %v1708
  %v1725 = vadd.f32 %v190, %v1709
  %v1726 = vadd.f32 %v196, %v1710
  %v1727 = vadd.f32 %v202, %v1711
  %v1728 = vxor.u32 %v1720, 2147483648
  %v1729 = vxor.u32 %v1721, 2147483648
  %v1730 = vxor.u32 %v1722, 2147483648
  %v1731 = vxor.u32 %v1723, 2147483648
  %v1732 = vxor.u32 %v1724, 2147483648
  %v1733 = vxor.u32 %v1725, 2147483648
  %v1734 = vxor.u32 %v1726, 2147483648
  %v1735 = vxor.u32 %v1727, 2147483648
  %v1736 = vmul.f32 %v1728, 1.442695
  %v1737 = vpow.pop %v1736
  %v1738 = vmul.f32 %v1729, 1.442695
  %v1739 = vpow.pop %v1738
  %v1740 = vmul.f32 %v1730, 1.442695
  %v1741 = vpow.pop %v1740
  %v1742 = vmul.f32 %v1731, 1.442695
  %v1743 = vpow.pop %v1742
  %v1744 = vmul.f32 %v1732, 1.442695
  %v1745 = vpow.pop %v1744
  %v1746 = vmul.f32 %v1733, 1.442695
  %v1747 = vpow.pop %v1746
  %v1748 = vmul.f32 %v1734, 1.442695
  %v1749 = vpow.pop %v1748
  %v1750 = vmul.f32 %v1735, 1.442695
  %v1751 = vpow.pop %v1750
  %v1752 = vadd.f32 %v1737, 1.0
  %v1753 = vadd.f32 %v1739, 1.0
  %v1754 = vadd.f32 %v1741, 1.0
  %v1755 = vadd.f32 %v1743, 1.0
  %v1756 = vadd.f32 %v1745, 1.0
  %v1757 = vadd.f32 %v1747, 1.0
  %v1758 = vadd.f32 %v1749, 1.0
  %v1759 = vadd.f32 %v1751, 1.0
  %v1760 = vrcp.pop %v1752
  %v1761 = vmul.f32 1.0, %v1760
  %v1762 = vrcp.pop %v1753
  %v1763 = vmul.f32 1.0, %v1762
  %v1764 = vrcp.pop %v1754
  %v1765 = vmul.f32 1.0, %v1764
  %v1766 = vrcp.pop %v1755
  %v1767 = vmul.f32 1.0, %v1766
  %v1768 = vrcp.pop %v1756
  %v1769 = vmul.f32 1.0, %v1768
  %v1770 = vrcp.pop %v1757
  %v1771 = vmul.f32 1.0, %v1770
  %v1772 = vrcp.pop %v1758
  %v1773 = vmul.f32 1.0, %v1772
  %v1774 = vrcp.pop %v1759
  %v1775 = vmul.f32 1.0, %v1774
  %v1777 = vrot.slane %v1632, 5
  %v1778 = vrot.slane %v1632, 6
  %v1779 = vrot.slane %v1632, 7
  %v1780 = vrot.slane %v1632, 1
  %v1781 = vrot.slane %v1632, 2
  %v1782 = vrot.slane %v1632, 3
  %v1783 = vrot.slane %v1632, 4
  %v1792 = vadd.f32 %v162, %v1777
  %v1793 = vadd.f32 %v168, %v1778
  %v1794 = vadd.f32 %v174, %v1779
  %v1795 = vadd.f32 %v180, %v1632
  %v1796 = vadd.f32 %v186, %v1780
  %v1797 = vadd.f32 %v192, %v1781
  %v1798 = vadd.f32 %v198, %v1782
  %v1799 = vadd.f32 %v204, %v1783
  %v1800 = vxor.u32 %v1792, 2147483648
  %v1801 = vxor.u32 %v1793, 2147483648
  %v1802 = vxor.u32 %v1794, 2147483648
  %v1803 = vxor.u32 %v1795, 2147483648
  %v1804 = vxor.u32 %v1796, 2147483648
  %v1805 = vxor.u32 %v1797, 2147483648
  %v1806 = vxor.u32 %v1798, 2147483648
  %v1807 = vxor.u32 %v1799, 2147483648
  %v1808 = vmul.f32 %v1800, 1.442695
  %v1809 = vpow.pop %v1808
  %v1810 = vmul.f32 %v1801, 1.442695
  %v1811 = vpow.pop %v1810
  %v1812 = vmul.f32 %v1802, 1.442695
  %v1813 = vpow.pop %v1812
  %v1814 = vmul.f32 %v1803, 1.442695
  %v1815 = vpow.pop %v1814
  %v1816 = vmul.f32 %v1804, 1.442695
  %v1817 = vpow.pop %v1816
  %v1818 = vmul.f32 %v1805, 1.442695
  %v1819 = vpow.pop %v1818
  %v1820 = vmul.f32 %v1806, 1.442695
  %v1821 = vpow.pop %v1820
  %v1822 = vmul.f32 %v1807, 1.442695
  %v1823 = vpow.pop %v1822
  %v1824 = vadd.f32 %v1809, 1.0
  %v1825 = vadd.f32 %v1811, 1.0
  %v1826 = vadd.f32 %v1813, 1.0
  %v1827 = vadd.f32 %v1815, 1.0
  %v1828 = vadd.f32 %v1817, 1.0
  %v1829 = vadd.f32 %v1819, 1.0
  %v1830 = vadd.f32 %v1821, 1.0
  %v1831 = vadd.f32 %v1823, 1.0
  %v1832 = vrcp.pop %v1824
  %v1833 = vmul.f32 1.0, %v1832
  %v1834 = vrcp.pop %v1825
  %v1835 = vmul.f32 1.0, %v1834
  %v1836 = vrcp.pop %v1826
  %v1837 = vmul.f32 1.0, %v1836
  %v1838 = vrcp.pop %v1827
  %v1839 = vmul.f32 1.0, %v1838
  %v1840 = vrcp.pop %v1828
  %v1841 = vmul.f32 1.0, %v1840
  %v1842 = vrcp.pop %v1829
  %v1843 = vmul.f32 1.0, %v1842
  %v1844 = vrcp.pop %v1830
  %v1845 = vmul.f32 1.0, %v1844
  %v1846 = vrcp.pop %v1831
  %v1847 = vmul.f32 1.0, %v1846
  %v1848 = vadd.f32 %v1701, %v650
  %v1850 = vrot.slane %v1848, 5
  %v1851 = vrot.slane %v1848, 6
  %v1852 = vrot.slane %v1848, 7
  %v1853 = vrot.slane %v1848, 1
  %v1854 = vrot.slane %v1848, 2
  %v1855 = vrot.slane %v1848, 3
  %v1856 = vrot.slane %v1848, 4
  %v1865 = vmul.f32 %v1761, %v1850
  %v1866 = vmul.f32 %v1763, %v1851
  %v1867 = vmul.f32 %v1765, %v1852
  %v1868 = vmul.f32 %v1767, %v1848
  %v1869 = vmul.f32 %v1769, %v1853
  %v1870 = vmul.f32 %v1771, %v1854
  %v1871 = vmul.f32 %v1773, %v1855
  %v1872 = vmul.f32 %v1775, %v1856
  %v1873 = vadd.f32 %v273, %v1865
  %v1874 = vadd.f32 %v278, %v1866
  %v1875 = vadd.f32 %v283, %v1867
  %v1876 = vadd.f32 %v288, %v1868
  %v1877 = vadd.f32 %v293, %v1869
  %v1878 = vadd.f32 %v298, %v1870
  %v1879 = vadd.f32 %v303, %v1871
  %v1880 = vadd.f32 %v308, %v1872
  %v1881 = vtanh.pop %v1873
  %v1882 = vtanh.pop %v1874
  %v1883 = vtanh.pop %v1875
  %v1884 = vtanh.pop %v1876
  %v1885 = vtanh.pop %v1877
  %v1886 = vtanh.pop %v1878
  %v1887 = vtanh.pop %v1879
  %v1888 = vtanh.pop %v1880
  %v1889 = vsub.f32 1.0, %v1833
  %v1890 = vsub.f32 1.0, %v1835
  %v1891 = vsub.f32 1.0, %v1837
  %v1892 = vsub.f32 1.0, %v1839
  %v1893 = vsub.f32 1.0, %v1841
  %v1894 = vsub.f32 1.0, %v1843
  %v1895 = vsub.f32 1.0, %v1845
  %v1896 = vsub.f32 1.0, %v1847
  %v1897 = vmul.f32 %v1889, %v1881
  %v1898 = vmul.f32 %v1890, %v1882
  %v1899 = vmul.f32 %v1891, %v1883
  %v1900 = vmul.f32 %v1892, %v1884
  %v1901 = vmul.f32 %v1893, %v1885
  %v1902 = vmul.f32 %v1894, %v1886
  %v1903 = vmul.f32 %v1895, %v1887
  %v1904 = vmul.f32 %v1896, %v1888
  %v1905 = vrot.slane %v1532, 7
  %v1906 = vrot.slane %v1533, 7
  %v1907 = vrot.slane %v1534, 7
  %v1908 = vrot.slane %v1536, 7
  %v1909 = vrot.slane %v1537, 7
  %v1910 = vrot.slane %v1538, 7
  %v1911 = vrot.slane %v1539, 7
  %v1920 = vmul.f32 %v1833, %v1905
  %v1921 = vmul.f32 %v1835, %v1906
  %v1922 = vmul.f32 %v1837, %v1907
  %v1923 = vmul.f32 %v1839, %v1552
  %v1924 = vmul.f32 %v1841, %v1908
  %v1925 = vmul.f32 %v1843, %v1909
  %v1926 = vmul.f32 %v1845, %v1910
  %v1927 = vmul.f32 %v1847, %v1911
  %v1928 = vadd.f32 %v1897, %v1920
  %v1929 = vadd.f32 %v1898, %v1921
  %v1930 = vadd.f32 %v1899, %v1922
  %v1931 = vadd.f32 %v1900, %v1923
  %v1932 = vadd.f32 %v1901, %v1924
  %v1933 = vadd.f32 %v1902, %v1925
  %v1934 = vadd.f32 %v1903, %v1926
  %v1935 = vadd.f32 %v1904, %v1927
  %v1944 = vrot.slane %v1928, 3
  %v1945 = vrot.slane %v1929, 2
  %v1946 = vsel %vm750, %v1945, %v1944
  %v1947 = vrot.slane %v1930, 1
  %v1948 = vsel %vm753, %v1947, %v1946
  %v1949 = vsel %vm756, %v1931, %v1948
  %v1950 = vrot.slane %v1932, 7
  %v1951 = vsel %vm759, %v1950, %v1949
  %v1952 = vrot.slane %v1933, 6
  %v1953 = vsel %vm762, %v1952, %v1951
  %v1954 = vrot.slane %v1934, 5
  %v1955 = vsel %vm765, %v1954, %v1953
  %v1956 = vrot.slane %v1935, 4
  %v1957 = vsel %vm768, %v1956, %v1955
  %1959 = vmatprep.subr.mxu0 %v313
  %1960 = vmatpush1.msra.mxu0 %v312
  %1961 = vmatprep.subr.mxu0 %v316
  %1962 = vmatpush1.msra.mxu0 %v315
  %1963 = vmatprep.subr.mxu0 %v319
  %1964 = vmatpush1.msra.mxu0 %v318
  %1965 = vmatprep.subr.mxu0 %v322
  %1966 = vmatpush1.msra.mxu0 %v321
  %1967 = vmatprep.subr.mxu0 %v325
  %1968 = vmatpush1.msra.mxu0 %v324
  %1969 = vmatprep.subr.mxu0 %v328
  %1970 = vmatpush1.msra.mxu0 %v327
  %1971 = vmatprep.subr.mxu0 %v331
  %1972 = vmatpush1.msra.mxu0 %v330
  %1973 = vmatprep.subr.mxu0 %v334
  %1974 = vmatpush1.msra.mxu0 %v333
  %1975 = vmatprep.subr.mxu0 %v337
  %1976 = vmatpush1.msra.mxu0 %v336
  %1977 = vmatprep.subr.mxu0 %v340
  %1978 = vmatpush1.msra.mxu0 %v339
  %1979 = vmatprep.subr.mxu0 %v343
  %1980 = vmatpush1.msra.mxu0 %v342
  %1981 = vmatprep.subr.mxu0 %v346
  %1982 = vmatpush1.msra.mxu0 %v345
  %1983 = vmatprep.subr.mxu0 %v349
  %1984 = vmatpush1.msra.mxu0 %v348
  %1985 = vmatprep.subr.mxu0 %v352
  %1986 = vmatpush1.msra.mxu0 %v351
  %1987 = vmatprep.subr.mxu0 %v355
  %1988 = vmatpush1.msra.mxu0 %v354
  %1989 = vmatprep.subr.mxu0 %v358
  %1990 = vmatpush1.msra.mxu0 %v357
  %1991 = vmatprep.subr.mxu0 0.0
  %1992 = vmatpush1.msra.mxu0 0.0
  %1993 = vmatprep.subr.mxu0 0.0
  %1994 = vmatpush1.msra.mxu0 0.0
  %1995 = vmatprep.subr.mxu0 0.0
  %1996 = vmatpush1.msra.mxu0 0.0
  %1997 = vmatprep.subr.mxu0 0.0
  %1998 = vmatpush1.msra.mxu0 0.0
  %1999 = vmatprep.subr.mxu0 0.0
  %2000 = vmatpush1.msra.mxu0 0.0
  %2001 = vmatprep.subr.mxu0 0.0
  %2002 = vmatpush1.msra.mxu0 0.0
  %2003 = vmatprep.subr.mxu0 0.0
  %2004 = vmatpush1.msra.mxu0 0.0
  %2005 = vmatprep.subr.mxu0 0.0
  %2006 = vmatpush1.msra.mxu0 0.0
  %2007 = vmatprep.subr.mxu0 0.0
  %2008 = vmatpush1.msra.mxu0 0.0
  %2009 = vmatprep.subr.mxu0 0.0
  %2010 = vmatpush1.msra.mxu0 0.0
  %2011 = vmatprep.subr.mxu0 0.0
  %2012 = vmatpush1.msra.mxu0 0.0
  %2013 = vmatprep.subr.mxu0 0.0
  %2014 = vmatpush1.msra.mxu0 0.0
  %2015 = vmatprep.subr.mxu0 0.0
  %2016 = vmatpush1.msra.mxu0 0.0
  %2017 = vmatprep.subr.mxu0 0.0
  %2018 = vmatpush1.msra.mxu0 0.0
  %2019 = vmatprep.subr.mxu0 0.0
  %2020 = vmatpush1.msra.mxu0 0.0
  %2021 = vmatprep.subr.mxu0 0.0
  %2022 = vmatpush1.msra.mxu0 0.0
  %2023 = vmatprep.mubr.f32.mxu0 0.0
  %2024 = vmatmul.mubr.f32.gmra.mrb[0].mxu0 %v1957
  %v2025 = vpop.f32.mrb[0].mxu0
  %v2026 = vadd.f32 0.0, %v2025
  %v2027 = vpop.f32.mrb[0].mxu0
  %v2028 = vadd.f32 0.0, %v2027
  %2029 = vdwg.mxu0
  %2030 = vmatprep.subr.mxu0 0.0
  %2031 = vmatpush1.msra.mxu0 %v314
  %2032 = vmatprep.subr.mxu0 0.0
  %2033 = vmatpush1.msra.mxu0 %v317
  %2034 = vmatprep.subr.mxu0 0.0
  %2035 = vmatpush1.msra.mxu0 %v320
  %2036 = vmatprep.subr.mxu0 0.0
  %2037 = vmatpush1.msra.mxu0 %v323
  %2038 = vmatprep.subr.mxu0 0.0
  %2039 = vmatpush1.msra.mxu0 %v326
  %2040 = vmatprep.subr.mxu0 0.0
  %2041 = vmatpush1.msra.mxu0 %v329
  %2042 = vmatprep.subr.mxu0 0.0
  %2043 = vmatpush1.msra.mxu0 %v332
  %2044 = vmatprep.subr.mxu0 0.0
  %2045 = vmatpush1.msra.mxu0 %v335
  %2046 = vmatprep.subr.mxu0 0.0
  %2047 = vmatpush1.msra.mxu0 %v338
  %2048 = vmatprep.subr.mxu0 0.0
  %2049 = vmatpush1.msra.mxu0 %v341
  %2050 = vmatprep.subr.mxu0 0.0
  %2051 = vmatpush1.msra.mxu0 %v344
  %2052 = vmatprep.subr.mxu0 0.0
  %2053 = vmatpush1.msra.mxu0 %v347
  %2054 = vmatprep.subr.mxu0 0.0
  %2055 = vmatpush1.msra.mxu0 %v350
  %2056 = vmatprep.subr.mxu0 0.0
  %2057 = vmatpush1.msra.mxu0 %v353
  %2058 = vmatprep.subr.mxu0 0.0
  %2059 = vmatpush1.msra.mxu0 %v356
  %2060 = vmatprep.subr.mxu0 0.0
  %2061 = vmatpush1.msra.mxu0 %v359
  %2062 = vmatprep.subr.mxu0 0.0
  %2063 = vmatpush1.msra.mxu0 0.0
  %2064 = vmatprep.subr.mxu0 0.0
  %2065 = vmatpush1.msra.mxu0 0.0
  %2066 = vmatprep.subr.mxu0 0.0
  %2067 = vmatpush1.msra.mxu0 0.0
  %2068 = vmatprep.subr.mxu0 0.0
  %2069 = vmatpush1.msra.mxu0 0.0
  %2070 = vmatprep.subr.mxu0 0.0
  %2071 = vmatpush1.msra.mxu0 0.0
  %2072 = vmatprep.subr.mxu0 0.0
  %2073 = vmatpush1.msra.mxu0 0.0
  %2074 = vmatprep.subr.mxu0 0.0
  %2075 = vmatpush1.msra.mxu0 0.0
  %2076 = vmatprep.subr.mxu0 0.0
  %2077 = vmatpush1.msra.mxu0 0.0
  %2078 = vmatprep.subr.mxu0 0.0
  %2079 = vmatpush1.msra.mxu0 0.0
  %2080 = vmatprep.subr.mxu0 0.0
  %2081 = vmatpush1.msra.mxu0 0.0
  %2082 = vmatprep.subr.mxu0 0.0
  %2083 = vmatpush1.msra.mxu0 0.0
  %2084 = vmatprep.subr.mxu0 0.0
  %2085 = vmatpush1.msra.mxu0 0.0
  %2086 = vmatprep.subr.mxu0 0.0
  %2087 = vmatpush1.msra.mxu0 0.0
  %2088 = vmatprep.subr.mxu0 0.0
  %2089 = vmatpush1.msra.mxu0 0.0
  %2090 = vmatprep.subr.mxu0 0.0
  %2091 = vmatpush1.msra.mxu0 0.0
  %2092 = vmatprep.subr.mxu0 0.0
  %2093 = vmatpush1.msra.mxu0 0.0
  %2094 = vmatprep.mubr.f32.mxu0 0.0
  %2095 = vmatmul.mubr.f32.gmra.mrb[0].mxu0 %v1957
  %v2096 = vpop.f32.mrb[0].mxu0
  %v2097 = vadd.f32 0.0, %v2096
  %v2098 = vpop.f32.mrb[0].mxu0
  %2099 = vdwg.mxu0
  %v2101 = vrot.slane %v2026, 4
  %v2102 = vrot.slane %v2026, 5
  %v2103 = vrot.slane %v2026, 6
  %v2104 = vrot.slane %v2026, 7
  %v2105 = vrot.slane %v2026, 1
  %v2106 = vrot.slane %v2026, 2
  %v2107 = vrot.slane %v2026, 3
  %v2116 = vadd.f32 %v160, %v2101
  %v2117 = vadd.f32 %v166, %v2102
  %v2118 = vadd.f32 %v172, %v2103
  %v2119 = vadd.f32 %v178, %v2104
  %v2120 = vadd.f32 %v184, %v2026
  %v2121 = vadd.f32 %v190, %v2105
  %v2122 = vadd.f32 %v196, %v2106
  %v2123 = vadd.f32 %v202, %v2107
  %v2124 = vxor.u32 %v2116, 2147483648
  %v2125 = vxor.u32 %v2117, 2147483648
  %v2126 = vxor.u32 %v2118, 2147483648
  %v2127 = vxor.u32 %v2119, 2147483648
  %v2128 = vxor.u32 %v2120, 2147483648
  %v2129 = vxor.u32 %v2121, 2147483648
  %v2130 = vxor.u32 %v2122, 2147483648
  %v2131 = vxor.u32 %v2123, 2147483648
  %v2132 = vmul.f32 %v2124, 1.442695
  %v2133 = vpow.pop %v2132
  %v2134 = vmul.f32 %v2125, 1.442695
  %v2135 = vpow.pop %v2134
  %v2136 = vmul.f32 %v2126, 1.442695
  %v2137 = vpow.pop %v2136
  %v2138 = vmul.f32 %v2127, 1.442695
  %v2139 = vpow.pop %v2138
  %v2140 = vmul.f32 %v2128, 1.442695
  %v2141 = vpow.pop %v2140
  %v2142 = vmul.f32 %v2129, 1.442695
  %v2143 = vpow.pop %v2142
  %v2144 = vmul.f32 %v2130, 1.442695
  %v2145 = vpow.pop %v2144
  %v2146 = vmul.f32 %v2131, 1.442695
  %v2147 = vpow.pop %v2146
  %v2148 = vadd.f32 %v2133, 1.0
  %v2149 = vadd.f32 %v2135, 1.0
  %v2150 = vadd.f32 %v2137, 1.0
  %v2151 = vadd.f32 %v2139, 1.0
  %v2152 = vadd.f32 %v2141, 1.0
  %v2153 = vadd.f32 %v2143, 1.0
  %v2154 = vadd.f32 %v2145, 1.0
  %v2155 = vadd.f32 %v2147, 1.0
  %v2156 = vrcp.pop %v2148
  %v2157 = vmul.f32 1.0, %v2156
  %v2158 = vrcp.pop %v2149
  %v2159 = vmul.f32 1.0, %v2158
  %v2160 = vrcp.pop %v2150
  %v2161 = vmul.f32 1.0, %v2160
  %v2162 = vrcp.pop %v2151
  %v2163 = vmul.f32 1.0, %v2162
  %v2164 = vrcp.pop %v2152
  %v2165 = vmul.f32 1.0, %v2164
  %v2166 = vrcp.pop %v2153
  %v2167 = vmul.f32 1.0, %v2166
  %v2168 = vrcp.pop %v2154
  %v2169 = vmul.f32 1.0, %v2168
  %v2170 = vrcp.pop %v2155
  %v2171 = vmul.f32 1.0, %v2170
  %v2173 = vrot.slane %v2028, 4
  %v2174 = vrot.slane %v2028, 5
  %v2175 = vrot.slane %v2028, 6
  %v2176 = vrot.slane %v2028, 7
  %v2177 = vrot.slane %v2028, 1
  %v2178 = vrot.slane %v2028, 2
  %v2179 = vrot.slane %v2028, 3
  %v2188 = vadd.f32 %v162, %v2173
  %v2189 = vadd.f32 %v168, %v2174
  %v2190 = vadd.f32 %v174, %v2175
  %v2191 = vadd.f32 %v180, %v2176
  %v2192 = vadd.f32 %v186, %v2028
  %v2193 = vadd.f32 %v192, %v2177
  %v2194 = vadd.f32 %v198, %v2178
  %v2195 = vadd.f32 %v204, %v2179
  %v2196 = vxor.u32 %v2188, 2147483648
  %v2197 = vxor.u32 %v2189, 2147483648
  %v2198 = vxor.u32 %v2190, 2147483648
  %v2199 = vxor.u32 %v2191, 2147483648
  %v2200 = vxor.u32 %v2192, 2147483648
  %v2201 = vxor.u32 %v2193, 2147483648
  %v2202 = vxor.u32 %v2194, 2147483648
  %v2203 = vxor.u32 %v2195, 2147483648
  %v2204 = vmul.f32 %v2196, 1.442695
  %v2205 = vpow.pop %v2204
  %v2206 = vmul.f32 %v2197, 1.442695
  %v2207 = vpow.pop %v2206
  %v2208 = vmul.f32 %v2198, 1.442695
  %v2209 = vpow.pop %v2208
  %v2210 = vmul.f32 %v2199, 1.442695
  %v2211 = vpow.pop %v2210
  %v2212 = vmul.f32 %v2200, 1.442695
  %v2213 = vpow.pop %v2212
  %v2214 = vmul.f32 %v2201, 1.442695
  %v2215 = vpow.pop %v2214
  %v2216 = vmul.f32 %v2202, 1.442695
  %v2217 = vpow.pop %v2216
  %v2218 = vmul.f32 %v2203, 1.442695
  %v2219 = vpow.pop %v2218
  %v2220 = vadd.f32 %v2205, 1.0
  %v2221 = vadd.f32 %v2207, 1.0
  %v2222 = vadd.f32 %v2209, 1.0
  %v2223 = vadd.f32 %v2211, 1.0
  %v2224 = vadd.f32 %v2213, 1.0
  %v2225 = vadd.f32 %v2215, 1.0
  %v2226 = vadd.f32 %v2217, 1.0
  %v2227 = vadd.f32 %v2219, 1.0
  %v2228 = vrcp.pop %v2220
  %v2229 = vmul.f32 1.0, %v2228
  %v2230 = vrcp.pop %v2221
  %v2231 = vmul.f32 1.0, %v2230
  %v2232 = vrcp.pop %v2222
  %v2233 = vmul.f32 1.0, %v2232
  %v2234 = vrcp.pop %v2223
  %v2235 = vmul.f32 1.0, %v2234
  %v2236 = vrcp.pop %v2224
  %v2237 = vmul.f32 1.0, %v2236
  %v2238 = vrcp.pop %v2225
  %v2239 = vmul.f32 1.0, %v2238
  %v2240 = vrcp.pop %v2226
  %v2241 = vmul.f32 1.0, %v2240
  %v2242 = vrcp.pop %v2227
  %v2243 = vmul.f32 1.0, %v2242
  %v2244 = vadd.f32 %v2097, %v650
  %v2246 = vrot.slane %v2244, 4
  %v2247 = vrot.slane %v2244, 5
  %v2248 = vrot.slane %v2244, 6
  %v2249 = vrot.slane %v2244, 7
  %v2250 = vrot.slane %v2244, 1
  %v2251 = vrot.slane %v2244, 2
  %v2252 = vrot.slane %v2244, 3
  %v2261 = vmul.f32 %v2157, %v2246
  %v2262 = vmul.f32 %v2159, %v2247
  %v2263 = vmul.f32 %v2161, %v2248
  %v2264 = vmul.f32 %v2163, %v2249
  %v2265 = vmul.f32 %v2165, %v2244
  %v2266 = vmul.f32 %v2167, %v2250
  %v2267 = vmul.f32 %v2169, %v2251
  %v2268 = vmul.f32 %v2171, %v2252
  %v2269 = vadd.f32 %v273, %v2261
  %v2270 = vadd.f32 %v278, %v2262
  %v2271 = vadd.f32 %v283, %v2263
  %v2272 = vadd.f32 %v288, %v2264
  %v2273 = vadd.f32 %v293, %v2265
  %v2274 = vadd.f32 %v298, %v2266
  %v2275 = vadd.f32 %v303, %v2267
  %v2276 = vadd.f32 %v308, %v2268
  %v2277 = vtanh.pop %v2269
  %v2278 = vtanh.pop %v2270
  %v2279 = vtanh.pop %v2271
  %v2280 = vtanh.pop %v2272
  %v2281 = vtanh.pop %v2273
  %v2282 = vtanh.pop %v2274
  %v2283 = vtanh.pop %v2275
  %v2284 = vtanh.pop %v2276
  %v2285 = vsub.f32 1.0, %v2229
  %v2286 = vsub.f32 1.0, %v2231
  %v2287 = vsub.f32 1.0, %v2233
  %v2288 = vsub.f32 1.0, %v2235
  %v2289 = vsub.f32 1.0, %v2237
  %v2290 = vsub.f32 1.0, %v2239
  %v2291 = vsub.f32 1.0, %v2241
  %v2292 = vsub.f32 1.0, %v2243
  %v2293 = vmul.f32 %v2285, %v2277
  %v2294 = vmul.f32 %v2286, %v2278
  %v2295 = vmul.f32 %v2287, %v2279
  %v2296 = vmul.f32 %v2288, %v2280
  %v2297 = vmul.f32 %v2289, %v2281
  %v2298 = vmul.f32 %v2290, %v2282
  %v2299 = vmul.f32 %v2291, %v2283
  %v2300 = vmul.f32 %v2292, %v2284
  %v2301 = vrot.slane %v1928, 7
  %v2302 = vrot.slane %v1929, 7
  %v2303 = vrot.slane %v1930, 7
  %v2304 = vrot.slane %v1931, 7
  %v2305 = vrot.slane %v1933, 7
  %v2306 = vrot.slane %v1934, 7
  %v2307 = vrot.slane %v1935, 7
  %v2316 = vmul.f32 %v2229, %v2301
  %v2317 = vmul.f32 %v2231, %v2302
  %v2318 = vmul.f32 %v2233, %v2303
  %v2319 = vmul.f32 %v2235, %v2304
  %v2320 = vmul.f32 %v2237, %v1950
  %v2321 = vmul.f32 %v2239, %v2305
  %v2322 = vmul.f32 %v2241, %v2306
  %v2323 = vmul.f32 %v2243, %v2307
  %v2324 = vadd.f32 %v2293, %v2316
  %v2325 = vadd.f32 %v2294, %v2317
  %v2326 = vadd.f32 %v2295, %v2318
  %v2327 = vadd.f32 %v2296, %v2319
  %v2328 = vadd.f32 %v2297, %v2320
  %v2329 = vadd.f32 %v2298, %v2321
  %v2330 = vadd.f32 %v2299, %v2322
  %v2331 = vadd.f32 %v2300, %v2323
  %v2340 = vrot.slane %v2324, 4
  %v2341 = vrot.slane %v2325, 3
  %v2342 = vsel %vm750, %v2341, %v2340
  %v2343 = vrot.slane %v2326, 2
  %v2344 = vsel %vm753, %v2343, %v2342
  %v2345 = vrot.slane %v2327, 1
  %v2346 = vsel %vm756, %v2345, %v2344
  %v2347 = vsel %vm759, %v2328, %v2346
  %v2348 = vrot.slane %v2329, 7
  %v2349 = vsel %vm762, %v2348, %v2347
  %v2350 = vrot.slane %v2330, 6
  %v2351 = vsel %vm765, %v2350, %v2349
  %v2352 = vrot.slane %v2331, 5
  %v2353 = vsel %vm768, %v2352, %v2351
  %2355 = vmatprep.subr.mxu0 %v313
  %2356 = vmatpush1.msra.mxu0 %v312
  %2357 = vmatprep.subr.mxu0 %v316
  %2358 = vmatpush1.msra.mxu0 %v315
  %2359 = vmatprep.subr.mxu0 %v319
  %2360 = vmatpush1.msra.mxu0 %v318
  %2361 = vmatprep.subr.mxu0 %v322
  %2362 = vmatpush1.msra.mxu0 %v321
  %2363 = vmatprep.subr.mxu0 %v325
  %2364 = vmatpush1.msra.mxu0 %v324
  %2365 = vmatprep.subr.mxu0 %v328
  %2366 = vmatpush1.msra.mxu0 %v327
  %2367 = vmatprep.subr.mxu0 %v331
  %2368 = vmatpush1.msra.mxu0 %v330
  %2369 = vmatprep.subr.mxu0 %v334
  %2370 = vmatpush1.msra.mxu0 %v333
  %2371 = vmatprep.subr.mxu0 %v337
  %2372 = vmatpush1.msra.mxu0 %v336
  %2373 = vmatprep.subr.mxu0 %v340
  %2374 = vmatpush1.msra.mxu0 %v339
  %2375 = vmatprep.subr.mxu0 %v343
  %2376 = vmatpush1.msra.mxu0 %v342
  %2377 = vmatprep.subr.mxu0 %v346
  %2378 = vmatpush1.msra.mxu0 %v345
  %2379 = vmatprep.subr.mxu0 %v349
  %2380 = vmatpush1.msra.mxu0 %v348
  %2381 = vmatprep.subr.mxu0 %v352
  %2382 = vmatpush1.msra.mxu0 %v351
  %2383 = vmatprep.subr.mxu0 %v355
  %2384 = vmatpush1.msra.mxu0 %v354
  %2385 = vmatprep.subr.mxu0 %v358
  %2386 = vmatpush1.msra.mxu0 %v357
  %2387 = vmatprep.subr.mxu0 0.0
  %2388 = vmatpush1.msra.mxu0 0.0
  %2389 = vmatprep.subr.mxu0 0.0
  %2390 = vmatpush1.msra.mxu0 0.0
  %2391 = vmatprep.subr.mxu0 0.0
  %2392 = vmatpush1.msra.mxu0 0.0
  %2393 = vmatprep.subr.mxu0 0.0
  %2394 = vmatpush1.msra.mxu0 0.0
  %2395 = vmatprep.subr.mxu0 0.0
  %2396 = vmatpush1.msra.mxu0 0.0
  %2397 = vmatprep.subr.mxu0 0.0
  %2398 = vmatpush1.msra.mxu0 0.0
  %2399 = vmatprep.subr.mxu0 0.0
  %2400 = vmatpush1.msra.mxu0 0.0
  %2401 = vmatprep.subr.mxu0 0.0
  %2402 = vmatpush1.msra.mxu0 0.0
  %2403 = vmatprep.subr.mxu0 0.0
  %2404 = vmatpush1.msra.mxu0 0.0
  %2405 = vmatprep.subr.mxu0 0.0
  %2406 = vmatpush1.msra.mxu0 0.0
  %2407 = vmatprep.subr.mxu0 0.0
  %2408 = vmatpush1.msra.mxu0 0.0
  %2409 = vmatprep.subr.mxu0 0.0
  %2410 = vmatpush1.msra.mxu0 0.0
  %2411 = vmatprep.subr.mxu0 0.0
  %2412 = vmatpush1.msra.mxu0 0.0
  %2413 = vmatprep.subr.mxu0 0.0
  %2414 = vmatpush1.msra.mxu0 0.0
  %2415 = vmatprep.subr.mxu0 0.0
  %2416 = vmatpush1.msra.mxu0 0.0
  %2417 = vmatprep.subr.mxu0 0.0
  %2418 = vmatpush1.msra.mxu0 0.0
  %2419 = vmatprep.mubr.f32.mxu0 0.0
  %2420 = vmatmul.mubr.f32.gmra.mrb[0].mxu0 %v2353
  %v2421 = vpop.f32.mrb[0].mxu0
  %v2422 = vadd.f32 0.0, %v2421
  %v2423 = vpop.f32.mrb[0].mxu0
  %v2424 = vadd.f32 0.0, %v2423
  %2425 = vdwg.mxu0
  %2426 = vmatprep.subr.mxu0 0.0
  %2427 = vmatpush1.msra.mxu0 %v314
  %2428 = vmatprep.subr.mxu0 0.0
  %2429 = vmatpush1.msra.mxu0 %v317
  %2430 = vmatprep.subr.mxu0 0.0
  %2431 = vmatpush1.msra.mxu0 %v320
  %2432 = vmatprep.subr.mxu0 0.0
  %2433 = vmatpush1.msra.mxu0 %v323
  %2434 = vmatprep.subr.mxu0 0.0
  %2435 = vmatpush1.msra.mxu0 %v326
  %2436 = vmatprep.subr.mxu0 0.0
  %2437 = vmatpush1.msra.mxu0 %v329
  %2438 = vmatprep.subr.mxu0 0.0
  %2439 = vmatpush1.msra.mxu0 %v332
  %2440 = vmatprep.subr.mxu0 0.0
  %2441 = vmatpush1.msra.mxu0 %v335
  %2442 = vmatprep.subr.mxu0 0.0
  %2443 = vmatpush1.msra.mxu0 %v338
  %2444 = vmatprep.subr.mxu0 0.0
  %2445 = vmatpush1.msra.mxu0 %v341
  %2446 = vmatprep.subr.mxu0 0.0
  %2447 = vmatpush1.msra.mxu0 %v344
  %2448 = vmatprep.subr.mxu0 0.0
  %2449 = vmatpush1.msra.mxu0 %v347
  %2450 = vmatprep.subr.mxu0 0.0
  %2451 = vmatpush1.msra.mxu0 %v350
  %2452 = vmatprep.subr.mxu0 0.0
  %2453 = vmatpush1.msra.mxu0 %v353
  %2454 = vmatprep.subr.mxu0 0.0
  %2455 = vmatpush1.msra.mxu0 %v356
  %2456 = vmatprep.subr.mxu0 0.0
  %2457 = vmatpush1.msra.mxu0 %v359
  %2458 = vmatprep.subr.mxu0 0.0
  %2459 = vmatpush1.msra.mxu0 0.0
  %2460 = vmatprep.subr.mxu0 0.0
  %2461 = vmatpush1.msra.mxu0 0.0
  %2462 = vmatprep.subr.mxu0 0.0
  %2463 = vmatpush1.msra.mxu0 0.0
  %2464 = vmatprep.subr.mxu0 0.0
  %2465 = vmatpush1.msra.mxu0 0.0
  %2466 = vmatprep.subr.mxu0 0.0
  %2467 = vmatpush1.msra.mxu0 0.0
  %2468 = vmatprep.subr.mxu0 0.0
  %2469 = vmatpush1.msra.mxu0 0.0
  %2470 = vmatprep.subr.mxu0 0.0
  %2471 = vmatpush1.msra.mxu0 0.0
  %2472 = vmatprep.subr.mxu0 0.0
  %2473 = vmatpush1.msra.mxu0 0.0
  %2474 = vmatprep.subr.mxu0 0.0
  %2475 = vmatpush1.msra.mxu0 0.0
  %2476 = vmatprep.subr.mxu0 0.0
  %2477 = vmatpush1.msra.mxu0 0.0
  %2478 = vmatprep.subr.mxu0 0.0
  %2479 = vmatpush1.msra.mxu0 0.0
  %2480 = vmatprep.subr.mxu0 0.0
  %2481 = vmatpush1.msra.mxu0 0.0
  %2482 = vmatprep.subr.mxu0 0.0
  %2483 = vmatpush1.msra.mxu0 0.0
  %2484 = vmatprep.subr.mxu0 0.0
  %2485 = vmatpush1.msra.mxu0 0.0
  %2486 = vmatprep.subr.mxu0 0.0
  %2487 = vmatpush1.msra.mxu0 0.0
  %2488 = vmatprep.subr.mxu0 0.0
  %2489 = vmatpush1.msra.mxu0 0.0
  %2490 = vmatprep.mubr.f32.mxu0 0.0
  %2491 = vmatmul.mubr.f32.gmra.mrb[0].mxu0 %v2353
  %v2492 = vpop.f32.mrb[0].mxu0
  %v2493 = vadd.f32 0.0, %v2492
  %v2494 = vpop.f32.mrb[0].mxu0
  %2495 = vdwg.mxu0
  %v2497 = vrot.slane %v2422, 3
  %v2498 = vrot.slane %v2422, 4
  %v2499 = vrot.slane %v2422, 5
  %v2500 = vrot.slane %v2422, 6
  %v2501 = vrot.slane %v2422, 7
  %v2502 = vrot.slane %v2422, 1
  %v2503 = vrot.slane %v2422, 2
  %v2512 = vadd.f32 %v160, %v2497
  %v2513 = vadd.f32 %v166, %v2498
  %v2514 = vadd.f32 %v172, %v2499
  %v2515 = vadd.f32 %v178, %v2500
  %v2516 = vadd.f32 %v184, %v2501
  %v2517 = vadd.f32 %v190, %v2422
  %v2518 = vadd.f32 %v196, %v2502
  %v2519 = vadd.f32 %v202, %v2503
  %v2520 = vxor.u32 %v2512, 2147483648
  %v2521 = vxor.u32 %v2513, 2147483648
  %v2522 = vxor.u32 %v2514, 2147483648
  %v2523 = vxor.u32 %v2515, 2147483648
  %v2524 = vxor.u32 %v2516, 2147483648
  %v2525 = vxor.u32 %v2517, 2147483648
  %v2526 = vxor.u32 %v2518, 2147483648
  %v2527 = vxor.u32 %v2519, 2147483648
  %v2528 = vmul.f32 %v2520, 1.442695
  %v2529 = vpow.pop %v2528
  %v2530 = vmul.f32 %v2521, 1.442695
  %v2531 = vpow.pop %v2530
  %v2532 = vmul.f32 %v2522, 1.442695
  %v2533 = vpow.pop %v2532
  %v2534 = vmul.f32 %v2523, 1.442695
  %v2535 = vpow.pop %v2534
  %v2536 = vmul.f32 %v2524, 1.442695
  %v2537 = vpow.pop %v2536
  %v2538 = vmul.f32 %v2525, 1.442695
  %v2539 = vpow.pop %v2538
  %v2540 = vmul.f32 %v2526, 1.442695
  %v2541 = vpow.pop %v2540
  %v2542 = vmul.f32 %v2527, 1.442695
  %v2543 = vpow.pop %v2542
  %v2544 = vadd.f32 %v2529, 1.0
  %v2545 = vadd.f32 %v2531, 1.0
  %v2546 = vadd.f32 %v2533, 1.0
  %v2547 = vadd.f32 %v2535, 1.0
  %v2548 = vadd.f32 %v2537, 1.0
  %v2549 = vadd.f32 %v2539, 1.0
  %v2550 = vadd.f32 %v2541, 1.0
  %v2551 = vadd.f32 %v2543, 1.0
  %v2552 = vrcp.pop %v2544
  %v2553 = vmul.f32 1.0, %v2552
  %v2554 = vrcp.pop %v2545
  %v2555 = vmul.f32 1.0, %v2554
  %v2556 = vrcp.pop %v2546
  %v2557 = vmul.f32 1.0, %v2556
  %v2558 = vrcp.pop %v2547
  %v2559 = vmul.f32 1.0, %v2558
  %v2560 = vrcp.pop %v2548
  %v2561 = vmul.f32 1.0, %v2560
  %v2562 = vrcp.pop %v2549
  %v2563 = vmul.f32 1.0, %v2562
  %v2564 = vrcp.pop %v2550
  %v2565 = vmul.f32 1.0, %v2564
  %v2566 = vrcp.pop %v2551
  %v2567 = vmul.f32 1.0, %v2566
  %v2569 = vrot.slane %v2424, 3
  %v2570 = vrot.slane %v2424, 4
  %v2571 = vrot.slane %v2424, 5
  %v2572 = vrot.slane %v2424, 6
  %v2573 = vrot.slane %v2424, 7
  %v2574 = vrot.slane %v2424, 1
  %v2575 = vrot.slane %v2424, 2
  %v2584 = vadd.f32 %v162, %v2569
  %v2585 = vadd.f32 %v168, %v2570
  %v2586 = vadd.f32 %v174, %v2571
  %v2587 = vadd.f32 %v180, %v2572
  %v2588 = vadd.f32 %v186, %v2573
  %v2589 = vadd.f32 %v192, %v2424
  %v2590 = vadd.f32 %v198, %v2574
  %v2591 = vadd.f32 %v204, %v2575
  %v2592 = vxor.u32 %v2584, 2147483648
  %v2593 = vxor.u32 %v2585, 2147483648
  %v2594 = vxor.u32 %v2586, 2147483648
  %v2595 = vxor.u32 %v2587, 2147483648
  %v2596 = vxor.u32 %v2588, 2147483648
  %v2597 = vxor.u32 %v2589, 2147483648
  %v2598 = vxor.u32 %v2590, 2147483648
  %v2599 = vxor.u32 %v2591, 2147483648
  %v2600 = vmul.f32 %v2592, 1.442695
  %v2601 = vpow.pop %v2600
  %v2602 = vmul.f32 %v2593, 1.442695
  %v2603 = vpow.pop %v2602
  %v2604 = vmul.f32 %v2594, 1.442695
  %v2605 = vpow.pop %v2604
  %v2606 = vmul.f32 %v2595, 1.442695
  %v2607 = vpow.pop %v2606
  %v2608 = vmul.f32 %v2596, 1.442695
  %v2609 = vpow.pop %v2608
  %v2610 = vmul.f32 %v2597, 1.442695
  %v2611 = vpow.pop %v2610
  %v2612 = vmul.f32 %v2598, 1.442695
  %v2613 = vpow.pop %v2612
  %v2614 = vmul.f32 %v2599, 1.442695
  %v2615 = vpow.pop %v2614
  %v2616 = vadd.f32 %v2601, 1.0
  %v2617 = vadd.f32 %v2603, 1.0
  %v2618 = vadd.f32 %v2605, 1.0
  %v2619 = vadd.f32 %v2607, 1.0
  %v2620 = vadd.f32 %v2609, 1.0
  %v2621 = vadd.f32 %v2611, 1.0
  %v2622 = vadd.f32 %v2613, 1.0
  %v2623 = vadd.f32 %v2615, 1.0
  %v2624 = vrcp.pop %v2616
  %v2625 = vmul.f32 1.0, %v2624
  %v2626 = vrcp.pop %v2617
  %v2627 = vmul.f32 1.0, %v2626
  %v2628 = vrcp.pop %v2618
  %v2629 = vmul.f32 1.0, %v2628
  %v2630 = vrcp.pop %v2619
  %v2631 = vmul.f32 1.0, %v2630
  %v2632 = vrcp.pop %v2620
  %v2633 = vmul.f32 1.0, %v2632
  %v2634 = vrcp.pop %v2621
  %v2635 = vmul.f32 1.0, %v2634
  %v2636 = vrcp.pop %v2622
  %v2637 = vmul.f32 1.0, %v2636
  %v2638 = vrcp.pop %v2623
  %v2639 = vmul.f32 1.0, %v2638
  %v2640 = vadd.f32 %v2493, %v650
  %v2642 = vrot.slane %v2640, 3
  %v2643 = vrot.slane %v2640, 4
  %v2644 = vrot.slane %v2640, 5
  %v2645 = vrot.slane %v2640, 6
  %v2646 = vrot.slane %v2640, 7
  %v2647 = vrot.slane %v2640, 1
  %v2648 = vrot.slane %v2640, 2
  %v2657 = vmul.f32 %v2553, %v2642
  %v2658 = vmul.f32 %v2555, %v2643
  %v2659 = vmul.f32 %v2557, %v2644
  %v2660 = vmul.f32 %v2559, %v2645
  %v2661 = vmul.f32 %v2561, %v2646
  %v2662 = vmul.f32 %v2563, %v2640
  %v2663 = vmul.f32 %v2565, %v2647
  %v2664 = vmul.f32 %v2567, %v2648
  %v2665 = vadd.f32 %v273, %v2657
  %v2666 = vadd.f32 %v278, %v2658
  %v2667 = vadd.f32 %v283, %v2659
  %v2668 = vadd.f32 %v288, %v2660
  %v2669 = vadd.f32 %v293, %v2661
  %v2670 = vadd.f32 %v298, %v2662
  %v2671 = vadd.f32 %v303, %v2663
  %v2672 = vadd.f32 %v308, %v2664
  %v2673 = vtanh.pop %v2665
  %v2674 = vtanh.pop %v2666
  %v2675 = vtanh.pop %v2667
  %v2676 = vtanh.pop %v2668
  %v2677 = vtanh.pop %v2669
  %v2678 = vtanh.pop %v2670
  %v2679 = vtanh.pop %v2671
  %v2680 = vtanh.pop %v2672
  %v2681 = vsub.f32 1.0, %v2625
  %v2682 = vsub.f32 1.0, %v2627
  %v2683 = vsub.f32 1.0, %v2629
  %v2684 = vsub.f32 1.0, %v2631
  %v2685 = vsub.f32 1.0, %v2633
  %v2686 = vsub.f32 1.0, %v2635
  %v2687 = vsub.f32 1.0, %v2637
  %v2688 = vsub.f32 1.0, %v2639
  %v2689 = vmul.f32 %v2681, %v2673
  %v2690 = vmul.f32 %v2682, %v2674
  %v2691 = vmul.f32 %v2683, %v2675
  %v2692 = vmul.f32 %v2684, %v2676
  %v2693 = vmul.f32 %v2685, %v2677
  %v2694 = vmul.f32 %v2686, %v2678
  %v2695 = vmul.f32 %v2687, %v2679
  %v2696 = vmul.f32 %v2688, %v2680
  %v2697 = vrot.slane %v2324, 7
  %v2698 = vrot.slane %v2325, 7
  %v2699 = vrot.slane %v2326, 7
  %v2700 = vrot.slane %v2327, 7
  %v2701 = vrot.slane %v2328, 7
  %v2702 = vrot.slane %v2330, 7
  %v2703 = vrot.slane %v2331, 7
  %v2712 = vmul.f32 %v2625, %v2697
  %v2713 = vmul.f32 %v2627, %v2698
  %v2714 = vmul.f32 %v2629, %v2699
  %v2715 = vmul.f32 %v2631, %v2700
  %v2716 = vmul.f32 %v2633, %v2701
  %v2717 = vmul.f32 %v2635, %v2348
  %v2718 = vmul.f32 %v2637, %v2702
  %v2719 = vmul.f32 %v2639, %v2703
  %v2720 = vadd.f32 %v2689, %v2712
  %v2721 = vadd.f32 %v2690, %v2713
  %v2722 = vadd.f32 %v2691, %v2714
  %v2723 = vadd.f32 %v2692, %v2715
  %v2724 = vadd.f32 %v2693, %v2716
  %v2725 = vadd.f32 %v2694, %v2717
  %v2726 = vadd.f32 %v2695, %v2718
  %v2727 = vadd.f32 %v2696, %v2719
  %v2736 = vrot.slane %v2720, 5
  %v2737 = vrot.slane %v2721, 4
  %v2738 = vsel %vm750, %v2737, %v2736
  %v2739 = vrot.slane %v2722, 3
  %v2740 = vsel %vm753, %v2739, %v2738
  %v2741 = vrot.slane %v2723, 2
  %v2742 = vsel %vm756, %v2741, %v2740
  %v2743 = vrot.slane %v2724, 1
  %v2744 = vsel %vm759, %v2743, %v2742
  %v2745 = vsel %vm762, %v2725, %v2744
  %v2746 = vrot.slane %v2726, 7
  %v2747 = vsel %vm765, %v2746, %v2745
  %v2748 = vrot.slane %v2727, 6
  %v2749 = vsel %vm768, %v2748, %v2747
  %2751 = vmatprep.subr.mxu0 %v313
  %2752 = vmatpush1.msra.mxu0 %v312
  %2753 = vmatprep.subr.mxu0 %v316
  %2754 = vmatpush1.msra.mxu0 %v315
  %2755 = vmatprep.subr.mxu0 %v319
  %2756 = vmatpush1.msra.mxu0 %v318
  %2757 = vmatprep.subr.mxu0 %v322
  %2758 = vmatpush1.msra.mxu0 %v321
  %2759 = vmatprep.subr.mxu0 %v325
  %2760 = vmatpush1.msra.mxu0 %v324
  %2761 = vmatprep.subr.mxu0 %v328
  %2762 = vmatpush1.msra.mxu0 %v327
  %2763 = vmatprep.subr.mxu0 %v331
  %2764 = vmatpush1.msra.mxu0 %v330
  %2765 = vmatprep.subr.mxu0 %v334
  %2766 = vmatpush1.msra.mxu0 %v333
  %2767 = vmatprep.subr.mxu0 %v337
  %2768 = vmatpush1.msra.mxu0 %v336
  %2769 = vmatprep.subr.mxu0 %v340
  %2770 = vmatpush1.msra.mxu0 %v339
  %2771 = vmatprep.subr.mxu0 %v343
  %2772 = vmatpush1.msra.mxu0 %v342
  %2773 = vmatprep.subr.mxu0 %v346
  %2774 = vmatpush1.msra.mxu0 %v345
  %2775 = vmatprep.subr.mxu0 %v349
  %2776 = vmatpush1.msra.mxu0 %v348
  %2777 = vmatprep.subr.mxu0 %v352
  %2778 = vmatpush1.msra.mxu0 %v351
  %2779 = vmatprep.subr.mxu0 %v355
  %2780 = vmatpush1.msra.mxu0 %v354
  %2781 = vmatprep.subr.mxu0 %v358
  %2782 = vmatpush1.msra.mxu0 %v357
  %2783 = vmatprep.subr.mxu0 0.0
  %2784 = vmatpush1.msra.mxu0 0.0
  %2785 = vmatprep.subr.mxu0 0.0
  %2786 = vmatpush1.msra.mxu0 0.0
  %2787 = vmatprep.subr.mxu0 0.0
  %2788 = vmatpush1.msra.mxu0 0.0
  %2789 = vmatprep.subr.mxu0 0.0
  %2790 = vmatpush1.msra.mxu0 0.0
  %2791 = vmatprep.subr.mxu0 0.0
  %2792 = vmatpush1.msra.mxu0 0.0
  %2793 = vmatprep.subr.mxu0 0.0
  %2794 = vmatpush1.msra.mxu0 0.0
  %2795 = vmatprep.subr.mxu0 0.0
  %2796 = vmatpush1.msra.mxu0 0.0
  %2797 = vmatprep.subr.mxu0 0.0
  %2798 = vmatpush1.msra.mxu0 0.0
  %2799 = vmatprep.subr.mxu0 0.0
  %2800 = vmatpush1.msra.mxu0 0.0
  %2801 = vmatprep.subr.mxu0 0.0
  %2802 = vmatpush1.msra.mxu0 0.0
  %2803 = vmatprep.subr.mxu0 0.0
  %2804 = vmatpush1.msra.mxu0 0.0
  %2805 = vmatprep.subr.mxu0 0.0
  %2806 = vmatpush1.msra.mxu0 0.0
  %2807 = vmatprep.subr.mxu0 0.0
  %2808 = vmatpush1.msra.mxu0 0.0
  %2809 = vmatprep.subr.mxu0 0.0
  %2810 = vmatpush1.msra.mxu0 0.0
  %2811 = vmatprep.subr.mxu0 0.0
  %2812 = vmatpush1.msra.mxu0 0.0
  %2813 = vmatprep.subr.mxu0 0.0
  %2814 = vmatpush1.msra.mxu0 0.0
  %2815 = vmatprep.mubr.f32.mxu0 0.0
  %2816 = vmatmul.mubr.f32.gmra.mrb[0].mxu0 %v2749
  %v2817 = vpop.f32.mrb[0].mxu0
  %v2818 = vadd.f32 0.0, %v2817
  %v2819 = vpop.f32.mrb[0].mxu0
  %v2820 = vadd.f32 0.0, %v2819
  %2821 = vdwg.mxu0
  %2822 = vmatprep.subr.mxu0 0.0
  %2823 = vmatpush1.msra.mxu0 %v314
  %2824 = vmatprep.subr.mxu0 0.0
  %2825 = vmatpush1.msra.mxu0 %v317
  %2826 = vmatprep.subr.mxu0 0.0
  %2827 = vmatpush1.msra.mxu0 %v320
  %2828 = vmatprep.subr.mxu0 0.0
  %2829 = vmatpush1.msra.mxu0 %v323
  %2830 = vmatprep.subr.mxu0 0.0
  %2831 = vmatpush1.msra.mxu0 %v326
  %2832 = vmatprep.subr.mxu0 0.0
  %2833 = vmatpush1.msra.mxu0 %v329
  %2834 = vmatprep.subr.mxu0 0.0
  %2835 = vmatpush1.msra.mxu0 %v332
  %2836 = vmatprep.subr.mxu0 0.0
  %2837 = vmatpush1.msra.mxu0 %v335
  %2838 = vmatprep.subr.mxu0 0.0
  %2839 = vmatpush1.msra.mxu0 %v338
  %2840 = vmatprep.subr.mxu0 0.0
  %2841 = vmatpush1.msra.mxu0 %v341
  %2842 = vmatprep.subr.mxu0 0.0
  %2843 = vmatpush1.msra.mxu0 %v344
  %2844 = vmatprep.subr.mxu0 0.0
  %2845 = vmatpush1.msra.mxu0 %v347
  %2846 = vmatprep.subr.mxu0 0.0
  %2847 = vmatpush1.msra.mxu0 %v350
  %2848 = vmatprep.subr.mxu0 0.0
  %2849 = vmatpush1.msra.mxu0 %v353
  %2850 = vmatprep.subr.mxu0 0.0
  %2851 = vmatpush1.msra.mxu0 %v356
  %2852 = vmatprep.subr.mxu0 0.0
  %2853 = vmatpush1.msra.mxu0 %v359
  %2854 = vmatprep.subr.mxu0 0.0
  %2855 = vmatpush1.msra.mxu0 0.0
  %2856 = vmatprep.subr.mxu0 0.0
  %2857 = vmatpush1.msra.mxu0 0.0
  %2858 = vmatprep.subr.mxu0 0.0
  %2859 = vmatpush1.msra.mxu0 0.0
  %2860 = vmatprep.subr.mxu0 0.0
  %2861 = vmatpush1.msra.mxu0 0.0
  %2862 = vmatprep.subr.mxu0 0.0
  %2863 = vmatpush1.msra.mxu0 0.0
  %2864 = vmatprep.subr.mxu0 0.0
  %2865 = vmatpush1.msra.mxu0 0.0
  %2866 = vmatprep.subr.mxu0 0.0
  %2867 = vmatpush1.msra.mxu0 0.0
  %2868 = vmatprep.subr.mxu0 0.0
  %2869 = vmatpush1.msra.mxu0 0.0
  %2870 = vmatprep.subr.mxu0 0.0
  %2871 = vmatpush1.msra.mxu0 0.0
  %2872 = vmatprep.subr.mxu0 0.0
  %2873 = vmatpush1.msra.mxu0 0.0
  %2874 = vmatprep.subr.mxu0 0.0
  %2875 = vmatpush1.msra.mxu0 0.0
  %2876 = vmatprep.subr.mxu0 0.0
  %2877 = vmatpush1.msra.mxu0 0.0
  %2878 = vmatprep.subr.mxu0 0.0
  %2879 = vmatpush1.msra.mxu0 0.0
  %2880 = vmatprep.subr.mxu0 0.0
  %2881 = vmatpush1.msra.mxu0 0.0
  %2882 = vmatprep.subr.mxu0 0.0
  %2883 = vmatpush1.msra.mxu0 0.0
  %2884 = vmatprep.subr.mxu0 0.0
  %2885 = vmatpush1.msra.mxu0 0.0
  %2886 = vmatprep.mubr.f32.mxu0 0.0
  %2887 = vmatmul.mubr.f32.gmra.mrb[0].mxu0 %v2749
  %v2888 = vpop.f32.mrb[0].mxu0
  %v2889 = vadd.f32 0.0, %v2888
  %v2890 = vpop.f32.mrb[0].mxu0
  %2891 = vdwg.mxu0
  %v2893 = vrot.slane %v2818, 2
  %v2894 = vrot.slane %v2818, 3
  %v2895 = vrot.slane %v2818, 4
  %v2896 = vrot.slane %v2818, 5
  %v2897 = vrot.slane %v2818, 6
  %v2898 = vrot.slane %v2818, 7
  %v2899 = vrot.slane %v2818, 1
  %v2908 = vadd.f32 %v160, %v2893
  %v2909 = vadd.f32 %v166, %v2894
  %v2910 = vadd.f32 %v172, %v2895
  %v2911 = vadd.f32 %v178, %v2896
  %v2912 = vadd.f32 %v184, %v2897
  %v2913 = vadd.f32 %v190, %v2898
  %v2914 = vadd.f32 %v196, %v2818
  %v2915 = vadd.f32 %v202, %v2899
  %v2916 = vxor.u32 %v2908, 2147483648
  %v2917 = vxor.u32 %v2909, 2147483648
  %v2918 = vxor.u32 %v2910, 2147483648
  %v2919 = vxor.u32 %v2911, 2147483648
  %v2920 = vxor.u32 %v2912, 2147483648
  %v2921 = vxor.u32 %v2913, 2147483648
  %v2922 = vxor.u32 %v2914, 2147483648
  %v2923 = vxor.u32 %v2915, 2147483648
  %v2924 = vmul.f32 %v2916, 1.442695
  %v2925 = vpow.pop %v2924
  %v2926 = vmul.f32 %v2917, 1.442695
  %v2927 = vpow.pop %v2926
  %v2928 = vmul.f32 %v2918, 1.442695
  %v2929 = vpow.pop %v2928
  %v2930 = vmul.f32 %v2919, 1.442695
  %v2931 = vpow.pop %v2930
  %v2932 = vmul.f32 %v2920, 1.442695
  %v2933 = vpow.pop %v2932
  %v2934 = vmul.f32 %v2921, 1.442695
  %v2935 = vpow.pop %v2934
  %v2936 = vmul.f32 %v2922, 1.442695
  %v2937 = vpow.pop %v2936
  %v2938 = vmul.f32 %v2923, 1.442695
  %v2939 = vpow.pop %v2938
  %v2940 = vadd.f32 %v2925, 1.0
  %v2941 = vadd.f32 %v2927, 1.0
  %v2942 = vadd.f32 %v2929, 1.0
  %v2943 = vadd.f32 %v2931, 1.0
  %v2944 = vadd.f32 %v2933, 1.0
  %v2945 = vadd.f32 %v2935, 1.0
  %v2946 = vadd.f32 %v2937, 1.0
  %v2947 = vadd.f32 %v2939, 1.0
  %v2948 = vrcp.pop %v2940
  %v2949 = vmul.f32 1.0, %v2948
  %v2950 = vrcp.pop %v2941
  %v2951 = vmul.f32 1.0, %v2950
  %v2952 = vrcp.pop %v2942
  %v2953 = vmul.f32 1.0, %v2952
  %v2954 = vrcp.pop %v2943
  %v2955 = vmul.f32 1.0, %v2954
  %v2956 = vrcp.pop %v2944
  %v2957 = vmul.f32 1.0, %v2956
  %v2958 = vrcp.pop %v2945
  %v2959 = vmul.f32 1.0, %v2958
  %v2960 = vrcp.pop %v2946
  %v2961 = vmul.f32 1.0, %v2960
  %v2962 = vrcp.pop %v2947
  %v2963 = vmul.f32 1.0, %v2962
  %v2965 = vrot.slane %v2820, 2
  %v2966 = vrot.slane %v2820, 3
  %v2967 = vrot.slane %v2820, 4
  %v2968 = vrot.slane %v2820, 5
  %v2969 = vrot.slane %v2820, 6
  %v2970 = vrot.slane %v2820, 7
  %v2971 = vrot.slane %v2820, 1
  %v2980 = vadd.f32 %v162, %v2965
  %v2981 = vadd.f32 %v168, %v2966
  %v2982 = vadd.f32 %v174, %v2967
  %v2983 = vadd.f32 %v180, %v2968
  %v2984 = vadd.f32 %v186, %v2969
  %v2985 = vadd.f32 %v192, %v2970
  %v2986 = vadd.f32 %v198, %v2820
  %v2987 = vadd.f32 %v204, %v2971
  %v2988 = vxor.u32 %v2980, 2147483648
  %v2989 = vxor.u32 %v2981, 2147483648
  %v2990 = vxor.u32 %v2982, 2147483648
  %v2991 = vxor.u32 %v2983, 2147483648
  %v2992 = vxor.u32 %v2984, 2147483648
  %v2993 = vxor.u32 %v2985, 2147483648
  %v2994 = vxor.u32 %v2986, 2147483648
  %v2995 = vxor.u32 %v2987, 2147483648
  %v2996 = vmul.f32 %v2988, 1.442695
  %v2997 = vpow.pop %v2996
  %v2998 = vmul.f32 %v2989, 1.442695
  %v2999 = vpow.pop %v2998
  %v3000 = vmul.f32 %v2990, 1.442695
  %v3001 = vpow.pop %v3000
  %v3002 = vmul.f32 %v2991, 1.442695
  %v3003 = vpow.pop %v3002
  %v3004 = vmul.f32 %v2992, 1.442695
  %v3005 = vpow.pop %v3004
  %v3006 = vmul.f32 %v2993, 1.442695
  %v3007 = vpow.pop %v3006
  %v3008 = vmul.f32 %v2994, 1.442695
  %v3009 = vpow.pop %v3008
  %v3010 = vmul.f32 %v2995, 1.442695
  %v3011 = vpow.pop %v3010
  %v3012 = vadd.f32 %v2997, 1.0
  %v3013 = vadd.f32 %v2999, 1.0
  %v3014 = vadd.f32 %v3001, 1.0
  %v3015 = vadd.f32 %v3003, 1.0
  %v3016 = vadd.f32 %v3005, 1.0
  %v3017 = vadd.f32 %v3007, 1.0
  %v3018 = vadd.f32 %v3009, 1.0
  %v3019 = vadd.f32 %v3011, 1.0
  %v3020 = vrcp.pop %v3012
  %v3021 = vmul.f32 1.0, %v3020
  %v3022 = vrcp.pop %v3013
  %v3023 = vmul.f32 1.0, %v3022
  %v3024 = vrcp.pop %v3014
  %v3025 = vmul.f32 1.0, %v3024
  %v3026 = vrcp.pop %v3015
  %v3027 = vmul.f32 1.0, %v3026
  %v3028 = vrcp.pop %v3016
  %v3029 = vmul.f32 1.0, %v3028
  %v3030 = vrcp.pop %v3017
  %v3031 = vmul.f32 1.0, %v3030
  %v3032 = vrcp.pop %v3018
  %v3033 = vmul.f32 1.0, %v3032
  %v3034 = vrcp.pop %v3019
  %v3035 = vmul.f32 1.0, %v3034
  %v3036 = vadd.f32 %v2889, %v650
  %v3038 = vrot.slane %v3036, 2
  %v3039 = vrot.slane %v3036, 3
  %v3040 = vrot.slane %v3036, 4
  %v3041 = vrot.slane %v3036, 5
  %v3042 = vrot.slane %v3036, 6
  %v3043 = vrot.slane %v3036, 7
  %v3044 = vrot.slane %v3036, 1
  %v3053 = vmul.f32 %v2949, %v3038
  %v3054 = vmul.f32 %v2951, %v3039
  %v3055 = vmul.f32 %v2953, %v3040
  %v3056 = vmul.f32 %v2955, %v3041
  %v3057 = vmul.f32 %v2957, %v3042
  %v3058 = vmul.f32 %v2959, %v3043
  %v3059 = vmul.f32 %v2961, %v3036
  %v3060 = vmul.f32 %v2963, %v3044
  %v3061 = vadd.f32 %v273, %v3053
  %v3062 = vadd.f32 %v278, %v3054
  %v3063 = vadd.f32 %v283, %v3055
  %v3064 = vadd.f32 %v288, %v3056
  %v3065 = vadd.f32 %v293, %v3057
  %v3066 = vadd.f32 %v298, %v3058
  %v3067 = vadd.f32 %v303, %v3059
  %v3068 = vadd.f32 %v308, %v3060
  %v3069 = vtanh.pop %v3061
  %v3070 = vtanh.pop %v3062
  %v3071 = vtanh.pop %v3063
  %v3072 = vtanh.pop %v3064
  %v3073 = vtanh.pop %v3065
  %v3074 = vtanh.pop %v3066
  %v3075 = vtanh.pop %v3067
  %v3076 = vtanh.pop %v3068
  %v3077 = vsub.f32 1.0, %v3021
  %v3078 = vsub.f32 1.0, %v3023
  %v3079 = vsub.f32 1.0, %v3025
  %v3080 = vsub.f32 1.0, %v3027
  %v3081 = vsub.f32 1.0, %v3029
  %v3082 = vsub.f32 1.0, %v3031
  %v3083 = vsub.f32 1.0, %v3033
  %v3084 = vsub.f32 1.0, %v3035
  %v3085 = vmul.f32 %v3077, %v3069
  %v3086 = vmul.f32 %v3078, %v3070
  %v3087 = vmul.f32 %v3079, %v3071
  %v3088 = vmul.f32 %v3080, %v3072
  %v3089 = vmul.f32 %v3081, %v3073
  %v3090 = vmul.f32 %v3082, %v3074
  %v3091 = vmul.f32 %v3083, %v3075
  %v3092 = vmul.f32 %v3084, %v3076
  %v3093 = vrot.slane %v2720, 7
  %v3094 = vrot.slane %v2721, 7
  %v3095 = vrot.slane %v2722, 7
  %v3096 = vrot.slane %v2723, 7
  %v3097 = vrot.slane %v2724, 7
  %v3098 = vrot.slane %v2725, 7
  %v3099 = vrot.slane %v2727, 7
  %v3108 = vmul.f32 %v3021, %v3093
  %v3109 = vmul.f32 %v3023, %v3094
  %v3110 = vmul.f32 %v3025, %v3095
  %v3111 = vmul.f32 %v3027, %v3096
  %v3112 = vmul.f32 %v3029, %v3097
  %v3113 = vmul.f32 %v3031, %v3098
  %v3114 = vmul.f32 %v3033, %v2746
  %v3115 = vmul.f32 %v3035, %v3099
  %v3116 = vadd.f32 %v3085, %v3108
  %v3117 = vadd.f32 %v3086, %v3109
  %v3118 = vadd.f32 %v3087, %v3110
  %v3119 = vadd.f32 %v3088, %v3111
  %v3120 = vadd.f32 %v3089, %v3112
  %v3121 = vadd.f32 %v3090, %v3113
  %v3122 = vadd.f32 %v3091, %v3114
  %v3123 = vadd.f32 %v3092, %v3115
  %v3132 = vrot.slane %v3116, 6
  %v3133 = vrot.slane %v3117, 5
  %v3134 = vsel %vm750, %v3133, %v3132
  %v3135 = vrot.slane %v3118, 4
  %v3136 = vsel %vm753, %v3135, %v3134
  %v3137 = vrot.slane %v3119, 3
  %v3138 = vsel %vm756, %v3137, %v3136
  %v3139 = vrot.slane %v3120, 2
  %v3140 = vsel %vm759, %v3139, %v3138
  %v3141 = vrot.slane %v3121, 1
  %v3142 = vsel %vm762, %v3141, %v3140
  %v3143 = vsel %vm765, %v3122, %v3142
  %v3144 = vrot.slane %v3123, 7
  %v3145 = vsel %vm768, %v3144, %v3143
  %3147 = vmatprep.subr.mxu0 %v313
  %3148 = vmatpush1.msra.mxu0 %v312
  %3149 = vmatprep.subr.mxu0 %v316
  %3150 = vmatpush1.msra.mxu0 %v315
  %3151 = vmatprep.subr.mxu0 %v319
  %3152 = vmatpush1.msra.mxu0 %v318
  %3153 = vmatprep.subr.mxu0 %v322
  %3154 = vmatpush1.msra.mxu0 %v321
  %3155 = vmatprep.subr.mxu0 %v325
  %3156 = vmatpush1.msra.mxu0 %v324
  %3157 = vmatprep.subr.mxu0 %v328
  %3158 = vmatpush1.msra.mxu0 %v327
  %3159 = vmatprep.subr.mxu0 %v331
  %3160 = vmatpush1.msra.mxu0 %v330
  %3161 = vmatprep.subr.mxu0 %v334
  %3162 = vmatpush1.msra.mxu0 %v333
  %3163 = vmatprep.subr.mxu0 %v337
  %3164 = vmatpush1.msra.mxu0 %v336
  %3165 = vmatprep.subr.mxu0 %v340
  %3166 = vmatpush1.msra.mxu0 %v339
  %3167 = vmatprep.subr.mxu0 %v343
  %3168 = vmatpush1.msra.mxu0 %v342
  %3169 = vmatprep.subr.mxu0 %v346
  %3170 = vmatpush1.msra.mxu0 %v345
  %3171 = vmatprep.subr.mxu0 %v349
  %3172 = vmatpush1.msra.mxu0 %v348
  %3173 = vmatprep.subr.mxu0 %v352
  %3174 = vmatpush1.msra.mxu0 %v351
  %3175 = vmatprep.subr.mxu0 %v355
  %3176 = vmatpush1.msra.mxu0 %v354
  %3177 = vmatprep.subr.mxu0 %v358
  %3178 = vmatpush1.msra.mxu0 %v357
  %3179 = vmatprep.subr.mxu0 0.0
  %3180 = vmatpush1.msra.mxu0 0.0
  %3181 = vmatprep.subr.mxu0 0.0
  %3182 = vmatpush1.msra.mxu0 0.0
  %3183 = vmatprep.subr.mxu0 0.0
  %3184 = vmatpush1.msra.mxu0 0.0
  %3185 = vmatprep.subr.mxu0 0.0
  %3186 = vmatpush1.msra.mxu0 0.0
  %3187 = vmatprep.subr.mxu0 0.0
  %3188 = vmatpush1.msra.mxu0 0.0
  %3189 = vmatprep.subr.mxu0 0.0
  %3190 = vmatpush1.msra.mxu0 0.0
  %3191 = vmatprep.subr.mxu0 0.0
  %3192 = vmatpush1.msra.mxu0 0.0
  %3193 = vmatprep.subr.mxu0 0.0
  %3194 = vmatpush1.msra.mxu0 0.0
  %3195 = vmatprep.subr.mxu0 0.0
  %3196 = vmatpush1.msra.mxu0 0.0
  %3197 = vmatprep.subr.mxu0 0.0
  %3198 = vmatpush1.msra.mxu0 0.0
  %3199 = vmatprep.subr.mxu0 0.0
  %3200 = vmatpush1.msra.mxu0 0.0
  %3201 = vmatprep.subr.mxu0 0.0
  %3202 = vmatpush1.msra.mxu0 0.0
  %3203 = vmatprep.subr.mxu0 0.0
  %3204 = vmatpush1.msra.mxu0 0.0
  %3205 = vmatprep.subr.mxu0 0.0
  %3206 = vmatpush1.msra.mxu0 0.0
  %3207 = vmatprep.subr.mxu0 0.0
  %3208 = vmatpush1.msra.mxu0 0.0
  %3209 = vmatprep.subr.mxu0 0.0
  %3210 = vmatpush1.msra.mxu0 0.0
  %3211 = vmatprep.mubr.f32.mxu0 0.0
  %3212 = vmatmul.mubr.f32.gmra.mrb[0].mxu0 %v3145
  %v3213 = vpop.f32.mrb[0].mxu0
  %v3214 = vadd.f32 0.0, %v3213
  %v3215 = vpop.f32.mrb[0].mxu0
  %v3216 = vadd.f32 0.0, %v3215
  %3217 = vdwg.mxu0
  %3218 = vmatprep.subr.mxu0 0.0
  %3219 = vmatpush1.msra.mxu0 %v314
  %3220 = vmatprep.subr.mxu0 0.0
  %3221 = vmatpush1.msra.mxu0 %v317
  %3222 = vmatprep.subr.mxu0 0.0
  %3223 = vmatpush1.msra.mxu0 %v320
  %3224 = vmatprep.subr.mxu0 0.0
  %3225 = vmatpush1.msra.mxu0 %v323
  %3226 = vmatprep.subr.mxu0 0.0
  %3227 = vmatpush1.msra.mxu0 %v326
  %3228 = vmatprep.subr.mxu0 0.0
  %3229 = vmatpush1.msra.mxu0 %v329
  %3230 = vmatprep.subr.mxu0 0.0
  %3231 = vmatpush1.msra.mxu0 %v332
  %3232 = vmatprep.subr.mxu0 0.0
  %3233 = vmatpush1.msra.mxu0 %v335
  %3234 = vmatprep.subr.mxu0 0.0
  %3235 = vmatpush1.msra.mxu0 %v338
  %3236 = vmatprep.subr.mxu0 0.0
  %3237 = vmatpush1.msra.mxu0 %v341
  %3238 = vmatprep.subr.mxu0 0.0
  %3239 = vmatpush1.msra.mxu0 %v344
  %3240 = vmatprep.subr.mxu0 0.0
  %3241 = vmatpush1.msra.mxu0 %v347
  %3242 = vmatprep.subr.mxu0 0.0
  %3243 = vmatpush1.msra.mxu0 %v350
  %3244 = vmatprep.subr.mxu0 0.0
  %3245 = vmatpush1.msra.mxu0 %v353
  %3246 = vmatprep.subr.mxu0 0.0
  %3247 = vmatpush1.msra.mxu0 %v356
  %3248 = vmatprep.subr.mxu0 0.0
  %3249 = vmatpush1.msra.mxu0 %v359
  %3250 = vmatprep.subr.mxu0 0.0
  %3251 = vmatpush1.msra.mxu0 0.0
  %3252 = vmatprep.subr.mxu0 0.0
  %3253 = vmatpush1.msra.mxu0 0.0
  %3254 = vmatprep.subr.mxu0 0.0
  %3255 = vmatpush1.msra.mxu0 0.0
  %3256 = vmatprep.subr.mxu0 0.0
  %3257 = vmatpush1.msra.mxu0 0.0
  %3258 = vmatprep.subr.mxu0 0.0
  %3259 = vmatpush1.msra.mxu0 0.0
  %3260 = vmatprep.subr.mxu0 0.0
  %3261 = vmatpush1.msra.mxu0 0.0
  %3262 = vmatprep.subr.mxu0 0.0
  %3263 = vmatpush1.msra.mxu0 0.0
  %3264 = vmatprep.subr.mxu0 0.0
  %3265 = vmatpush1.msra.mxu0 0.0
  %3266 = vmatprep.subr.mxu0 0.0
  %3267 = vmatpush1.msra.mxu0 0.0
  %3268 = vmatprep.subr.mxu0 0.0
  %3269 = vmatpush1.msra.mxu0 0.0
  %3270 = vmatprep.subr.mxu0 0.0
  %3271 = vmatpush1.msra.mxu0 0.0
  %3272 = vmatprep.subr.mxu0 0.0
  %3273 = vmatpush1.msra.mxu0 0.0
  %3274 = vmatprep.subr.mxu0 0.0
  %3275 = vmatpush1.msra.mxu0 0.0
  %3276 = vmatprep.subr.mxu0 0.0
  %3277 = vmatpush1.msra.mxu0 0.0
  %3278 = vmatprep.subr.mxu0 0.0
  %3279 = vmatpush1.msra.mxu0 0.0
  %3280 = vmatprep.subr.mxu0 0.0
  %3281 = vmatpush1.msra.mxu0 0.0
  %3282 = vmatprep.mubr.f32.mxu0 0.0
  %3283 = vmatmul.mubr.f32.gmra.mrb[0].mxu0 %v3145
  %v3284 = vpop.f32.mrb[0].mxu0
  %v3285 = vadd.f32 0.0, %v3284
  %v3286 = vpop.f32.mrb[0].mxu0
  %3287 = vdwg.mxu0
  %v3289 = vrot.slane %v3214, 1
  %v3290 = vrot.slane %v3214, 2
  %v3291 = vrot.slane %v3214, 3
  %v3292 = vrot.slane %v3214, 4
  %v3293 = vrot.slane %v3214, 5
  %v3294 = vrot.slane %v3214, 6
  %v3295 = vrot.slane %v3214, 7
  %v3304 = vadd.f32 %v160, %v3289
  %v3305 = vadd.f32 %v166, %v3290
  %v3306 = vadd.f32 %v172, %v3291
  %v3307 = vadd.f32 %v178, %v3292
  %v3308 = vadd.f32 %v184, %v3293
  %v3309 = vadd.f32 %v190, %v3294
  %v3310 = vadd.f32 %v196, %v3295
  %v3311 = vadd.f32 %v202, %v3214
  %v3312 = vxor.u32 %v3304, 2147483648
  %v3313 = vxor.u32 %v3305, 2147483648
  %v3314 = vxor.u32 %v3306, 2147483648
  %v3315 = vxor.u32 %v3307, 2147483648
  %v3316 = vxor.u32 %v3308, 2147483648
  %v3317 = vxor.u32 %v3309, 2147483648
  %v3318 = vxor.u32 %v3310, 2147483648
  %v3319 = vxor.u32 %v3311, 2147483648
  %v3320 = vmul.f32 %v3312, 1.442695
  %v3321 = vpow.pop %v3320
  %v3322 = vmul.f32 %v3313, 1.442695
  %v3323 = vpow.pop %v3322
  %v3324 = vmul.f32 %v3314, 1.442695
  %v3325 = vpow.pop %v3324
  %v3326 = vmul.f32 %v3315, 1.442695
  %v3327 = vpow.pop %v3326
  %v3328 = vmul.f32 %v3316, 1.442695
  %v3329 = vpow.pop %v3328
  %v3330 = vmul.f32 %v3317, 1.442695
  %v3331 = vpow.pop %v3330
  %v3332 = vmul.f32 %v3318, 1.442695
  %v3333 = vpow.pop %v3332
  %v3334 = vmul.f32 %v3319, 1.442695
  %v3335 = vpow.pop %v3334
  %v3336 = vadd.f32 %v3321, 1.0
  %v3337 = vadd.f32 %v3323, 1.0
  %v3338 = vadd.f32 %v3325, 1.0
  %v3339 = vadd.f32 %v3327, 1.0
  %v3340 = vadd.f32 %v3329, 1.0
  %v3341 = vadd.f32 %v3331, 1.0
  %v3342 = vadd.f32 %v3333, 1.0
  %v3343 = vadd.f32 %v3335, 1.0
  %v3344 = vrcp.pop %v3336
  %v3345 = vmul.f32 1.0, %v3344
  %v3346 = vrcp.pop %v3337
  %v3347 = vmul.f32 1.0, %v3346
  %v3348 = vrcp.pop %v3338
  %v3349 = vmul.f32 1.0, %v3348
  %v3350 = vrcp.pop %v3339
  %v3351 = vmul.f32 1.0, %v3350
  %v3352 = vrcp.pop %v3340
  %v3353 = vmul.f32 1.0, %v3352
  %v3354 = vrcp.pop %v3341
  %v3355 = vmul.f32 1.0, %v3354
  %v3356 = vrcp.pop %v3342
  %v3357 = vmul.f32 1.0, %v3356
  %v3358 = vrcp.pop %v3343
  %v3359 = vmul.f32 1.0, %v3358
  %v3361 = vrot.slane %v3216, 1
  %v3362 = vrot.slane %v3216, 2
  %v3363 = vrot.slane %v3216, 3
  %v3364 = vrot.slane %v3216, 4
  %v3365 = vrot.slane %v3216, 5
  %v3366 = vrot.slane %v3216, 6
  %v3367 = vrot.slane %v3216, 7
  %v3376 = vadd.f32 %v162, %v3361
  %v3377 = vadd.f32 %v168, %v3362
  %v3378 = vadd.f32 %v174, %v3363
  %v3379 = vadd.f32 %v180, %v3364
  %v3380 = vadd.f32 %v186, %v3365
  %v3381 = vadd.f32 %v192, %v3366
  %v3382 = vadd.f32 %v198, %v3367
  %v3383 = vadd.f32 %v204, %v3216
  %v3384 = vxor.u32 %v3376, 2147483648
  %v3385 = vxor.u32 %v3377, 2147483648
  %v3386 = vxor.u32 %v3378, 2147483648
  %v3387 = vxor.u32 %v3379, 2147483648
  %v3388 = vxor.u32 %v3380, 2147483648
  %v3389 = vxor.u32 %v3381, 2147483648
  %v3390 = vxor.u32 %v3382, 2147483648
  %v3391 = vxor.u32 %v3383, 2147483648
  %v3392 = vmul.f32 %v3384, 1.442695
  %v3393 = vpow.pop %v3392
  %v3394 = vmul.f32 %v3385, 1.442695
  %v3395 = vpow.pop %v3394
  %v3396 = vmul.f32 %v3386, 1.442695
  %v3397 = vpow.pop %v3396
  %v3398 = vmul.f32 %v3387, 1.442695
  %v3399 = vpow.pop %v3398
  %v3400 = vmul.f32 %v3388, 1.442695
  %v3401 = vpow.pop %v3400
  %v3402 = vmul.f32 %v3389, 1.442695
  %v3403 = vpow.pop %v3402
  %v3404 = vmul.f32 %v3390, 1.442695
  %v3405 = vpow.pop %v3404
  %v3406 = vmul.f32 %v3391, 1.442695
  %v3407 = vpow.pop %v3406
  %v3408 = vadd.f32 %v3393, 1.0
  %v3409 = vadd.f32 %v3395, 1.0
  %v3410 = vadd.f32 %v3397, 1.0
  %v3411 = vadd.f32 %v3399, 1.0
  %v3412 = vadd.f32 %v3401, 1.0
  %v3413 = vadd.f32 %v3403, 1.0
  %v3414 = vadd.f32 %v3405, 1.0
  %v3415 = vadd.f32 %v3407, 1.0
  %v3416 = vrcp.pop %v3408
  %v3417 = vmul.f32 1.0, %v3416
  %v3418 = vrcp.pop %v3409
  %v3419 = vmul.f32 1.0, %v3418
  %v3420 = vrcp.pop %v3410
  %v3421 = vmul.f32 1.0, %v3420
  %v3422 = vrcp.pop %v3411
  %v3423 = vmul.f32 1.0, %v3422
  %v3424 = vrcp.pop %v3412
  %v3425 = vmul.f32 1.0, %v3424
  %v3426 = vrcp.pop %v3413
  %v3427 = vmul.f32 1.0, %v3426
  %v3428 = vrcp.pop %v3414
  %v3429 = vmul.f32 1.0, %v3428
  %v3430 = vrcp.pop %v3415
  %v3431 = vmul.f32 1.0, %v3430
  %v3432 = vadd.f32 %v3285, %v650
  %v3434 = vrot.slane %v3432, 1
  %v3435 = vrot.slane %v3432, 2
  %v3436 = vrot.slane %v3432, 3
  %v3437 = vrot.slane %v3432, 4
  %v3438 = vrot.slane %v3432, 5
  %v3439 = vrot.slane %v3432, 6
  %v3440 = vrot.slane %v3432, 7
  %v3449 = vmul.f32 %v3345, %v3434
  %v3450 = vmul.f32 %v3347, %v3435
  %v3451 = vmul.f32 %v3349, %v3436
  %v3452 = vmul.f32 %v3351, %v3437
  %v3453 = vmul.f32 %v3353, %v3438
  %v3454 = vmul.f32 %v3355, %v3439
  %v3455 = vmul.f32 %v3357, %v3440
  %v3456 = vmul.f32 %v3359, %v3432
  %v3457 = vadd.f32 %v273, %v3449
  %v3458 = vadd.f32 %v278, %v3450
  %v3459 = vadd.f32 %v283, %v3451
  %v3460 = vadd.f32 %v288, %v3452
  %v3461 = vadd.f32 %v293, %v3453
  %v3462 = vadd.f32 %v298, %v3454
  %v3463 = vadd.f32 %v303, %v3455
  %v3464 = vadd.f32 %v308, %v3456
  %v3465 = vtanh.pop %v3457
  %v3466 = vtanh.pop %v3458
  %v3467 = vtanh.pop %v3459
  %v3468 = vtanh.pop %v3460
  %v3469 = vtanh.pop %v3461
  %v3470 = vtanh.pop %v3462
  %v3471 = vtanh.pop %v3463
  %v3472 = vtanh.pop %v3464
  %v3473 = vsub.f32 1.0, %v3417
  %v3474 = vsub.f32 1.0, %v3419
  %v3475 = vsub.f32 1.0, %v3421
  %v3476 = vsub.f32 1.0, %v3423
  %v3477 = vsub.f32 1.0, %v3425
  %v3478 = vsub.f32 1.0, %v3427
  %v3479 = vsub.f32 1.0, %v3429
  %v3480 = vsub.f32 1.0, %v3431
  %v3481 = vmul.f32 %v3473, %v3465
  %v3482 = vmul.f32 %v3474, %v3466
  %v3483 = vmul.f32 %v3475, %v3467
  %v3484 = vmul.f32 %v3476, %v3468
  %v3485 = vmul.f32 %v3477, %v3469
  %v3486 = vmul.f32 %v3478, %v3470
  %v3487 = vmul.f32 %v3479, %v3471
  %v3488 = vmul.f32 %v3480, %v3472
  %v3489 = vrot.slane %v3116, 7
  %v3490 = vrot.slane %v3117, 7
  %v3491 = vrot.slane %v3118, 7
  %v3492 = vrot.slane %v3119, 7
  %v3493 = vrot.slane %v3120, 7
  %v3494 = vrot.slane %v3121, 7
  %v3495 = vrot.slane %v3122, 7
  %v3504 = vmul.f32 %v3417, %v3489
  %v3505 = vmul.f32 %v3419, %v3490
  %v3506 = vmul.f32 %v3421, %v3491
  %v3507 = vmul.f32 %v3423, %v3492
  %v3508 = vmul.f32 %v3425, %v3493
  %v3509 = vmul.f32 %v3427, %v3494
  %v3510 = vmul.f32 %v3429, %v3495
  %v3511 = vmul.f32 %v3431, %v3144
  %v3512 = vadd.f32 %v3481, %v3504
  %v3513 = vadd.f32 %v3482, %v3505
  %v3514 = vadd.f32 %v3483, %v3506
  %v3515 = vadd.f32 %v3484, %v3507
  %v3516 = vadd.f32 %v3485, %v3508
  %v3517 = vadd.f32 %v3486, %v3509
  %v3518 = vadd.f32 %v3487, %v3510
  %v3519 = vadd.f32 %v3488, %v3511
  %v3528 = vrot.slane %v3513, 7
  %v3529 = vrot.slane %v3514, 6
  %v3530 = vsel %vm750, %v3529, %v3528
  %v3531 = vrot.slane %v3515, 5
  %v3532 = vsel %vm753, %v3531, %v3530
  %v3533 = vrot.slane %v3516, 4
  %v3534 = vsel %vm756, %v3533, %v3532
  %v3535 = vrot.slane %v3517, 3
  %v3536 = vsel %vm759, %v3535, %v3534
  %v3537 = vrot.slane %v3518, 2
  %v3538 = vsel %vm762, %v3537, %v3536
  %v3539 = vrot.slane %v3519, 1
  %v3540 = vsel %vm765, %v3539, %v3538
  %3543 = vst [vmem:[#allocation2 - $0x7] sm:$0x80] %v3512
  %3544 = vst [vmem:[#allocation2 + $0x1] sm:$0x7f] %v3540
  // Predicated region
  $region34: #{gru_decoder_pallas.1} parent=0 // pred_check
    %p3545 = pneg %p26
  $region35: #{gru_decoder_pallas.1} parent=0 // pred_check_branch
    %3547 = sbr.rel (%p3545) target = $region37
  $region36: #{gru_decoder_pallas.1} parent=0 // pred_region
    %v3548 = vld [vmem:[%s5] sm:$0xff]
    %v3549 = vld [vmem:[%s5 + $0x8] sm:$0xff]
    %v3550 = vld [vmem:[%s5 + $0x10] sm:$0xff]
    %v3551 = vld [vmem:[%s5 + $0x18] sm:$0xff]
    %v3552 = vld [vmem:[%s5 + $0x20] sm:$0xff]
    %v3553 = vld [vmem:[%s5 + $0x28] sm:$0xff]
    %v3554 = vld [vmem:[%s5 + $0x30] sm:$0xff]
    %v3555 = vld [vmem:[%s5 + $0x38] sm:$0xff]
    %v3556 = vld [vmem:[%s5 + $0x40] sm:$0xff]
    %v3557 = vld [vmem:[%s5 + $0x48] sm:$0xff]
    %v3558 = vld [vmem:[%s5 + $0x50] sm:$0xff]
    %v3559 = vld [vmem:[%s5 + $0x58] sm:$0xff]
    %v3560 = vld [vmem:[%s5 + $0x60] sm:$0xff]
    %v3561 = vld [vmem:[%s5 + $0x68] sm:$0xff]
    %v3562 = vld [vmem:[%s5 + $0x70] sm:$0xff]
    %v3563 = vld [vmem:[%s5 + $0x78] sm:$0xff]
    %v3564 = vld [vmem:[%s6] sm:$0x1]
    %v3566 = vlaneseq
    %v3567 = vshrl.u32 %v3566, 7
    %v3568 = vsub.s32 0, %v3567
    %v3569 = vrot.slane %v3564, %v3568
    %v3571 = vrot.slane %v3512, 7
    %v3572 = vrot.slane %v3513, 6
    %v3573 = vsel %vm750, %v3572, %v3571
    %v3574 = vrot.slane %v3514, 5
    %v3575 = vsel %vm753, %v3574, %v3573
    %v3576 = vrot.slane %v3515, 4
    %v3577 = vsel %vm756, %v3576, %v3575
    %v3578 = vrot.slane %v3516, 3
    %v3579 = vsel %vm759, %v3578, %v3577
    %v3580 = vrot.slane %v3517, 2
    %v3581 = vsel %vm762, %v3580, %v3579
    %v3582 = vrot.slane %v3518, 1
    %v3583 = vsel %vm765, %v3582, %v3581
    %v3584 = vsel %vm768, %v3519, %v3583
    %3586 = vmatprep.subr.mxu0 0.0
    %3587 = vmatpush1.msra.mxu0 %v3548
    %3588 = vmatprep.subr.mxu0 0.0
    %3589 = vmatpush1.msra.mxu0 %v3549
    %3590 = vmatprep.subr.mxu0 0.0
    %3591 = vmatpush1.msra.mxu0 %v3550
    %3592 = vmatprep.subr.mxu0 0.0
    %3593 = vmatpush1.msra.mxu0 %v3551
    %3594 = vmatprep.subr.mxu0 0.0
    %3595 = vmatpush1.msra.mxu0 %v3552
    %3596 = vmatprep.subr.mxu0 0.0
    %3597 = vmatpush1.msra.mxu0 %v3553
    %3598 = vmatprep.subr.mxu0 0.0
    %3599 = vmatpush1.msra.mxu0 %v3554
    %3600 = vmatprep.subr.mxu0 0.0
    %3601 = vmatpush1.msra.mxu0 %v3555
    %3602 = vmatprep.subr.mxu0 0.0
    %3603 = vmatpush1.msra.mxu0 %v3556
    %3604 = vmatprep.subr.mxu0 0.0
    %3605 = vmatpush1.msra.mxu0 %v3557
    %3606 = vmatprep.subr.mxu0 0.0
    %3607 = vmatpush1.msra.mxu0 %v3558
    %3608 = vmatprep.subr.mxu0 0.0
    %3609 = vmatpush1.msra.mxu0 %v3559
    %3610 = vmatprep.subr.mxu0 0.0
    %3611 = vmatpush1.msra.mxu0 %v3560
    %3612 = vmatprep.subr.mxu0 0.0
    %3613 = vmatpush1.msra.mxu0 %v3561
    %3614 = vmatprep.subr.mxu0 0.0
    %3615 = vmatpush1.msra.mxu0 %v3562
    %3616 = vmatprep.subr.mxu0 0.0
    %3617 = vmatpush1.msra.mxu0 %v3563
    %3618 = vmatprep.subr.mxu0 0.0
    %3619 = vmatpush1.msra.mxu0 0.0
    %3620 = vmatprep.subr.mxu0 0.0
    %3621 = vmatpush1.msra.mxu0 0.0
    %3622 = vmatprep.subr.mxu0 0.0
    %3623 = vmatpush1.msra.mxu0 0.0
    %3624 = vmatprep.subr.mxu0 0.0
    %3625 = vmatpush1.msra.mxu0 0.0
    %3626 = vmatprep.subr.mxu0 0.0
    %3627 = vmatpush1.msra.mxu0 0.0
    %3628 = vmatprep.subr.mxu0 0.0
    %3629 = vmatpush1.msra.mxu0 0.0
    %3630 = vmatprep.subr.mxu0 0.0
    %3631 = vmatpush1.msra.mxu0 0.0
    %3632 = vmatprep.subr.mxu0 0.0
    %3633 = vmatpush1.msra.mxu0 0.0
    %3634 = vmatprep.subr.mxu0 0.0
    %3635 = vmatpush1.msra.mxu0 0.0
    %3636 = vmatprep.subr.mxu0 0.0
    %3637 = vmatpush1.msra.mxu0 0.0
    %3638 = vmatprep.subr.mxu0 0.0
    %3639 = vmatpush1.msra.mxu0 0.0
    %3640 = vmatprep.subr.mxu0 0.0
    %3641 = vmatpush1.msra.mxu0 0.0
    %3642 = vmatprep.subr.mxu0 0.0
    %3643 = vmatpush1.msra.mxu0 0.0
    %3644 = vmatprep.subr.mxu0 0.0
    %3645 = vmatpush1.msra.mxu0 0.0
    %3646 = vmatprep.subr.mxu0 0.0
    %3647 = vmatpush1.msra.mxu0 0.0
    %3648 = vmatprep.subr.mxu0 0.0
    %3649 = vmatpush1.msra.mxu0 0.0
    %3650 = vmatprep.mubr.f32.mxu0 0.0
    %3651 = vmatmul.mubr.f32.gmra.mrb[0].mxu0 %v3584
    %v3652 = vpop.f32.mrb[0].mxu0
    %v3653 = vadd.f32 %v3569, %v3652
    %v3654 = vpop.f32.mrb[0].mxu0
    %3655 = vdwg.mxu0
    %3656 = vst [vmem:[%s7] sm:$0xff] %v3653
  $region37: #{gru_decoder_pallas.1} parent=0 // pred_fallthru
    _
  // Predicated region
  $region38: #{gru_decoder_pallas.1} parent=0 // pred_check
    _
  $region39: #{gru_decoder_pallas.1} parent=0 // pred_check_branch
    %3658 = sbr.rel (0) target = $region41
  $region40: #{gru_decoder_pallas.1} parent=0 // pred_region
    _
  $region41: #{gru_decoder_pallas.1} parent=0 // pred_fallthru
    _
  // Predicated region
  $region42: #{gru_decoder_pallas.1} parent=0 // pred_check
    _
  $region43: #{gru_decoder_pallas.1} parent=0 // pred_check_branch
    %3660 = sbr.rel (0) target = $region45
  $region44: #{gru_decoder_pallas.1} parent=0 // pred_region
    _
  $region45: #{gru_decoder_pallas.1} parent=0 // pred_fallthru
    _

</llo_original>
